<compile_context>
chip_gen: v5e
topology: v5e:2x2
jax: 0.10.0
libtpu: 0.0.40
codegen_flags: <defaults>
</compile_context>

<pallas_src>
import functools

import jax
import jax.numpy as jnp
from jax.experimental import pallas as pl
from jax.experimental.pallas import tpu as pltpu

BN_EPS = 1e-5
LANE = 128            # channel axis padded to the TPU lane width
SLAB_TARGET = 1024    # target matmul rows per grid step (mem-bound sweet spot)
TAIL_ROWS = 8         # zero rows appended per band so corner-tap slices stay in-bounds


def _round_up(x, m):
    return (x + m - 1) // m * m


def _pick_tile_h(H, wrow):
    """Largest divisor of H whose slab (TILE_H * wrow rows) fits the row target."""
    best = 1
    for th in range(1, H + 1):
        if H % th == 0 and th * wrow <= SLAB_TARGET:
            best = th
    return best


# -------- pass 1: 3x3 conv as 9 shifted-slab MXU dots + per-band BN partials --------
def conv_stats_kernel(xb_ref, w_ref, mask_ref, conv_ref, stats_ref, *, wrow, cpad, slab):
    # xb_ref:    (RB, Cpad)      f32   flattened padded row-band (2-row halo + zero tail)
    # w_ref:     (9*Cpad, Cpad)  bf16  folded conv weights (grid-resident)
    # mask_ref:  (slab, 1)       f32   1.0 on valid output columns, 0.0 on the 2 pad cols
    # conv_ref:  (slab, Cpad)    bf16  conv output slab (pad columns hold garbage)
    # stats_ref: (2, Cpad)       f32   row 0 = per-channel sum, row 1 = sum of squares
    def tap(t):
        dy, dx = divmod(t, 3)
        off = dy * wrow + dx
        lhs = xb_ref[off:off + slab, :].astype(jnp.bfloat16)
        rhs = w_ref[t * cpad:(t + 1) * cpad, :]
        return jnp.dot(lhs, rhs, preferred_element_type=jnp.float32)

    acc = tap(0)
    for t in range(1, 9):
        acc = acc + tap(t)

    conv_ref[...] = acc.astype(conv_ref.dtype)
    masked = acc * mask_ref[...]                     # zero the pad-column (garbage) rows
    stats_ref[0:1, :] = jnp.sum(masked, axis=0, keepdims=True)
    stats_ref[1:2, :] = jnp.sum(masked * acc, axis=0, keepdims=True)


# -------- pass 2: BN (folded scale/shift) -> ReLU -> +residual (f32) -> ReLU --------
def bn_relu_res_kernel(conv_ref, xb_ref, ss_ref, out_ref, *, center, slab):
    y = conv_ref[...].astype(jnp.float32) * ss_ref[0:1, :] + ss_ref[1:2, :]
    y = jnp.maximum(y, 0.0)
    y = y + xb_ref[center:center + slab, :]          # exact f32 residual = center tap
    out_ref[...] = jnp.maximum(y, 0.0)


def convbase_forward(x_nchw, w, gamma, beta):
    """x_nchw: (N, C, H, W) f32; w: (3, 3, Cin, Cout). Returns (N, C, H, W) f32."""
    N, C, H, W = x_nchw.shape
    Cout = w.shape[-1]
    assert C == Cout, "residual add requires inplanes == planes (downsample is None)"

    Cpad = _round_up(C, LANE)
    wrow = W + 2                               # padded row length
    tile_h = _pick_tile_h(H, wrow)
    n_bands = H // tile_h
    slab = tile_h * wrow                       # matmul rows per band (incl. 2 pad cols/row)
    rb_used = (tile_h + 2) * wrow              # band rows incl. 2-row halo
    rb = rb_used + TAIL_ROWS
    NB = N * n_bands
    P = N * H * W                              # true pixel count for BN mean/var

    # ---- glue (XLA): NHWC, lane-pad channels, spatial zero-pad, band extraction ----
    x_nhwc = jnp.transpose(x_nchw, (0, 2, 3, 1)).astype(jnp.float32)
    x_c = jnp.pad(x_nhwc, ((0, 0), (0, 0), (0, 0), (0, Cpad - C)))
    x_sp = jnp.pad(x_c, ((0, 0), (1, 1), (1, 1), (0, 0)))          # (N, H+2, W+2, Cpad)
    if n_bands == 1:
        bands = x_sp.reshape(N, rb_used, Cpad)                      # free reshape, no copy
    else:                                                           # ~(tile_h+2)/tile_h bytes
        bands = jnp.stack(
            [x_sp[:, b * tile_h:b * tile_h + tile_h + 2] for b in range(n_bands)], axis=1)
        bands = bands.reshape(NB, rb_used, Cpad)
    bands = jnp.pad(bands, ((0, 0), (0, rb - rb_used), (0, 0)))     # OOB-safe tail rows

    w_p = jnp.pad(w, ((0, 0), (0, 0), (0, Cpad - C), (0, Cpad - Cout)))
    w2 = w_p.reshape(9 * Cpad, Cpad).astype(jnp.bfloat16)           # tap-major (dy, dx, cin)

    col = jnp.arange(slab, dtype=jnp.int32) % wrow
    valid = (col < W).astype(jnp.float32).reshape(slab, 1)          # column-validity mask

    # ---- pass 1: conv + per-band partial stats ('parallel' grid) --------------------
    conv_slab, stats = pl.pallas_call(
        functools.partial(conv_stats_kernel, wrow=wrow, cpad=Cpad, slab=slab),
        out_shape=(jax.ShapeDtypeStruct((NB, slab, Cpad), jnp.bfloat16),
                   jax.ShapeDtypeStruct((NB, 2, Cpad), jnp.float32)),
        grid=(NB,),
        in_specs=[pl.BlockSpec((None, rb, Cpad), lambda b: (b, 0, 0)),
                  pl.BlockSpec((9 * Cpad, Cpad), lambda b: (0, 0)),
                  pl.BlockSpec((slab, 1), lambda b: (0, 0))],
        out_specs=(pl.BlockSpec((None, slab, Cpad), lambda b: (b, 0, 0)),
                   pl.BlockSpec((None, 2, Cpad), lambda b: (b, 0, 0))),
        compiler_params=pltpu.CompilerParams(
            dimension_semantics=("parallel",),
            vmem_limit_bytes=32 * 1024 * 1024),
        cost_estimate=pl.CostEstimate(
            flops=2 * NB * slab * (9 * Cpad) * Cpad, transcendentals=0,
            bytes_accessed=4 * NB * rb * Cpad + 2 * 9 * Cpad * Cpad
                           + 2 * NB * slab * Cpad + 4 * NB * 2 * Cpad),
    )(bands, w2, valid)

    # ---- global BN statistics (tiny reduction over per-band partials, in XLA) -------
    csum = jnp.sum(stats[:, 0, :], axis=0)                          # (Cpad,)
    cssq = jnp.sum(stats[:, 1, :], axis=0)
    mean = csum / float(P)
    var = jnp.maximum(cssq / float(P) - mean * mean, 0.0)           # biased (train) var
    inv = jax.lax.rsqrt(var + BN_EPS)
    gamma_p = jnp.pad(gamma.astype(jnp.float32), (0, Cpad - C))
    beta_p = jnp.pad(beta.astype(jnp.float32), (0, Cpad - C))
    scale = gamma_p * inv
    shift = beta_p - mean * scale
    scale_shift = jnp.stack([scale, shift], axis=0)                 # (2, Cpad)

    # ---- pass 2: normalize + ReLU + residual + ReLU ('parallel' grid) ---------------
    out_slab = pl.pallas_call(
        functools.partial(bn_relu_res_kernel, center=wrow + 1, slab=slab),
        out_shape=jax.ShapeDtypeStruct((NB, slab, Cpad), jnp.float32),
        grid=(NB,),
        in_specs=[pl.BlockSpec((None, slab, Cpad), lambda b: (b, 0, 0)),
                  pl.BlockSpec((None, rb, Cpad), lambda b: (b, 0, 0)),
                  pl.BlockSpec((2, Cpad), lambda b: (0, 0))],
        out_specs=pl.BlockSpec((None, slab, Cpad), lambda b: (b, 0, 0)),
        compiler_params=pltpu.CompilerParams(
            dimension_semantics=("parallel",),
            vmem_limit_bytes=32 * 1024 * 1024),
        cost_estimate=pl.CostEstimate(
            flops=4 * NB * slab * Cpad, transcendentals=0,
            bytes_accessed=2 * NB * slab * Cpad + 4 * NB * rb * Cpad
                           + 4 * NB * slab * Cpad + 4 * 2 * Cpad),
    )(conv_slab, bands, scale_shift)

    # ---- drop pad columns / lane padding, back to NCHW -------------------------------
    out = out_slab.reshape(N, n_bands, tile_h, wrow, Cpad)[:, :, :, :W, :C]
    out = out.reshape(N, H, W, C)
    return jnp.transpose(out, (0, 3, 1, 2))


def reference_forward(x_nchw, w, gamma, beta):
    """Pure-JAX f32 reference (NCHW conv + train-mode BN + relu/residual/relu)."""
    w_oihw = jnp.transpose(w, (3, 2, 0, 1))
    out = jax.lax.conv_general_dilated(
        x_nchw, w_oihw, window_strides=(1, 1), padding=((1, 1), (1, 1)),
        dimension_numbers=("NCHW", "OIHW", "NCHW"))
    mean = jnp.mean(out, axis=(0, 2, 3), keepdims=True)
    var = jnp.mean((out - mean) ** 2, axis=(0, 2, 3), keepdims=True)
    out = (out - mean) * jax.lax.rsqrt(var + BN_EPS)
    out = out * gamma.reshape(1, -1, 1, 1) + beta.reshape(1, -1, 1, 1)
    out = jnp.maximum(out, 0.0)
    out = out + x_nchw
    return jnp.maximum(out, 0.0)


if __name__ == "__main__":
    key = jax.random.PRNGKey(0)
    N, C, H, W = 2, 4, 16, 16          # inplanes == planes == 4, stride=1
    kx, kw = jax.random.split(key)

    x = jax.random.normal(kx, (N, C, H, W), dtype=jnp.float32)
    fan_in = 3 * 3 * C
    w = jax.random.normal(kw, (3, 3, C, C), dtype=jnp.float32) * (2.0 / fan_in) ** 0.5
    # BatchNorm affine params: PyTorch default init (weight=1, bias=0)
    gamma = jnp.ones((C,), jnp.float32)
    beta = jnp.zeros((C,), jnp.float32)

    # TODO(synk): BatchNorm running-stat (momentum) update is a training-time side
    # effect and is not part of the forward output; it is not implemented here.
    out = jax.block_until_ready(jax.jit(convbase_forward)(x, w, gamma, beta))
    ref = jax.block_until_ready(jax.jit(reference_forward)(x, w, gamma, beta))

    assert out.shape == (N, C, H, W)
    err_max = float(jnp.max(jnp.abs(out - ref)))
    err_mean = float(jnp.mean(jnp.abs(out - ref)))
    # bf16 MXU inputs + bf16 conv intermediate (per perf review): allow bf16-level error.
    assert err_max < 5e-2 and err_mean < 5e-3, (err_max, err_mean)

    print("KERNEL_OK")
</pallas_src>

<mosaic_0001>
module attributes {stable_mosaic.version = 11 : i64} {
  func.func @conv_stats_kernel(%arg0: i32, %arg1: memref<1x332x128xf32, #tpu.memory_space<vmem>>, %arg2: memref<1152x128xbf16, #tpu.memory_space<vmem>>, %arg3: memref<288x1xf32, #tpu.memory_space<vmem>>, %arg4: memref<1x288x128xbf16, #tpu.memory_space<vmem>>, %arg5: memref<1x2x128xf32, #tpu.memory_space<vmem>>) attributes {dimension_semantics = [#tpu.dimension_semantics<parallel>], iteration_bounds = array<i64: 2>, scalar_prefetch = 0 : i64, scratch_operands = 0 : i64, tpu.core_type = #tpu.core_type<tc>, window_params = [{transform_indices = @transform_0, window_bounds = array<i64: 1, 332, 128>}, {pipeline_mode = #tpu.pipeline_mode<synchronous>, transform_indices = @transform_1, window_bounds = array<i64: 1152, 128>}, {pipeline_mode = #tpu.pipeline_mode<synchronous>, transform_indices = @transform_2, window_bounds = array<i64: 288, 1>}, {transform_indices = @transform_3, window_bounds = array<i64: 1, 288, 128>}, {transform_indices = @transform_4, window_bounds = array<i64: 1, 2, 128>}]} {
    %c0 = arith.constant 0 : index
    %c0_0 = arith.constant 0 : index
    %c0_1 = arith.constant 0 : index
    %0 = vector.load %arg1[%c0, %c0_0, %c0_1] : memref<1x332x128xf32, #tpu.memory_space<vmem>>, vector<1x288x128xf32>
    %1 = vector.shape_cast %0 : vector<1x288x128xf32> to vector<288x128xf32>
    %2 = arith.truncf %1 : vector<288x128xf32> to vector<288x128xbf16>
    %c0_2 = arith.constant 0 : index
    %c0_3 = arith.constant 0 : index
    %3 = vector.load %arg2[%c0_2, %c0_3] : memref<1152x128xbf16, #tpu.memory_space<vmem>>, vector<128x128xbf16>
    %cst = arith.constant dense<0.000000e+00> : vector<288x128xf32>
    %4 = tpu.matmul %2, %3, %cst {dimension_numbers = #tpu.dot_dimension_numbers<[1], [0], [0], [1], [0, 0, 1, 1], [], []>} : vector<288x128xbf16>, vector<128x128xbf16>, vector<288x128xf32> -> vector<288x128xf32>
    %c0_4 = arith.constant 0 : index
    %c1 = arith.constant 1 : index
    %c0_5 = arith.constant 0 : index
    %5 = vector.load %arg1[%c0_4, %c1, %c0_5] : memref<1x332x128xf32, #tpu.memory_space<vmem>>, vector<1x288x128xf32>
    %6 = vector.shape_cast %5 : vector<1x288x128xf32> to vector<288x128xf32>
    %7 = arith.truncf %6 : vector<288x128xf32> to vector<288x128xbf16>
    %c128 = arith.constant 128 : index
    %c0_6 = arith.constant 0 : index
    %8 = vector.load %arg2[%c128, %c0_6] : memref<1152x128xbf16, #tpu.memory_space<vmem>>, vector<128x128xbf16>
    %cst_7 = arith.constant dense<0.000000e+00> : vector<288x128xf32>
    %9 = tpu.matmul %7, %8, %cst_7 {dimension_numbers = #tpu.dot_dimension_numbers<[1], [0], [0], [1], [0, 0, 1, 1], [], []>} : vector<288x128xbf16>, vector<128x128xbf16>, vector<288x128xf32> -> vector<288x128xf32>
    %10 = arith.addf %4, %9 : vector<288x128xf32>
    %c0_8 = arith.constant 0 : index
    %c2 = arith.constant 2 : index
    %c0_9 = arith.constant 0 : index
    %11 = vector.load %arg1[%c0_8, %c2, %c0_9] : memref<1x332x128xf32, #tpu.memory_space<vmem>>, vector<1x288x128xf32>
    %12 = vector.shape_cast %11 : vector<1x288x128xf32> to vector<288x128xf32>
    %13 = arith.truncf %12 : vector<288x128xf32> to vector<288x128xbf16>
    %c256 = arith.constant 256 : index
    %c0_10 = arith.constant 0 : index
    %14 = vector.load %arg2[%c256, %c0_10] : memref<1152x128xbf16, #tpu.memory_space<vmem>>, vector<128x128xbf16>
    %cst_11 = arith.constant dense<0.000000e+00> : vector<288x128xf32>
    %15 = tpu.matmul %13, %14, %cst_11 {dimension_numbers = #tpu.dot_dimension_numbers<[1], [0], [0], [1], [0, 0, 1, 1], [], []>} : vector<288x128xbf16>, vector<128x128xbf16>, vector<288x128xf32> -> vector<288x128xf32>
    %16 = arith.addf %10, %15 : vector<288x128xf32>
    %c0_12 = arith.constant 0 : index
    %c18 = arith.constant 18 : index
    %c0_13 = arith.constant 0 : index
    %17 = vector.load %arg1[%c0_12, %c18, %c0_13] : memref<1x332x128xf32, #tpu.memory_space<vmem>>, vector<1x288x128xf32>
    %18 = vector.shape_cast %17 : vector<1x288x128xf32> to vector<288x128xf32>
    %19 = arith.truncf %18 : vector<288x128xf32> to vector<288x128xbf16>
    %c384 = arith.constant 384 : index
    %c0_14 = arith.constant 0 : index
    %20 = vector.load %arg2[%c384, %c0_14] : memref<1152x128xbf16, #tpu.memory_space<vmem>>, vector<128x128xbf16>
    %cst_15 = arith.constant dense<0.000000e+00> : vector<288x128xf32>
    %21 = tpu.matmul %19, %20, %cst_15 {dimension_numbers = #tpu.dot_dimension_numbers<[1], [0], [0], [1], [0, 0, 1, 1], [], []>} : vector<288x128xbf16>, vector<128x128xbf16>, vector<288x128xf32> -> vector<288x128xf32>
    %22 = arith.addf %16, %21 : vector<288x128xf32>
    %c0_16 = arith.constant 0 : index
    %c19 = arith.constant 19 : index
    %c0_17 = arith.constant 0 : index
    %23 = vector.load %arg1[%c0_16, %c19, %c0_17] : memref<1x332x128xf32, #tpu.memory_space<vmem>>, vector<1x288x128xf32>
    %24 = vector.shape_cast %23 : vector<1x288x128xf32> to vector<288x128xf32>
    %25 = arith.truncf %24 : vector<288x128xf32> to vector<288x128xbf16>
    %c512 = arith.constant 512 : index
    %c0_18 = arith.constant 0 : index
    %26 = vector.load %arg2[%c512, %c0_18] : memref<1152x128xbf16, #tpu.memory_space<vmem>>, vector<128x128xbf16>
    %cst_19 = arith.constant dense<0.000000e+00> : vector<288x128xf32>
    %27 = tpu.matmul %25, %26, %cst_19 {dimension_numbers = #tpu.dot_dimension_numbers<[1], [0], [0], [1], [0, 0, 1, 1], [], []>} : vector<288x128xbf16>, vector<128x128xbf16>, vector<288x128xf32> -> vector<288x128xf32>
    %28 = arith.addf %22, %27 : vector<288x128xf32>
    %c0_20 = arith.constant 0 : index
    %c20 = arith.constant 20 : index
    %c0_21 = arith.constant 0 : index
    %29 = vector.load %arg1[%c0_20, %c20, %c0_21] : memref<1x332x128xf32, #tpu.memory_space<vmem>>, vector<1x288x128xf32>
    %30 = vector.shape_cast %29 : vector<1x288x128xf32> to vector<288x128xf32>
    %31 = arith.truncf %30 : vector<288x128xf32> to vector<288x128xbf16>
    %c640 = arith.constant 640 : index
    %c0_22 = arith.constant 0 : index
    %32 = vector.load %arg2[%c640, %c0_22] : memref<1152x128xbf16, #tpu.memory_space<vmem>>, vector<128x128xbf16>
    %cst_23 = arith.constant dense<0.000000e+00> : vector<288x128xf32>
    %33 = tpu.matmul %31, %32, %cst_23 {dimension_numbers = #tpu.dot_dimension_numbers<[1], [0], [0], [1], [0, 0, 1, 1], [], []>} : vector<288x128xbf16>, vector<128x128xbf16>, vector<288x128xf32> -> vector<288x128xf32>
    %34 = arith.addf %28, %33 : vector<288x128xf32>
    %c0_24 = arith.constant 0 : index
    %c36 = arith.constant 36 : index
    %c0_25 = arith.constant 0 : index
    %35 = vector.load %arg1[%c0_24, %c36, %c0_25] : memref<1x332x128xf32, #tpu.memory_space<vmem>>, vector<1x288x128xf32>
    %36 = vector.shape_cast %35 : vector<1x288x128xf32> to vector<288x128xf32>
    %37 = arith.truncf %36 : vector<288x128xf32> to vector<288x128xbf16>
    %c768 = arith.constant 768 : index
    %c0_26 = arith.constant 0 : index
    %38 = vector.load %arg2[%c768, %c0_26] : memref<1152x128xbf16, #tpu.memory_space<vmem>>, vector<128x128xbf16>
    %cst_27 = arith.constant dense<0.000000e+00> : vector<288x128xf32>
    %39 = tpu.matmul %37, %38, %cst_27 {dimension_numbers = #tpu.dot_dimension_numbers<[1], [0], [0], [1], [0, 0, 1, 1], [], []>} : vector<288x128xbf16>, vector<128x128xbf16>, vector<288x128xf32> -> vector<288x128xf32>
    %40 = arith.addf %34, %39 : vector<288x128xf32>
    %c0_28 = arith.constant 0 : index
    %c37 = arith.constant 37 : index
    %c0_29 = arith.constant 0 : index
    %41 = vector.load %arg1[%c0_28, %c37, %c0_29] : memref<1x332x128xf32, #tpu.memory_space<vmem>>, vector<1x288x128xf32>
    %42 = vector.shape_cast %41 : vector<1x288x128xf32> to vector<288x128xf32>
    %43 = arith.truncf %42 : vector<288x128xf32> to vector<288x128xbf16>
    %c896 = arith.constant 896 : index
    %c0_30 = arith.constant 0 : index
    %44 = vector.load %arg2[%c896, %c0_30] : memref<1152x128xbf16, #tpu.memory_space<vmem>>, vector<128x128xbf16>
    %cst_31 = arith.constant dense<0.000000e+00> : vector<288x128xf32>
    %45 = tpu.matmul %43, %44, %cst_31 {dimension_numbers = #tpu.dot_dimension_numbers<[1], [0], [0], [1], [0, 0, 1, 1], [], []>} : vector<288x128xbf16>, vector<128x128xbf16>, vector<288x128xf32> -> vector<288x128xf32>
    %46 = arith.addf %40, %45 : vector<288x128xf32>
    %c0_32 = arith.constant 0 : index
    %c38 = arith.constant 38 : index
    %c0_33 = arith.constant 0 : index
    %47 = vector.load %arg1[%c0_32, %c38, %c0_33] : memref<1x332x128xf32, #tpu.memory_space<vmem>>, vector<1x288x128xf32>
    %48 = vector.shape_cast %47 : vector<1x288x128xf32> to vector<288x128xf32>
    %49 = arith.truncf %48 : vector<288x128xf32> to vector<288x128xbf16>
    %c1024 = arith.constant 1024 : index
    %c0_34 = arith.constant 0 : index
    %50 = vector.load %arg2[%c1024, %c0_34] : memref<1152x128xbf16, #tpu.memory_space<vmem>>, vector<128x128xbf16>
    %cst_35 = arith.constant dense<0.000000e+00> : vector<288x128xf32>
    %51 = tpu.matmul %49, %50, %cst_35 {dimension_numbers = #tpu.dot_dimension_numbers<[1], [0], [0], [1], [0, 0, 1, 1], [], []>} : vector<288x128xbf16>, vector<128x128xbf16>, vector<288x128xf32> -> vector<288x128xf32>
    %52 = arith.addf %46, %51 : vector<288x128xf32>
    %53 = arith.truncf %52 : vector<288x128xf32> to vector<288x128xbf16>
    %c0_36 = arith.constant 0 : index
    %c0_37 = arith.constant 0 : index
    %c0_38 = arith.constant 0 : index
    %54 = vector.load %arg4[%c0_36, %c0_37, %c0_38] : memref<1x288x128xbf16, #tpu.memory_space<vmem>>, vector<1x288x128xbf16>
    %55 = vector.shape_cast %54 : vector<1x288x128xbf16> to vector<288x128xbf16>
    %56 = vector.shape_cast %53 : vector<288x128xbf16> to vector<1x288x128xbf16>
    tpu.vector_store %arg4[%c0_36, %c0_37, %c0_38], %56 {strides = array<i32>} : memref<1x288x128xbf16, #tpu.memory_space<vmem>>, vector<1x288x128xbf16>,
    %c0_39 = arith.constant 0 : index
    %c0_40 = arith.constant 0 : index
    %57 = vector.load %arg3[%c0_39, %c0_40] : memref<288x1xf32, #tpu.memory_space<vmem>>, vector<288x1xf32>
    %58 = vector.broadcast %57 : vector<288x1xf32> to vector<288x128xf32>
    %59 = arith.mulf %52, %58 : vector<288x128xf32>
    %cst_41 = arith.constant dense<0.000000e+00> : vector<128xf32>
    %60 = vector.multi_reduction <add>, %59, %cst_41 [0] : vector<288x128xf32> to vector<128xf32>
    %61 = vector.shape_cast %60 : vector<128xf32> to vector<1x128xf32>
    %c0_42 = arith.constant 0 : index
    %c0_43 = arith.constant 0 : index
    %c0_44 = arith.constant 0 : index
    %62 = vector.load %arg5[%c0_42, %c0_43, %c0_44] : memref<1x2x128xf32, #tpu.memory_space<vmem>>, vector<1x1x128xf32>
    %63 = vector.shape_cast %62 : vector<1x1x128xf32> to vector<1x128xf32>
    %64 = vector.shape_cast %61 : vector<1x128xf32> to vector<1x1x128xf32>
    tpu.vector_store %arg5[%c0_42, %c0_43, %c0_44], %64 {strides = array<i32>} : memref<1x2x128xf32, #tpu.memory_space<vmem>>, vector<1x1x128xf32>,
    %65 = arith.mulf %59, %52 : vector<288x128xf32>
    %cst_45 = arith.constant dense<0.000000e+00> : vector<128xf32>
    %66 = vector.multi_reduction <add>, %65, %cst_45 [0] : vector<288x128xf32> to vector<128xf32>
    %67 = vector.shape_cast %66 : vector<128xf32> to vector<1x128xf32>
    %c0_46 = arith.constant 0 : index
    %c1_47 = arith.constant 1 : index
    %c0_48 = arith.constant 0 : index
    %68 = vector.load %arg5[%c0_46, %c1_47, %c0_48] : memref<1x2x128xf32, #tpu.memory_space<vmem>>, vector<1x1x128xf32>
    %69 = vector.shape_cast %68 : vector<1x1x128xf32> to vector<1x128xf32>
    %70 = vector.shape_cast %67 : vector<1x128xf32> to vector<1x1x128xf32>
    tpu.vector_store %arg5[%c0_46, %c1_47, %c0_48], %70 {strides = array<i32>} : memref<1x2x128xf32, #tpu.memory_space<vmem>>, vector<1x1x128xf32>,
    return
  }
  func.func @transform_0(%arg0: i32) -> (i32, i32, i32) {
    %c0_i32 = arith.constant 0 : i32
    %c0_i32_0 = arith.constant 0 : i32
    %c0_i32_1 = arith.constant 0 : i32
    return %arg0, %c0_i32, %c0_i32_0 : i32, i32, i32
  }
  func.func @transform_1(%arg0: i32) -> (i32, i32) {
    %c0_i32 = arith.constant 0 : i32
    %c0_i32_0 = arith.constant 0 : i32
    %c0_i32_1 = arith.constant 0 : i32
    return %c0_i32, %c0_i32_0 : i32, i32
  }
  func.func @transform_2(%arg0: i32) -> (i32, i32) {
    %c0_i32 = arith.constant 0 : i32
    %c0_i32_0 = arith.constant 0 : i32
    %c0_i32_1 = arith.constant 0 : i32
    return %c0_i32, %c0_i32_0 : i32, i32
  }
  func.func @transform_3(%arg0: i32) -> (i32, i32, i32) {
    %c0_i32 = arith.constant 0 : i32
    %c0_i32_0 = arith.constant 0 : i32
    %c0_i32_1 = arith.constant 0 : i32
    return %arg0, %c0_i32, %c0_i32_0 : i32, i32, i32
  }
  func.func @transform_4(%arg0: i32) -> (i32, i32, i32) {
    %c0_i32 = arith.constant 0 : i32
    %c0_i32_0 = arith.constant 0 : i32
    %c0_i32_1 = arith.constant 0 : i32
    return %arg0, %c0_i32, %c0_i32_0 : i32, i32, i32
  }
}

module attributes {stable_mosaic.version = 11 : i64} {
  func.func @bn_relu_res_kernel(%arg0: i32, %arg1: memref<1x288x128xbf16, #tpu.memory_space<vmem>>, %arg2: memref<1x332x128xf32, #tpu.memory_space<vmem>>, %arg3: memref<2x128xf32, #tpu.memory_space<vmem>>, %arg4: memref<1x288x128xf32, #tpu.memory_space<vmem>>) attributes {dimension_semantics = [#tpu.dimension_semantics<parallel>], iteration_bounds = array<i64: 2>, scalar_prefetch = 0 : i64, scratch_operands = 0 : i64, tpu.core_type = #tpu.core_type<tc>, window_params = [{transform_indices = @transform_0, window_bounds = array<i64: 1, 288, 128>}, {transform_indices = @transform_1, window_bounds = array<i64: 1, 332, 128>}, {pipeline_mode = #tpu.pipeline_mode<synchronous>, transform_indices = @transform_2, window_bounds = array<i64: 2, 128>}, {transform_indices = @transform_3, window_bounds = array<i64: 1, 288, 128>}]} {
    %c0 = arith.constant 0 : index
    %c0_0 = arith.constant 0 : index
    %c0_1 = arith.constant 0 : index
    %0 = vector.load %arg1[%c0, %c0_0, %c0_1] : memref<1x288x128xbf16, #tpu.memory_space<vmem>>, vector<1x288x128xbf16>
    %1 = vector.shape_cast %0 : vector<1x288x128xbf16> to vector<288x128xbf16>
    %2 = arith.extf %1 : vector<288x128xbf16> to vector<288x128xf32>
    %c0_2 = arith.constant 0 : index
    %c0_3 = arith.constant 0 : index
    %3 = vector.load %arg3[%c0_2, %c0_3] : memref<2x128xf32, #tpu.memory_space<vmem>>, vector<1x128xf32>
    %4 = vector.broadcast %3 : vector<1x128xf32> to vector<288x128xf32>
    %5 = arith.mulf %2, %4 : vector<288x128xf32>
    %c1 = arith.constant 1 : index
    %c0_4 = arith.constant 0 : index
    %6 = vector.load %arg3[%c1, %c0_4] : memref<2x128xf32, #tpu.memory_space<vmem>>, vector<1x128xf32>
    %7 = vector.broadcast %6 : vector<1x128xf32> to vector<288x128xf32>
    %8 = arith.addf %5, %7 : vector<288x128xf32>
    %cst = arith.constant 0.000000e+00 : f32
    %9 = vector.broadcast %cst : f32 to vector<288x128xf32>
    %10 = arith.maximumf %8, %9 : vector<288x128xf32>
    %c0_5 = arith.constant 0 : index
    %c19 = arith.constant 19 : index
    %c0_6 = arith.constant 0 : index
    %11 = vector.load %arg2[%c0_5, %c19, %c0_6] : memref<1x332x128xf32, #tpu.memory_space<vmem>>, vector<1x288x128xf32>
    %12 = vector.shape_cast %11 : vector<1x288x128xf32> to vector<288x128xf32>
    %13 = arith.addf %10, %12 : vector<288x128xf32>
    %cst_7 = arith.constant 0.000000e+00 : f32
    %14 = vector.broadcast %cst_7 : f32 to vector<288x128xf32>
    %15 = arith.maximumf %13, %14 : vector<288x128xf32>
    %c0_8 = arith.constant 0 : index
    %c0_9 = arith.constant 0 : index
    %c0_10 = arith.constant 0 : index
    %16 = vector.load %arg4[%c0_8, %c0_9, %c0_10] : memref<1x288x128xf32, #tpu.memory_space<vmem>>, vector<1x288x128xf32>
    %17 = vector.shape_cast %16 : vector<1x288x128xf32> to vector<288x128xf32>
    %18 = vector.shape_cast %15 : vector<288x128xf32> to vector<1x288x128xf32>
    tpu.vector_store %arg4[%c0_8, %c0_9, %c0_10], %18 {strides = array<i32>} : memref<1x288x128xf32, #tpu.memory_space<vmem>>, vector<1x288x128xf32>,
    return
  }
  func.func @transform_0(%arg0: i32) -> (i32, i32, i32) {
    %c0_i32 = arith.constant 0 : i32
    %c0_i32_0 = arith.constant 0 : i32
    %c0_i32_1 = arith.constant 0 : i32
    return %arg0, %c0_i32, %c0_i32_0 : i32, i32, i32
  }
  func.func @transform_1(%arg0: i32) -> (i32, i32, i32) {
    %c0_i32 = arith.constant 0 : i32
    %c0_i32_0 = arith.constant 0 : i32
    %c0_i32_1 = arith.constant 0 : i32
    return %arg0, %c0_i32, %c0_i32_0 : i32, i32, i32
  }
  func.func @transform_2(%arg0: i32) -> (i32, i32) {
    %c0_i32 = arith.constant 0 : i32
    %c0_i32_0 = arith.constant 0 : i32
    %c0_i32_1 = arith.constant 0 : i32
    return %c0_i32, %c0_i32_0 : i32, i32
  }
  func.func @transform_3(%arg0: i32) -> (i32, i32, i32) {
    %c0_i32 = arith.constant 0 : i32
    %c0_i32_0 = arith.constant 0 : i32
    %c0_i32_1 = arith.constant 0 : i32
    return %arg0, %c0_i32, %c0_i32_0 : i32, i32, i32
  }
}

</mosaic_0001>

<llo_original>
// kernel: convbase_forward.3
$region0: #{convbase_forward.3}
  #allocation0 [shape = 'u32[]', space=smem, size = 0x4, offset = 0x4, fixed_abs, tag = 'smem constant byte address 0x4 - core index']
  #allocation1 [shape = 'u32[72,128]{1,0:T(1,128)}', space=vmem, size = 0x9000, scoped, tag = 'internal scratch']
  %s0 = inlined_call_operand.vmem [shape: bf16[2,288,128], index: 0, kind: input, shape index: {}]
  %s1 = inlined_call_operand.vmem [shape: f32[2,332,128], index: 1, kind: input, shape index: {}]
  %s2 = inlined_call_operand.vmem [shape: f32[2,128], index: 2, kind: input, shape index: {}]
  %s3 = inlined_call_operand.vmem [shape: f32[2,288,128], index: 3, kind: output, shape index: {}]
  %s4 = sld [smem:[#allocation0]]
  $region45: #{convbase_forward.3} parent=0
    _
  %s6 = ssub.s32 1, %s4
  %s7 = scalar_select 0, %s6, %s4
  loop: start=0, step=1, limit=4
  $region2: #{convbase_forward.3} parent=0 // loop_pre_header
    _
  $region3: #{convbase_forward.3} parent=0 // loop_header
    %s9 = sphi 0, %s13
    %p10 = scmp.ge.s32.totalorder %s9, 4
    %s19 = sphi 0, %s21
    %s22 = sphi 0, %s19
    %s23 = sphi 0, %s22
    %s39 = sphi 0, %s23
    %s45 = sphi 0, %s47
    %s48 = sphi 0, %s45
    %s49 = sphi 0, %s48
    %s65 = sphi 0, %s49
    %s69 = sphi 0, %s69
    %s71 = sphi 0, %s69
    %s72 = sphi 0, %s71
    %s86 = sphi 0, %s72
    %s92 = sphi 0, %s94
    %s95 = sphi 0, %s92
    %s96 = sphi 0, %s95
    %s112 = sphi 0, %s96
  $region4: #{convbase_forward.3} parent=0 // loop_header_branch
    %12 = sbr.rel (%p10) target = $region8
  $region5: #{convbase_forward.3} parent=0 // loop_body
    %s14 = ssub.s32 %s9, 1
    %s15 = ssub.s32 %s9, 2
    %s16 = sadd.s32 %s9, 1
    %s17 = ssub.s32 %s9, %s16
    %p18 = scmp.eq.s32.totalorder %s17, 0
    %s20 = sadd.s32 %s19, 1
    %s21 = scalar_select %p18, %s19, %s20
    %p24 = pneg %p18
    %p25 = scmp.eq.s32.totalorder %s9, 1
    %p26 = por %p24, %p25
    %p27 = scmp.ne.s32.totalorder %s19, %s22
    %p28 = scmp.eq.s32.totalorder %s9, 0
    %p29 = por %p27, %p28
    %p30 = scmp.ne.s32.totalorder %s19, %s22
    %p31 = scmp.eq.s32.totalorder %s14, 1
    %p32 = por %p30, %p31
    %p33 = scmp.ne.s32.totalorder %s22, %s23
    %p34 = scmp.eq.s32.totalorder %s14, 0
    %p35 = por %p33, %p34
    %p36 = scmp.ne.s32.totalorder %s22, %s23
    %p37 = scmp.eq.s32.totalorder %s15, 1
    %p38 = por %p36, %p37
    %p40 = scmp.ne.s32.totalorder %s23, %s39
    %p41 = scmp.eq.s32.totalorder %s15, 0
    %p42 = por %p40, %p41
    %s43 = ssub.s32 %s9, %s16
    %p44 = scmp.eq.s32.totalorder %s43, 0
    %s46 = sadd.s32 %s45, 1
    %s47 = scalar_select %p44, %s45, %s46
    %p50 = pneg %p44
    %p51 = scmp.eq.s32.totalorder %s9, 1
    %p52 = por %p50, %p51
    %p53 = scmp.ne.s32.totalorder %s45, %s48
    %p54 = scmp.eq.s32.totalorder %s9, 0
    %p55 = por %p53, %p54
    %p56 = scmp.ne.s32.totalorder %s45, %s48
    %p57 = scmp.eq.s32.totalorder %s14, 1
    %p58 = por %p56, %p57
    %p59 = scmp.ne.s32.totalorder %s48, %s49
    %p60 = scmp.eq.s32.totalorder %s14, 0
    %p61 = por %p59, %p60
    %p62 = scmp.ne.s32.totalorder %s48, %s49
    %p63 = scmp.eq.s32.totalorder %s15, 1
    %p64 = por %p62, %p63
    %p66 = scmp.ne.s32.totalorder %s49, %s65
    %p67 = scmp.eq.s32.totalorder %s15, 0
    %p68 = por %p66, %p67
    %s70 = sadd.s32 %s69, 1
    %p73 = scmp.eq.s32.totalorder %s9, 1
    %p74 = scmp.ne.s32.totalorder %s69, %s71
    %p75 = scmp.eq.s32.totalorder %s9, 0
    %p76 = por %p74, %p75
    %p77 = scmp.ne.s32.totalorder %s69, %s71
    %p78 = scmp.eq.s32.totalorder %s14, 1
    %p79 = por %p77, %p78
    %p80 = scmp.ne.s32.totalorder %s71, %s72
    %p81 = scmp.eq.s32.totalorder %s14, 0
    %p82 = por %p80, %p81
    %p83 = scmp.ne.s32.totalorder %s71, %s72
    %p84 = scmp.eq.s32.totalorder %s15, 1
    %p85 = por %p83, %p84
    %p87 = scmp.ne.s32.totalorder %s72, %s86
    %p88 = scmp.eq.s32.totalorder %s15, 0
    %p89 = por %p87, %p88
    %s90 = ssub.s32 %s9, %s16
    %p91 = scmp.eq.s32.totalorder %s90, 0
    %s93 = sadd.s32 %s92, 1
    %s94 = scalar_select %p91, %s92, %s93
    %p97 = pneg %p91
    %p98 = scmp.eq.s32.totalorder %s9, 1
    %p99 = por %p97, %p98
    %p100 = scmp.ne.s32.totalorder %s92, %s95
    %p101 = scmp.eq.s32.totalorder %s9, 0
    %p102 = por %p100, %p101
    %p103 = scmp.ne.s32.totalorder %s92, %s95
    %p104 = scmp.eq.s32.totalorder %s14, 1
    %p105 = por %p103, %p104
    %p106 = scmp.ne.s32.totalorder %s95, %s96
    %p107 = scmp.eq.s32.totalorder %s14, 0
    %p108 = por %p106, %p107
    %p109 = scmp.ne.s32.totalorder %s95, %s96
    %p110 = scmp.eq.s32.totalorder %s15, 1
    %p111 = por %p109, %p110
    %p113 = scmp.ne.s32.totalorder %s96, %s112
    %p114 = scmp.eq.s32.totalorder %s15, 0
    %p115 = por %p113, %p114
    %p116 = scmp.le.s32.totalorder 1, %s9
    %p117 = scmp.lt.s32.totalorder %s9, 3
    %p118 = pnand %p116, %p117
    %p119 = pneg %p118
    // Predicated region
    $region9: #{convbase_forward.3} parent=5 // pred_check
      _
    $region10: #{convbase_forward.3} parent=5 // pred_check_branch
      %121 = sbr.rel (%p118) target = $region12
    $region11: #{convbase_forward.3} parent=5 // pred_region
      %s122 = ssub.s32 %s9, 1
      // Predicated region
      $region13: #{convbase_forward.3} parent=11 // pred_check
        %p123 = pneg %p82
      $region14: #{convbase_forward.3} parent=11 // pred_check_branch
        %125 = sbr.rel (%p123) target = $region16
      $region15: #{convbase_forward.3} parent=11 // pred_region
        _
      $region16: #{convbase_forward.3} parent=11 // pred_fallthru
        _
    $region12: #{convbase_forward.3} parent=5 // pred_fallthru
      _
    %p126 = scmp.lt.s32.totalorder %s9, 2
    // Predicated region
    $region17: #{convbase_forward.3} parent=5 // pred_check
      %p127 = pneg %p126
    $region18: #{convbase_forward.3} parent=5 // pred_check_branch
      %129 = sbr.rel (%p127) target = $region20
    $region19: #{convbase_forward.3} parent=5 // pred_region
      // Predicated region
      $region21: #{convbase_forward.3} parent=19 // pred_check
        %p130 = pneg %p29
      $region22: #{convbase_forward.3} parent=19 // pred_check_branch
        %132 = sbr.rel (%p130) target = $region24
      $region23: #{convbase_forward.3} parent=19 // pred_region
        %p133 = scmp.lt.s32.totalorder %s9, 1
        %s134 = scalar_select %p133, %s9, 1
        %s135 = smul.addr %s134, 36
        %s136 = smul.addr %s135, 4
        %s137 = scalar_lea.vmem %s0, %s136
      $region24: #{convbase_forward.3} parent=19 // pred_fallthru
        _
      // Predicated region
      $region25: #{convbase_forward.3} parent=19 // pred_check
        %p138 = pneg %p55
      $region26: #{convbase_forward.3} parent=19 // pred_check_branch
        %140 = sbr.rel (%p138) target = $region28
      $region27: #{convbase_forward.3} parent=19 // pred_region
        %p141 = scmp.lt.s32.totalorder %s9, 1
        %s142 = scalar_select %p141, %s9, 1
        %s143 = smul.addr %s142, 42
        %s144 = smul.addr %s143, 8
        %s145 = scalar_lea.vmem %s1, %s144
      $region28: #{convbase_forward.3} parent=19 // pred_fallthru
        _
    $region20: #{convbase_forward.3} parent=5 // pred_fallthru
      _
    %p146 = scmp.le.s32.totalorder 1, %s9
    %p147 = scmp.lt.s32.totalorder %s9, 3
    %p148 = pnand %p146, %p147
    %p149 = pneg %p148
    // Predicated region
    $region29: #{convbase_forward.3} parent=5 // pred_check
      _
    $region30: #{convbase_forward.3} parent=5 // pred_check_branch
      %151 = sbr.rel (%p148) target = $region32
    $region31: #{convbase_forward.3} parent=5 // pred_region
      %s152 = ssub.s32 %s9, 1
      %p153 = scmp.lt.s32.totalorder %s14, 1
      %s154 = scalar_select %p153, %s14, 1
      %s155 = smul.addr %s154, 36
      %s156 = smul.addr %s155, 4
      %s157 = scalar_lea.vmem %s0, %s156
      %p158 = pneg %p35
      %p159 = pneg %p32
      %p160 = scmp.lt.s32.totalorder %s14, 1
      %s161 = scalar_select %p160, %s14, 1
      %s162 = smul.addr %s161, 42
      %s163 = smul.addr %s162, 8
      %s164 = scalar_lea.vmem %s1, %s163
      %p165 = pneg %p61
      %p166 = pneg %p58
      %p167 = pneg %p82
      %p168 = pneg %p79
      %p169 = pneg %p108
      %p170 = pneg %p105
      %p171 = scmp.lt.s32.totalorder %s14, 1
      %s172 = scalar_select %p171, %s14, 1
      %s173 = smul.addr %s172, 36
      %s174 = smul.addr %s173, 8
      %s175 = scalar_lea.vmem %s3, %s174
      %p176 = scmp.lt.s32.totalorder %s14, 1
      %s177 = scalar_select %p176, %s14, 1
      %s178 = smul.addr %s177, 36
      %s179 = smul.addr %s178, 4
      %s180 = scalar_lea.vmem %s0, %s179
      %p181 = scmp.lt.s32.totalorder %s14, 1
      %s182 = scalar_select %p181, %s14, 1
      %s183 = smul.addr %s182, 42
      %s184 = smul.addr %s183, 8
      %s185 = scalar_lea.vmem %s1, %s184
      %p186 = scmp.lt.s32.totalorder %s14, 1
      %s187 = scalar_select %p186, %s14, 1
      %s188 = smul.addr %s187, 36
      %s189 = smul.addr %s188, 8
      %s190 = scalar_lea.vmem %s3, %s189
      %v191 = vld [vmem:[%s180] sm:$0xf]
      %v192 = vld [vmem:[%s180 + $0x4] sm:$0xf]
      %v193 = vld [vmem:[%s180 + $0x8] sm:$0xf]
      %v194 = vld [vmem:[%s180 + $0xc] sm:$0xf]
      %v195 = vld [vmem:[%s180 + $0x10] sm:$0xf]
      %v196 = vld [vmem:[%s180 + $0x14] sm:$0xf]
      %v197 = vld [vmem:[%s180 + $0x18] sm:$0xf]
      %v198 = vld [vmem:[%s180 + $0x1c] sm:$0xf]
      %v199 = vld [vmem:[%s180 + $0x20] sm:$0xf]
      %v200 = vld [vmem:[%s180 + $0x24] sm:$0xf]
      %v201 = vld [vmem:[%s180 + $0x28] sm:$0xf]
      %v202 = vld [vmem:[%s180 + $0x2c] sm:$0xf]
      %v203 = vld [vmem:[%s180 + $0x30] sm:$0xf]
      %v204 = vld [vmem:[%s180 + $0x34] sm:$0xf]
      %v205 = vld [vmem:[%s180 + $0x38] sm:$0xf]
      %v206 = vld [vmem:[%s180 + $0x3c] sm:$0xf]
      %v207 = vld [vmem:[%s180 + $0x40] sm:$0xf]
      %v208 = vld [vmem:[%s180 + $0x44] sm:$0xf]
      %v209 = vld [vmem:[%s180 + $0x48] sm:$0xf]
      %v210 = vld [vmem:[%s180 + $0x4c] sm:$0xf]
      %v211 = vld [vmem:[%s180 + $0x50] sm:$0xf]
      %v212 = vld [vmem:[%s180 + $0x54] sm:$0xf]
      %v213 = vld [vmem:[%s180 + $0x58] sm:$0xf]
      %v214 = vld [vmem:[%s180 + $0x5c] sm:$0xf]
      %v215 = vld [vmem:[%s180 + $0x60] sm:$0xf]
      %v216 = vld [vmem:[%s180 + $0x64] sm:$0xf]
      %v217 = vld [vmem:[%s180 + $0x68] sm:$0xf]
      %v218 = vld [vmem:[%s180 + $0x6c] sm:$0xf]
      %v219 = vld [vmem:[%s180 + $0x70] sm:$0xf]
      %v220 = vld [vmem:[%s180 + $0x74] sm:$0xf]
      %v221 = vld [vmem:[%s180 + $0x78] sm:$0xf]
      %v222 = vld [vmem:[%s180 + $0x7c] sm:$0xf]
      %v223 = vld [vmem:[%s180 + $0x80] sm:$0xf]
      %v224 = vld [vmem:[%s180 + $0x84] sm:$0xf]
      %v225 = vld [vmem:[%s180 + $0x88] sm:$0xf]
      %v226 = vld [vmem:[%s180 + $0x8c] sm:$0xf]
      %v227 = vunpack.c.l.bf16 %v191
      %v228 = vunpack.c.l.bf16 %v192
      %v229 = vunpack.c.l.bf16 %v193
      %v230 = vunpack.c.l.bf16 %v194
      %v231 = vunpack.c.l.bf16 %v195
      %v232 = vunpack.c.l.bf16 %v196
      %v233 = vunpack.c.l.bf16 %v197
      %v234 = vunpack.c.l.bf16 %v198
      %v235 = vunpack.c.l.bf16 %v199
      %v236 = vunpack.c.l.bf16 %v200
      %v237 = vunpack.c.l.bf16 %v201
      %v238 = vunpack.c.l.bf16 %v202
      %v239 = vunpack.c.l.bf16 %v203
      %v240 = vunpack.c.l.bf16 %v204
      %v241 = vunpack.c.l.bf16 %v205
      %v242 = vunpack.c.l.bf16 %v206
      %v243 = vunpack.c.l.bf16 %v207
      %v244 = vunpack.c.l.bf16 %v208
      %v245 = vunpack.c.l.bf16 %v209
      %v246 = vunpack.c.l.bf16 %v210
      %v247 = vunpack.c.l.bf16 %v211
      %v248 = vunpack.c.l.bf16 %v212
      %v249 = vunpack.c.l.bf16 %v213
      %v250 = vunpack.c.l.bf16 %v214
      %v251 = vunpack.c.l.bf16 %v215
      %v252 = vunpack.c.l.bf16 %v216
      %v253 = vunpack.c.l.bf16 %v217
      %v254 = vunpack.c.l.bf16 %v218
      %v255 = vunpack.c.l.bf16 %v219
      %v256 = vunpack.c.l.bf16 %v220
      %v257 = vunpack.c.l.bf16 %v221
      %v258 = vunpack.c.l.bf16 %v222
      %v259 = vunpack.c.l.bf16 %v223
      %v260 = vunpack.c.l.bf16 %v224
      %v261 = vunpack.c.l.bf16 %v225
      %v262 = vunpack.c.l.bf16 %v226
      %v263 = vld [vmem:[%s2] sm:$0x1]
      %v264 = vperm.slane %v263, 0
      %v265 = vmul.f32 %v227, %v264
      %v266 = vmul.f32 %v228, %v264
      %v267 = vmul.f32 %v229, %v264
      %v268 = vmul.f32 %v230, %v264
      %v269 = vmul.f32 %v231, %v264
      %v270 = vmul.f32 %v232, %v264
      %v271 = vmul.f32 %v233, %v264
      %v272 = vmul.f32 %v234, %v264
      %v273 = vmul.f32 %v235, %v264
      %v274 = vmul.f32 %v236, %v264
      %v275 = vmul.f32 %v237, %v264
      %v276 = vmul.f32 %v238, %v264
      %v277 = vmul.f32 %v239, %v264
      %v278 = vmul.f32 %v240, %v264
      %v279 = vmul.f32 %v241, %v264
      %v280 = vmul.f32 %v242, %v264
      %v281 = vmul.f32 %v243, %v264
      %v282 = vmul.f32 %v244, %v264
      %v283 = vmul.f32 %v245, %v264
      %v284 = vmul.f32 %v246, %v264
      %v285 = vmul.f32 %v247, %v264
      %v286 = vmul.f32 %v248, %v264
      %v287 = vmul.f32 %v249, %v264
      %v288 = vmul.f32 %v250, %v264
      %v289 = vmul.f32 %v251, %v264
      %v290 = vmul.f32 %v252, %v264
      %v291 = vmul.f32 %v253, %v264
      %v292 = vmul.f32 %v254, %v264
      %v293 = vmul.f32 %v255, %v264
      %v294 = vmul.f32 %v256, %v264
      %v295 = vmul.f32 %v257, %v264
      %v296 = vmul.f32 %v258, %v264
      %v297 = vmul.f32 %v259, %v264
      %v298 = vmul.f32 %v260, %v264
      %v299 = vmul.f32 %v261, %v264
      %v300 = vmul.f32 %v262, %v264
      %v301 = vld [vmem:[%s2 + $0x1] sm:$0x1]
      %v302 = vperm.slane %v301, 0
      %v303 = vadd.f32 %v265, %v302
      %v304 = vadd.f32 %v266, %v302
      %v305 = vadd.f32 %v267, %v302
      %v306 = vadd.f32 %v268, %v302
      %v307 = vadd.f32 %v269, %v302
      %v308 = vadd.f32 %v270, %v302
      %v309 = vadd.f32 %v271, %v302
      %v310 = vadd.f32 %v272, %v302
      %v311 = vadd.f32 %v273, %v302
      %v312 = vadd.f32 %v274, %v302
      %v313 = vadd.f32 %v275, %v302
      %v314 = vadd.f32 %v276, %v302
      %v315 = vadd.f32 %v277, %v302
      %v316 = vadd.f32 %v278, %v302
      %v317 = vadd.f32 %v279, %v302
      %v318 = vadd.f32 %v280, %v302
      %v319 = vadd.f32 %v281, %v302
      %v320 = vadd.f32 %v282, %v302
      %v321 = vadd.f32 %v283, %v302
      %v322 = vadd.f32 %v284, %v302
      %v323 = vadd.f32 %v285, %v302
      %v324 = vadd.f32 %v286, %v302
      %v325 = vadd.f32 %v287, %v302
      %v326 = vadd.f32 %v288, %v302
      %v327 = vadd.f32 %v289, %v302
      %v328 = vadd.f32 %v290, %v302
      %v329 = vadd.f32 %v291, %v302
      %v330 = vadd.f32 %v292, %v302
      %v331 = vadd.f32 %v293, %v302
      %v332 = vadd.f32 %v294, %v302
      %v333 = vadd.f32 %v295, %v302
      %v334 = vadd.f32 %v296, %v302
      %v335 = vadd.f32 %v297, %v302
      %v336 = vadd.f32 %v298, %v302
      %v337 = vadd.f32 %v299, %v302
      %v338 = vadd.f32 %v300, %v302
      %v339 = vmax.f32 %v303, 0.0
      %v340 = vmax.f32 %v304, 0.0
      %v341 = vmax.f32 %v305, 0.0
      %v342 = vmax.f32 %v306, 0.0
      %v343 = vmax.f32 %v307, 0.0
      %v344 = vmax.f32 %v308, 0.0
      %v345 = vmax.f32 %v309, 0.0
      %v346 = vmax.f32 %v310, 0.0
      %v347 = vmax.f32 %v311, 0.0
      %v348 = vmax.f32 %v312, 0.0
      %v349 = vmax.f32 %v313, 0.0
      %v350 = vmax.f32 %v314, 0.0
      %v351 = vmax.f32 %v315, 0.0
      %v352 = vmax.f32 %v316, 0.0
      %v353 = vmax.f32 %v317, 0.0
      %v354 = vmax.f32 %v318, 0.0
      %v355 = vmax.f32 %v319, 0.0
      %v356 = vmax.f32 %v320, 0.0
      %v357 = vmax.f32 %v321, 0.0
      %v358 = vmax.f32 %v322, 0.0
      %v359 = vmax.f32 %v323, 0.0
      %v360 = vmax.f32 %v324, 0.0
      %v361 = vmax.f32 %v325, 0.0
      %v362 = vmax.f32 %v326, 0.0
      %v363 = vmax.f32 %v327, 0.0
      %v364 = vmax.f32 %v328, 0.0
      %v365 = vmax.f32 %v329, 0.0
      %v366 = vmax.f32 %v330, 0.0
      %v367 = vmax.f32 %v331, 0.0
      %v368 = vmax.f32 %v332, 0.0
      %v369 = vmax.f32 %v333, 0.0
      %v370 = vmax.f32 %v334, 0.0
      %v371 = vmax.f32 %v335, 0.0
      %v372 = vmax.f32 %v336, 0.0
      %v373 = vmax.f32 %v337, 0.0
      %v374 = vmax.f32 %v338, 0.0
      %v375 = vld [vmem:[%s185 + $0x13] sm:$0xff]
      %v376 = vld [vmem:[%s185 + $0x1b] sm:$0xff]
      %v377 = vld [vmem:[%s185 + $0x23] sm:$0xff]
      %v378 = vld [vmem:[%s185 + $0x2b] sm:$0xff]
      %v379 = vld [vmem:[%s185 + $0x33] sm:$0xff]
      %v380 = vld [vmem:[%s185 + $0x3b] sm:$0xff]
      %v381 = vld [vmem:[%s185 + $0x43] sm:$0xff]
      %v382 = vld [vmem:[%s185 + $0x4b] sm:$0xff]
      %v383 = vld [vmem:[%s185 + $0x53] sm:$0xff]
      %v384 = vld [vmem:[%s185 + $0x5b] sm:$0xff]
      %v385 = vld [vmem:[%s185 + $0x63] sm:$0xff]
      %v386 = vld [vmem:[%s185 + $0x6b] sm:$0xff]
      %v387 = vld [vmem:[%s185 + $0x73] sm:$0xff]
      %v388 = vld [vmem:[%s185 + $0x7b] sm:$0xff]
      %v389 = vld [vmem:[%s185 + $0x83] sm:$0xff]
      %v390 = vld [vmem:[%s185 + $0x8b] sm:$0xff]
      %v391 = vld [vmem:[%s185 + $0x93] sm:$0xff]
      %v392 = vld [vmem:[%s185 + $0x9b] sm:$0xff]
      %v393 = vld [vmem:[%s185 + $0xa3] sm:$0xff]
      %v394 = vld [vmem:[%s185 + $0xab] sm:$0xff]
      %v395 = vld [vmem:[%s185 + $0xb3] sm:$0xff]
      %v396 = vld [vmem:[%s185 + $0xbb] sm:$0xff]
      %v397 = vld [vmem:[%s185 + $0xc3] sm:$0xff]
      %v398 = vld [vmem:[%s185 + $0xcb] sm:$0xff]
      %v399 = vld [vmem:[%s185 + $0xd3] sm:$0xff]
      %v400 = vld [vmem:[%s185 + $0xdb] sm:$0xff]
      %v401 = vld [vmem:[%s185 + $0xe3] sm:$0xff]
      %v402 = vld [vmem:[%s185 + $0xeb] sm:$0xff]
      %v403 = vld [vmem:[%s185 + $0xf3] sm:$0xff]
      %v404 = vld [vmem:[%s185 + $0xfb] sm:$0xff]
      %v405 = vld [vmem:[%s185 + $0x103] sm:$0xff]
      %v406 = vld [vmem:[%s185 + $0x10b] sm:$0xff]
      %v407 = vld [vmem:[%s185 + $0x113] sm:$0xff]
      %v408 = vld [vmem:[%s185 + $0x11b] sm:$0xff]
      %v409 = vld [vmem:[%s185 + $0x123] sm:$0xff]
      %v410 = vld [vmem:[%s185 + $0x12b] sm:$0xff]
      %v411 = vadd.f32 %v339, %v375
      %v412 = vadd.f32 %v340, %v376
      %v413 = vadd.f32 %v341, %v377
      %v414 = vadd.f32 %v342, %v378
      %v415 = vadd.f32 %v343, %v379
      %v416 = vadd.f32 %v344, %v380
      %v417 = vadd.f32 %v345, %v381
      %v418 = vadd.f32 %v346, %v382
      %v419 = vadd.f32 %v347, %v383
      %v420 = vadd.f32 %v348, %v384
      %v421 = vadd.f32 %v349, %v385
      %v422 = vadd.f32 %v350, %v386
      %v423 = vadd.f32 %v351, %v387
      %v424 = vadd.f32 %v352, %v388
      %v425 = vadd.f32 %v353, %v389
      %v426 = vadd.f32 %v354, %v390
      %v427 = vadd.f32 %v355, %v391
      %v428 = vadd.f32 %v356, %v392
      %v429 = vadd.f32 %v357, %v393
      %v430 = vadd.f32 %v358, %v394
      %v431 = vadd.f32 %v359, %v395
      %v432 = vadd.f32 %v360, %v396
      %v433 = vadd.f32 %v361, %v397
      %v434 = vadd.f32 %v362, %v398
      %v435 = vadd.f32 %v363, %v399
      %v436 = vadd.f32 %v364, %v400
      %v437 = vadd.f32 %v365, %v401
      %v438 = vadd.f32 %v366, %v402
      %v439 = vadd.f32 %v367, %v403
      %v440 = vadd.f32 %v368, %v404
      %v441 = vadd.f32 %v369, %v405
      %v442 = vadd.f32 %v370, %v406
      %v443 = vadd.f32 %v371, %v407
      %v444 = vadd.f32 %v372, %v408
      %v445 = vadd.f32 %v373, %v409
      %v446 = vadd.f32 %v374, %v410
      %v447 = vmax.f32 %v411, 0.0
      %v448 = vmax.f32 %v412, 0.0
      %v449 = vmax.f32 %v413, 0.0
      %v450 = vmax.f32 %v414, 0.0
      %v451 = vmax.f32 %v415, 0.0
      %v452 = vmax.f32 %v416, 0.0
      %v453 = vmax.f32 %v417, 0.0
      %v454 = vmax.f32 %v418, 0.0
      %v455 = vmax.f32 %v419, 0.0
      %v456 = vmax.f32 %v420, 0.0
      %v457 = vmax.f32 %v421, 0.0
      %v458 = vmax.f32 %v422, 0.0
      %v459 = vmax.f32 %v423, 0.0
      %v460 = vmax.f32 %v424, 0.0
      %v461 = vmax.f32 %v425, 0.0
      %v462 = vmax.f32 %v426, 0.0
      %v463 = vmax.f32 %v427, 0.0
      %v464 = vmax.f32 %v428, 0.0
      %v465 = vmax.f32 %v429, 0.0
      %v466 = vmax.f32 %v430, 0.0
      %v467 = vmax.f32 %v431, 0.0
      %v468 = vmax.f32 %v432, 0.0
      %v469 = vmax.f32 %v433, 0.0
      %v470 = vmax.f32 %v434, 0.0
      %v471 = vmax.f32 %v435, 0.0
      %v472 = vmax.f32 %v436, 0.0
      %v473 = vmax.f32 %v437, 0.0
      %v474 = vmax.f32 %v438, 0.0
      %v475 = vmax.f32 %v439, 0.0
      %v476 = vmax.f32 %v440, 0.0
      %v477 = vmax.f32 %v441, 0.0
      %v478 = vmax.f32 %v442, 0.0
      %v479 = vmax.f32 %v443, 0.0
      %v480 = vmax.f32 %v444, 0.0
      %v481 = vmax.f32 %v445, 0.0
      %v482 = vmax.f32 %v446, 0.0
      %483 = vst [vmem:[%s190] sm:$0xff] %v447
      %484 = vst [vmem:[%s190 + $0x8] sm:$0xff] %v448
      %485 = vst [vmem:[%s190 + $0x10] sm:$0xff] %v449
      %486 = vst [vmem:[%s190 + $0x18] sm:$0xff] %v450
      %487 = vst [vmem:[%s190 + $0x20] sm:$0xff] %v451
      %488 = vst [vmem:[%s190 + $0x28] sm:$0xff] %v452
      %489 = vst [vmem:[%s190 + $0x30] sm:$0xff] %v453
      %490 = vst [vmem:[%s190 + $0x38] sm:$0xff] %v454
      %491 = vst [vmem:[%s190 + $0x40] sm:$0xff] %v455
      %492 = vst [vmem:[%s190 + $0x48] sm:$0xff] %v456
      %493 = vst [vmem:[%s190 + $0x50] sm:$0xff] %v457
      %494 = vst [vmem:[%s190 + $0x58] sm:$0xff] %v458
      %495 = vst [vmem:[%s190 + $0x60] sm:$0xff] %v459
      %496 = vst [vmem:[%s190 + $0x68] sm:$0xff] %v460
      %497 = vst [vmem:[%s190 + $0x70] sm:$0xff] %v461
      %498 = vst [vmem:[%s190 + $0x78] sm:$0xff] %v462
      %499 = vst [vmem:[%s190 + $0x80] sm:$0xff] %v463
      %500 = vst [vmem:[%s190 + $0x88] sm:$0xff] %v464
      %501 = vst [vmem:[%s190 + $0x90] sm:$0xff] %v465
      %502 = vst [vmem:[%s190 + $0x98] sm:$0xff] %v466
      %503 = vst [vmem:[%s190 + $0xa0] sm:$0xff] %v467
      %504 = vst [vmem:[%s190 + $0xa8] sm:$0xff] %v468
      %505 = vst [vmem:[%s190 + $0xb0] sm:$0xff] %v469
      %506 = vst [vmem:[%s190 + $0xb8] sm:$0xff] %v470
      %507 = vst [vmem:[%s190 + $0xc0] sm:$0xff] %v471
      %508 = vst [vmem:[%s190 + $0xc8] sm:$0xff] %v472
      %509 = vst [vmem:[%s190 + $0xd0] sm:$0xff] %v473
      %510 = vst [vmem:[%s190 + $0xd8] sm:$0xff] %v474
      %511 = vst [vmem:[%s190 + $0xe0] sm:$0xff] %v475
      %512 = vst [vmem:[%s190 + $0xe8] sm:$0xff] %v476
      %513 = vst [vmem:[%s190 + $0xf0] sm:$0xff] %v477
      %514 = vst [vmem:[%s190 + $0xf8] sm:$0xff] %v478
      %515 = vst [vmem:[%s190 + $0x100] sm:$0xff] %v479
      %516 = vst [vmem:[%s190 + $0x108] sm:$0xff] %v480
      %517 = vst [vmem:[%s190 + $0x110] sm:$0xff] %v481
      %518 = vst [vmem:[%s190 + $0x118] sm:$0xff] %v482
      %p519 = scmp.lt.s32.totalorder %s14, 1
      %s520 = scalar_select %p519, %s14, 1
      %s521 = smul.addr %s520, 36
      %s522 = smul.addr %s521, 8
      %s523 = scalar_lea.vmem %s3, %s522
      // Predicated region
      $region33: #{convbase_forward.3} parent=31 // pred_check
        %p524 = pneg %p105
      $region34: #{convbase_forward.3} parent=31 // pred_check_branch
        %526 = sbr.rel (%p524) target = $region36
      $region35: #{convbase_forward.3} parent=31 // pred_region
        _
      $region36: #{convbase_forward.3} parent=31 // pred_fallthru
        _
    $region32: #{convbase_forward.3} parent=5 // pred_fallthru
      _
    %p527 = scmp.le.s32.totalorder 2, %s9
    // Predicated region
    $region37: #{convbase_forward.3} parent=5 // pred_check
      %p528 = pneg %p527
    $region38: #{convbase_forward.3} parent=5 // pred_check_branch
      %530 = sbr.rel (%p528) target = $region40
    $region39: #{convbase_forward.3} parent=5 // pred_region
      %s531 = ssub.s32 %s9, 2
      // Predicated region
      $region41: #{convbase_forward.3} parent=39 // pred_check
        %p532 = pneg %p111
      $region42: #{convbase_forward.3} parent=39 // pred_check_branch
        %534 = sbr.rel (%p532) target = $region44
      $region43: #{convbase_forward.3} parent=39 // pred_region
        %p535 = scmp.lt.s32.totalorder %s15, 1
        %s536 = scalar_select %p535, %s15, 1
        %s537 = smul.addr %s536, 36
        %s538 = smul.addr %s537, 8
        %s539 = scalar_lea.vmem %s3, %s538
      $region44: #{convbase_forward.3} parent=39 // pred_fallthru
        _
    $region40: #{convbase_forward.3} parent=5 // pred_fallthru
      _
  $region6: #{convbase_forward.3} parent=0 // loop_footer
    %s13 = sadd.s32 1, %s9
  $region7: #{convbase_forward.3} parent=0 // loop_footer_branch
    %8 = sbr.rel target = $region3
  $region8: #{convbase_forward.3} parent=0 // loop_exit
    _

// kernel: convbase_forward.2
$region0: #{convbase_forward.2}
  #allocation0 [shape = 'u32[]', space=smem, size = 0x4, offset = 0x4, fixed_abs, tag = 'smem constant byte address 0x4 - core index']
  #allocation1 [shape = 'u32[72,128]{1,0:T(1,128)}', space=vmem, size = 0x9000, scoped, tag = 'internal scratch']
  %s0 = inlined_call_operand.vmem [shape: f32[2,332,128], index: 0, kind: input, shape index: {}]
  %s1 = inlined_call_operand.vmem [shape: bf16[1152,128], index: 1, kind: input, shape index: {}]
  %s2 = inlined_call_operand.vmem [shape: f32[288,1], index: 2, kind: input, shape index: {}]
  %s3 = inlined_call_operand.vmem [shape: bf16[2,288,128], index: 3, kind: output, shape index: {0}]
  %s4 = inlined_call_operand.vmem [shape: f32[2,2,128], index: 4, kind: output, shape index: {1}]
  %5 = xla_tuple %s3, %s4
  %s6 = sld [smem:[#allocation0]]
  $region53: #{convbase_forward.2} parent=0
    _
  %s8 = ssub.s32 1, %s6
  %s9 = scalar_select 0, %s8, %s6
  loop: start=0, step=1, limit=4
  $region2: #{convbase_forward.2} parent=0 // loop_pre_header
    _
  $region3: #{convbase_forward.2} parent=0 // loop_header
    %s11 = sphi 0, %s15
    %p12 = scmp.ge.s32.totalorder %s11, 4
    %s21 = sphi 0, %s23
    %s24 = sphi 0, %s21
    %s25 = sphi 0, %s24
    %s41 = sphi 0, %s25
    %s45 = sphi 0, %s45
    %s47 = sphi 0, %s45
    %s48 = sphi 0, %s47
    %s62 = sphi 0, %s48
    %s66 = sphi 0, %s66
    %s68 = sphi 0, %s66
    %s69 = sphi 0, %s68
    %s83 = sphi 0, %s69
    %s89 = sphi 0, %s91
    %s92 = sphi 0, %s89
    %s93 = sphi 0, %s92
    %s109 = sphi 0, %s93
    %s115 = sphi 0, %s117
    %s118 = sphi 0, %s115
    %s119 = sphi 0, %s118
    %s135 = sphi 0, %s119
  $region4: #{convbase_forward.2} parent=0 // loop_header_branch
    %14 = sbr.rel (%p12) target = $region8
  $region5: #{convbase_forward.2} parent=0 // loop_body
    %s16 = ssub.s32 %s11, 1
    %s17 = ssub.s32 %s11, 2
    %s18 = sadd.s32 %s11, 1
    %s19 = ssub.s32 %s11, %s18
    %p20 = scmp.eq.s32.totalorder %s19, 0
    %s22 = sadd.s32 %s21, 1
    %s23 = scalar_select %p20, %s21, %s22
    %p26 = pneg %p20
    %p27 = scmp.eq.s32.totalorder %s11, 1
    %p28 = por %p26, %p27
    %p29 = scmp.ne.s32.totalorder %s21, %s24
    %p30 = scmp.eq.s32.totalorder %s11, 0
    %p31 = por %p29, %p30
    %p32 = scmp.ne.s32.totalorder %s21, %s24
    %p33 = scmp.eq.s32.totalorder %s16, 1
    %p34 = por %p32, %p33
    %p35 = scmp.ne.s32.totalorder %s24, %s25
    %p36 = scmp.eq.s32.totalorder %s16, 0
    %p37 = por %p35, %p36
    %p38 = scmp.ne.s32.totalorder %s24, %s25
    %p39 = scmp.eq.s32.totalorder %s17, 1
    %p40 = por %p38, %p39
    %p42 = scmp.ne.s32.totalorder %s25, %s41
    %p43 = scmp.eq.s32.totalorder %s17, 0
    %p44 = por %p42, %p43
    %s46 = sadd.s32 %s45, 1
    %p49 = scmp.eq.s32.totalorder %s11, 1
    %p50 = scmp.ne.s32.totalorder %s45, %s47
    %p51 = scmp.eq.s32.totalorder %s11, 0
    %p52 = por %p50, %p51
    %p53 = scmp.ne.s32.totalorder %s45, %s47
    %p54 = scmp.eq.s32.totalorder %s16, 1
    %p55 = por %p53, %p54
    %p56 = scmp.ne.s32.totalorder %s47, %s48
    %p57 = scmp.eq.s32.totalorder %s16, 0
    %p58 = por %p56, %p57
    %p59 = scmp.ne.s32.totalorder %s47, %s48
    %p60 = scmp.eq.s32.totalorder %s17, 1
    %p61 = por %p59, %p60
    %p63 = scmp.ne.s32.totalorder %s48, %s62
    %p64 = scmp.eq.s32.totalorder %s17, 0
    %p65 = por %p63, %p64
    %s67 = sadd.s32 %s66, 1
    %p70 = scmp.eq.s32.totalorder %s11, 1
    %p71 = scmp.ne.s32.totalorder %s66, %s68
    %p72 = scmp.eq.s32.totalorder %s11, 0
    %p73 = por %p71, %p72
    %p74 = scmp.ne.s32.totalorder %s66, %s68
    %p75 = scmp.eq.s32.totalorder %s16, 1
    %p76 = por %p74, %p75
    %p77 = scmp.ne.s32.totalorder %s68, %s69
    %p78 = scmp.eq.s32.totalorder %s16, 0
    %p79 = por %p77, %p78
    %p80 = scmp.ne.s32.totalorder %s68, %s69
    %p81 = scmp.eq.s32.totalorder %s17, 1
    %p82 = por %p80, %p81
    %p84 = scmp.ne.s32.totalorder %s69, %s83
    %p85 = scmp.eq.s32.totalorder %s17, 0
    %p86 = por %p84, %p85
    %s87 = ssub.s32 %s11, %s18
    %p88 = scmp.eq.s32.totalorder %s87, 0
    %s90 = sadd.s32 %s89, 1
    %s91 = scalar_select %p88, %s89, %s90
    %p94 = pneg %p88
    %p95 = scmp.eq.s32.totalorder %s11, 1
    %p96 = por %p94, %p95
    %p97 = scmp.ne.s32.totalorder %s89, %s92
    %p98 = scmp.eq.s32.totalorder %s11, 0
    %p99 = por %p97, %p98
    %p100 = scmp.ne.s32.totalorder %s89, %s92
    %p101 = scmp.eq.s32.totalorder %s16, 1
    %p102 = por %p100, %p101
    %p103 = scmp.ne.s32.totalorder %s92, %s93
    %p104 = scmp.eq.s32.totalorder %s16, 0
    %p105 = por %p103, %p104
    %p106 = scmp.ne.s32.totalorder %s92, %s93
    %p107 = scmp.eq.s32.totalorder %s17, 1
    %p108 = por %p106, %p107
    %p110 = scmp.ne.s32.totalorder %s93, %s109
    %p111 = scmp.eq.s32.totalorder %s17, 0
    %p112 = por %p110, %p111
    %s113 = ssub.s32 %s11, %s18
    %p114 = scmp.eq.s32.totalorder %s113, 0
    %s116 = sadd.s32 %s115, 1
    %s117 = scalar_select %p114, %s115, %s116
    %p120 = pneg %p114
    %p121 = scmp.eq.s32.totalorder %s11, 1
    %p122 = por %p120, %p121
    %p123 = scmp.ne.s32.totalorder %s115, %s118
    %p124 = scmp.eq.s32.totalorder %s11, 0
    %p125 = por %p123, %p124
    %p126 = scmp.ne.s32.totalorder %s115, %s118
    %p127 = scmp.eq.s32.totalorder %s16, 1
    %p128 = por %p126, %p127
    %p129 = scmp.ne.s32.totalorder %s118, %s119
    %p130 = scmp.eq.s32.totalorder %s16, 0
    %p131 = por %p129, %p130
    %p132 = scmp.ne.s32.totalorder %s118, %s119
    %p133 = scmp.eq.s32.totalorder %s17, 1
    %p134 = por %p132, %p133
    %p136 = scmp.ne.s32.totalorder %s119, %s135
    %p137 = scmp.eq.s32.totalorder %s17, 0
    %p138 = por %p136, %p137
    %p139 = scmp.le.s32.totalorder 1, %s11
    %p140 = scmp.lt.s32.totalorder %s11, 3
    %p141 = pnand %p139, %p140
    %p142 = pneg %p141
    // Predicated region
    $region9: #{convbase_forward.2} parent=5 // pred_check
      _
    $region10: #{convbase_forward.2} parent=5 // pred_check_branch
      %144 = sbr.rel (%p141) target = $region12
    $region11: #{convbase_forward.2} parent=5 // pred_region
      %s145 = ssub.s32 %s11, 1
      // Predicated region
      $region13: #{convbase_forward.2} parent=11 // pred_check
        %p146 = pneg %p58
      $region14: #{convbase_forward.2} parent=11 // pred_check_branch
        %148 = sbr.rel (%p146) target = $region16
      $region15: #{convbase_forward.2} parent=11 // pred_region
        _
      $region16: #{convbase_forward.2} parent=11 // pred_fallthru
        _
      // Predicated region
      $region17: #{convbase_forward.2} parent=11 // pred_check
        %p149 = pneg %p79
      $region18: #{convbase_forward.2} parent=11 // pred_check_branch
        %151 = sbr.rel (%p149) target = $region20
      $region19: #{convbase_forward.2} parent=11 // pred_region
        _
      $region20: #{convbase_forward.2} parent=11 // pred_fallthru
        _
    $region12: #{convbase_forward.2} parent=5 // pred_fallthru
      _
    %p152 = scmp.lt.s32.totalorder %s11, 2
    // Predicated region
    $region21: #{convbase_forward.2} parent=5 // pred_check
      %p153 = pneg %p152
    $region22: #{convbase_forward.2} parent=5 // pred_check_branch
      %155 = sbr.rel (%p153) target = $region24
    $region23: #{convbase_forward.2} parent=5 // pred_region
      // Predicated region
      $region25: #{convbase_forward.2} parent=23 // pred_check
        %p156 = pneg %p31
      $region26: #{convbase_forward.2} parent=23 // pred_check_branch
        %158 = sbr.rel (%p156) target = $region28
      $region27: #{convbase_forward.2} parent=23 // pred_region
        %p159 = scmp.lt.s32.totalorder %s11, 1
        %s160 = scalar_select %p159, %s11, 1
        %s161 = smul.addr %s160, 42
        %s162 = smul.addr %s161, 8
        %s163 = scalar_lea.vmem %s0, %s162
      $region28: #{convbase_forward.2} parent=23 // pred_fallthru
        _
    $region24: #{convbase_forward.2} parent=5 // pred_fallthru
      _
    %p164 = scmp.le.s32.totalorder 1, %s11
    %p165 = scmp.lt.s32.totalorder %s11, 3
    %p166 = pnand %p164, %p165
    %p167 = pneg %p166
    // Predicated region
    $region29: #{convbase_forward.2} parent=5 // pred_check
      _
    $region30: #{convbase_forward.2} parent=5 // pred_check_branch
      %169 = sbr.rel (%p166) target = $region32
    $region31: #{convbase_forward.2} parent=5 // pred_region
      %s170 = ssub.s32 %s11, 1
      %p171 = scmp.lt.s32.totalorder %s16, 1
      %s172 = scalar_select %p171, %s16, 1
      %s173 = smul.addr %s172, 42
      %s174 = smul.addr %s173, 8
      %s175 = scalar_lea.vmem %s0, %s174
      %p176 = pneg %p37
      %p177 = pneg %p34
      %p178 = pneg %p58
      %p179 = pneg %p55
      %p180 = pneg %p79
      %p181 = pneg %p76
      %p182 = pneg %p105
      %p183 = pneg %p102
      %p184 = scmp.lt.s32.totalorder %s16, 1
      %s185 = scalar_select %p184, %s16, 1
      %s186 = smul.addr %s185, 36
      %s187 = smul.addr %s186, 4
      %s188 = scalar_lea.vmem %s3, %s187
      %p189 = pneg %p131
      %p190 = pneg %p128
      %p191 = scmp.lt.s32.totalorder %s16, 1
      %s192 = scalar_select %p191, %s16, 1
      %s193 = smul.addr %s192, 2
      %s194 = scalar_lea.vmem %s4, %s193
      %p195 = scmp.lt.s32.totalorder %s16, 1
      %s196 = scalar_select %p195, %s16, 1
      %s197 = smul.addr %s196, 42
      %s198 = smul.addr %s197, 8
      %s199 = scalar_lea.vmem %s0, %s198
      %p200 = scmp.lt.s32.totalorder %s16, 1
      %s201 = scalar_select %p200, %s16, 1
      %s202 = smul.addr %s201, 36
      %s203 = smul.addr %s202, 4
      %s204 = scalar_lea.vmem %s3, %s203
      %p205 = scmp.lt.s32.totalorder %s16, 1
      %s206 = scalar_select %p205, %s16, 1
      %s207 = smul.addr %s206, 2
      %s208 = scalar_lea.vmem %s4, %s207
      %v209 = vld [vmem:[%s199] sm:$0xff]
      %v210 = vld [vmem:[%s199 + $0x8] sm:$0xff]
      %v211 = vld [vmem:[%s199 + $0x10] sm:$0xff]
      %v212 = vld [vmem:[%s199 + $0x18] sm:$0xff]
      %v213 = vld [vmem:[%s199 + $0x20] sm:$0xff]
      %v214 = vld [vmem:[%s199 + $0x28] sm:$0xff]
      %v215 = vld [vmem:[%s199 + $0x30] sm:$0xff]
      %v216 = vld [vmem:[%s199 + $0x38] sm:$0xff]
      %v217 = vld [vmem:[%s199 + $0x40] sm:$0xff]
      %v218 = vld [vmem:[%s199 + $0x48] sm:$0xff]
      %v219 = vld [vmem:[%s199 + $0x50] sm:$0xff]
      %v220 = vld [vmem:[%s199 + $0x58] sm:$0xff]
      %v221 = vld [vmem:[%s199 + $0x60] sm:$0xff]
      %v222 = vld [vmem:[%s199 + $0x68] sm:$0xff]
      %v223 = vld [vmem:[%s199 + $0x70] sm:$0xff]
      %v224 = vld [vmem:[%s199 + $0x78] sm:$0xff]
      %v225 = vld [vmem:[%s199 + $0x80] sm:$0xff]
      %v226 = vld [vmem:[%s199 + $0x88] sm:$0xff]
      %v227 = vld [vmem:[%s199 + $0x90] sm:$0xff]
      %v228 = vld [vmem:[%s199 + $0x98] sm:$0xff]
      %v229 = vld [vmem:[%s199 + $0xa0] sm:$0xff]
      %v230 = vld [vmem:[%s199 + $0xa8] sm:$0xff]
      %v231 = vld [vmem:[%s199 + $0xb0] sm:$0xff]
      %v232 = vld [vmem:[%s199 + $0xb8] sm:$0xff]
      %v233 = vld [vmem:[%s199 + $0xc0] sm:$0xff]
      %v234 = vld [vmem:[%s199 + $0xc8] sm:$0xff]
      %v235 = vld [vmem:[%s199 + $0xd0] sm:$0xff]
      %v236 = vld [vmem:[%s199 + $0xd8] sm:$0xff]
      %v237 = vld [vmem:[%s199 + $0xe0] sm:$0xff]
      %v238 = vld [vmem:[%s199 + $0xe8] sm:$0xff]
      %v239 = vld [vmem:[%s199 + $0xf0] sm:$0xff]
      %v240 = vld [vmem:[%s199 + $0xf8] sm:$0xff]
      %v241 = vld [vmem:[%s199 + $0x100] sm:$0xff]
      %v242 = vld [vmem:[%s199 + $0x108] sm:$0xff]
      %v243 = vld [vmem:[%s199 + $0x110] sm:$0xff]
      %v244 = vld [vmem:[%s199 + $0x118] sm:$0xff]
      %v245 = vpack.c.bf16 %v210, %v209
      %v246 = vpack.c.bf16 %v212, %v211
      %v247 = vpack.c.bf16 %v214, %v213
      %v248 = vpack.c.bf16 %v216, %v215
      %v249 = vpack.c.bf16 %v218, %v217
      %v250 = vpack.c.bf16 %v220, %v219
      %v251 = vpack.c.bf16 %v222, %v221
      %v252 = vpack.c.bf16 %v224, %v223
      %v253 = vpack.c.bf16 %v226, %v225
      %v254 = vpack.c.bf16 %v228, %v227
      %v255 = vpack.c.bf16 %v230, %v229
      %v256 = vpack.c.bf16 %v232, %v231
      %v257 = vpack.c.bf16 %v234, %v233
      %v258 = vpack.c.bf16 %v236, %v235
      %v259 = vpack.c.bf16 %v238, %v237
      %v260 = vpack.c.bf16 %v240, %v239
      %v261 = vpack.c.bf16 %v242, %v241
      %v262 = vpack.c.bf16 %v244, %v243
      %v263 = vld [vmem:[%s1] sm:$0xf]
      %v264 = vld [vmem:[%s1 + $0x4] sm:$0xf]
      %v265 = vld [vmem:[%s1 + $0x8] sm:$0xf]
      %v266 = vld [vmem:[%s1 + $0xc] sm:$0xf]
      %v267 = vld [vmem:[%s1 + $0x10] sm:$0xf]
      %v268 = vld [vmem:[%s1 + $0x14] sm:$0xf]
      %v269 = vld [vmem:[%s1 + $0x18] sm:$0xf]
      %v270 = vld [vmem:[%s1 + $0x1c] sm:$0xf]
      %v271 = vld [vmem:[%s1 + $0x20] sm:$0xf]
      %v272 = vld [vmem:[%s1 + $0x24] sm:$0xf]
      %v273 = vld [vmem:[%s1 + $0x28] sm:$0xf]
      %v274 = vld [vmem:[%s1 + $0x2c] sm:$0xf]
      %v275 = vld [vmem:[%s1 + $0x30] sm:$0xf]
      %v276 = vld [vmem:[%s1 + $0x34] sm:$0xf]
      %v277 = vld [vmem:[%s1 + $0x38] sm:$0xf]
      %v278 = vld [vmem:[%s1 + $0x3c] sm:$0xf]
      %v279 = vld [vmem:[%s199 + $0x1] sm:$0xff]
      %v280 = vld [vmem:[%s199 + $0x9] sm:$0xff]
      %v281 = vld [vmem:[%s199 + $0x11] sm:$0xff]
      %v282 = vld [vmem:[%s199 + $0x19] sm:$0xff]
      %v283 = vld [vmem:[%s199 + $0x21] sm:$0xff]
      %v284 = vld [vmem:[%s199 + $0x29] sm:$0xff]
      %v285 = vld [vmem:[%s199 + $0x31] sm:$0xff]
      %v286 = vld [vmem:[%s199 + $0x39] sm:$0xff]
      %v287 = vld [vmem:[%s199 + $0x41] sm:$0xff]
      %v288 = vld [vmem:[%s199 + $0x49] sm:$0xff]
      %v289 = vld [vmem:[%s199 + $0x51] sm:$0xff]
      %v290 = vld [vmem:[%s199 + $0x59] sm:$0xff]
      %v291 = vld [vmem:[%s199 + $0x61] sm:$0xff]
      %v292 = vld [vmem:[%s199 + $0x69] sm:$0xff]
      %v293 = vld [vmem:[%s199 + $0x71] sm:$0xff]
      %v294 = vld [vmem:[%s199 + $0x79] sm:$0xff]
      %v295 = vld [vmem:[%s199 + $0x81] sm:$0xff]
      %v296 = vld [vmem:[%s199 + $0x89] sm:$0xff]
      %v297 = vld [vmem:[%s199 + $0x91] sm:$0xff]
      %v298 = vld [vmem:[%s199 + $0x99] sm:$0xff]
      %v299 = vld [vmem:[%s199 + $0xa1] sm:$0xff]
      %v300 = vld [vmem:[%s199 + $0xa9] sm:$0xff]
      %v301 = vld [vmem:[%s199 + $0xb1] sm:$0xff]
      %v302 = vld [vmem:[%s199 + $0xb9] sm:$0xff]
      %v303 = vld [vmem:[%s199 + $0xc1] sm:$0xff]
      %v304 = vld [vmem:[%s199 + $0xc9] sm:$0xff]
      %v305 = vld [vmem:[%s199 + $0xd1] sm:$0xff]
      %v306 = vld [vmem:[%s199 + $0xd9] sm:$0xff]
      %v307 = vld [vmem:[%s199 + $0xe1] sm:$0xff]
      %v308 = vld [vmem:[%s199 + $0xe9] sm:$0xff]
      %v309 = vld [vmem:[%s199 + $0xf1] sm:$0xff]
      %v310 = vld [vmem:[%s199 + $0xf9] sm:$0xff]
      %v311 = vld [vmem:[%s199 + $0x101] sm:$0xff]
      %v312 = vld [vmem:[%s199 + $0x109] sm:$0xff]
      %v313 = vld [vmem:[%s199 + $0x111] sm:$0xff]
      %v314 = vld [vmem:[%s199 + $0x119] sm:$0xff]
      %v315 = vpack.c.bf16 %v280, %v279
      %v316 = vpack.c.bf16 %v282, %v281
      %v317 = vpack.c.bf16 %v284, %v283
      %v318 = vpack.c.bf16 %v286, %v285
      %v319 = vpack.c.bf16 %v288, %v287
      %v320 = vpack.c.bf16 %v290, %v289
      %v321 = vpack.c.bf16 %v292, %v291
      %v322 = vpack.c.bf16 %v294, %v293
      %v323 = vpack.c.bf16 %v296, %v295
      %v324 = vpack.c.bf16 %v298, %v297
      %v325 = vpack.c.bf16 %v300, %v299
      %v326 = vpack.c.bf16 %v302, %v301
      %v327 = vpack.c.bf16 %v304, %v303
      %v328 = vpack.c.bf16 %v306, %v305
      %v329 = vpack.c.bf16 %v308, %v307
      %v330 = vpack.c.bf16 %v310, %v309
      %v331 = vpack.c.bf16 %v312, %v311
      %v332 = vpack.c.bf16 %v314, %v313
      %v333 = vld [vmem:[%s1 + $0x40] sm:$0xf]
      %v334 = vld [vmem:[%s1 + $0x44] sm:$0xf]
      %v335 = vld [vmem:[%s1 + $0x48] sm:$0xf]
      %v336 = vld [vmem:[%s1 + $0x4c] sm:$0xf]
      %v337 = vld [vmem:[%s1 + $0x50] sm:$0xf]
      %v338 = vld [vmem:[%s1 + $0x54] sm:$0xf]
      %v339 = vld [vmem:[%s1 + $0x58] sm:$0xf]
      %v340 = vld [vmem:[%s1 + $0x5c] sm:$0xf]
      %v341 = vld [vmem:[%s1 + $0x60] sm:$0xf]
      %v342 = vld [vmem:[%s1 + $0x64] sm:$0xf]
      %v343 = vld [vmem:[%s1 + $0x68] sm:$0xf]
      %v344 = vld [vmem:[%s1 + $0x6c] sm:$0xf]
      %v345 = vld [vmem:[%s1 + $0x70] sm:$0xf]
      %v346 = vld [vmem:[%s1 + $0x74] sm:$0xf]
      %v347 = vld [vmem:[%s1 + $0x78] sm:$0xf]
      %v348 = vld [vmem:[%s1 + $0x7c] sm:$0xf]
      %v365 = vunpack.c.l.b16 %v333
      %v366 = vunpack.c.l.b16 %v334
      %v367 = vunpack.c.l.b16 %v335
      %v368 = vunpack.c.l.b16 %v336
      %v369 = vunpack.c.l.b16 %v337
      %v370 = vunpack.c.l.b16 %v338
      %v371 = vunpack.c.l.b16 %v339
      %v372 = vunpack.c.l.b16 %v340
      %v373 = vunpack.c.l.b16 %v341
      %v374 = vunpack.c.l.b16 %v342
      %v375 = vunpack.c.l.b16 %v343
      %v376 = vunpack.c.l.b16 %v344
      %v377 = vunpack.c.l.b16 %v345
      %v378 = vunpack.c.l.b16 %v346
      %v379 = vunpack.c.l.b16 %v347
      %v380 = vunpack.c.l.b16 %v348
      %v381 = vpack.c.b16 %v366, %v365
      %v382 = vpack.c.b16 %v368, %v367
      %v383 = vpack.c.b16 %v370, %v369
      %v384 = vpack.c.b16 %v372, %v371
      %v385 = vpack.c.b16 %v374, %v373
      %v386 = vpack.c.b16 %v376, %v375
      %v387 = vpack.c.b16 %v378, %v377
      %v388 = vpack.c.b16 %v380, %v379
      %397 = vmatpush.bf16.msra.mxu0 %v388
      %398 = vmatpush.bf16.msra.mxu0 %v387
      %399 = vmatpush.bf16.msra.mxu0 %v386
      %400 = vmatpush.bf16.msra.mxu0 %v385
      %401 = vmatpush.bf16.msra.mxu0 %v384
      %402 = vmatpush.bf16.msra.mxu0 %v383
      %403 = vmatpush.bf16.msra.mxu0 %v382
      %404 = vmatpush.bf16.msra.mxu0 %v381
      %405 = vmatmul.bf16.gmra.mxu0 %v315
      %v406 = vpop.f32.mrf.mxu0
      %v407 = vadd.f32 0.0, %v406
      %v408 = vpop.f32.mrf.mxu0
      %v409 = vadd.f32 0.0, %v408
      %410 = vmatmul.bf16.gmra.mxu0 %v316
      %v411 = vpop.f32.mrf.mxu0
      %v412 = vadd.f32 0.0, %v411
      %v413 = vpop.f32.mrf.mxu0
      %v414 = vadd.f32 0.0, %v413
      %415 = vmatmul.bf16.gmra.mxu0 %v317
      %v416 = vpop.f32.mrf.mxu0
      %v417 = vadd.f32 0.0, %v416
      %v418 = vpop.f32.mrf.mxu0
      %v419 = vadd.f32 0.0, %v418
      %420 = vmatmul.bf16.gmra.mxu0 %v318
      %v421 = vpop.f32.mrf.mxu0
      %v422 = vadd.f32 0.0, %v421
      %v423 = vpop.f32.mrf.mxu0
      %v424 = vadd.f32 0.0, %v423
      %425 = vmatmul.bf16.gmra.mxu0 %v319
      %v426 = vpop.f32.mrf.mxu0
      %v427 = vadd.f32 0.0, %v426
      %v428 = vpop.f32.mrf.mxu0
      %v429 = vadd.f32 0.0, %v428
      %430 = vmatmul.bf16.gmra.mxu0 %v320
      %v431 = vpop.f32.mrf.mxu0
      %v432 = vadd.f32 0.0, %v431
      %v433 = vpop.f32.mrf.mxu0
      %v434 = vadd.f32 0.0, %v433
      %435 = vmatmul.bf16.gmra.mxu0 %v321
      %v436 = vpop.f32.mrf.mxu0
      %v437 = vadd.f32 0.0, %v436
      %v438 = vpop.f32.mrf.mxu0
      %v439 = vadd.f32 0.0, %v438
      %440 = vmatmul.bf16.gmra.mxu0 %v322
      %v441 = vpop.f32.mrf.mxu0
      %v442 = vadd.f32 0.0, %v441
      %v443 = vpop.f32.mrf.mxu0
      %v444 = vadd.f32 0.0, %v443
      %445 = vmatmul.bf16.gmra.mxu0 %v323
      %v446 = vpop.f32.mrf.mxu0
      %v447 = vadd.f32 0.0, %v446
      %v448 = vpop.f32.mrf.mxu0
      %v449 = vadd.f32 0.0, %v448
      %450 = vmatmul.bf16.gmra.mxu0 %v324
      %v451 = vpop.f32.mrf.mxu0
      %v452 = vadd.f32 0.0, %v451
      %v453 = vpop.f32.mrf.mxu0
      %v454 = vadd.f32 0.0, %v453
      %455 = vmatmul.bf16.gmra.mxu0 %v325
      %v456 = vpop.f32.mrf.mxu0
      %v457 = vadd.f32 0.0, %v456
      %v458 = vpop.f32.mrf.mxu0
      %v459 = vadd.f32 0.0, %v458
      %460 = vmatmul.bf16.gmra.mxu0 %v326
      %v461 = vpop.f32.mrf.mxu0
      %v462 = vadd.f32 0.0, %v461
      %v463 = vpop.f32.mrf.mxu0
      %v464 = vadd.f32 0.0, %v463
      %465 = vmatmul.bf16.gmra.mxu0 %v327
      %v466 = vpop.f32.mrf.mxu0
      %v467 = vadd.f32 0.0, %v466
      %v468 = vpop.f32.mrf.mxu0
      %v469 = vadd.f32 0.0, %v468
      %470 = vmatmul.bf16.gmra.mxu0 %v328
      %v471 = vpop.f32.mrf.mxu0
      %v472 = vadd.f32 0.0, %v471
      %v473 = vpop.f32.mrf.mxu0
      %v474 = vadd.f32 0.0, %v473
      %475 = vmatmul.bf16.gmra.mxu0 %v329
      %v476 = vpop.f32.mrf.mxu0
      %v477 = vadd.f32 0.0, %v476
      %v478 = vpop.f32.mrf.mxu0
      %v479 = vadd.f32 0.0, %v478
      %480 = vmatmul.bf16.gmra.mxu0 %v330
      %v481 = vpop.f32.mrf.mxu0
      %v482 = vadd.f32 0.0, %v481
      %v483 = vpop.f32.mrf.mxu0
      %v484 = vadd.f32 0.0, %v483
      %485 = vmatmul.bf16.gmra.mxu0 %v331
      %v486 = vpop.f32.mrf.mxu0
      %v487 = vadd.f32 0.0, %v486
      %v488 = vpop.f32.mrf.mxu0
      %v489 = vadd.f32 0.0, %v488
      %490 = vmatmul.bf16.gmra.mxu0 %v332
      %v491 = vpop.f32.mrf.mxu0
      %v492 = vadd.f32 0.0, %v491
      %v493 = vpop.f32.mrf.mxu0
      %v494 = vadd.f32 0.0, %v493
      %495 = vdwg.mxu0
      %v512 = vunpack.c.l.b16 %v263
      %v513 = vunpack.c.l.b16 %v264
      %v514 = vunpack.c.l.b16 %v265
      %v515 = vunpack.c.l.b16 %v266
      %v516 = vunpack.c.l.b16 %v267
      %v517 = vunpack.c.l.b16 %v268
      %v518 = vunpack.c.l.b16 %v269
      %v519 = vunpack.c.l.b16 %v270
      %v520 = vunpack.c.l.b16 %v271
      %v521 = vunpack.c.l.b16 %v272
      %v522 = vunpack.c.l.b16 %v273
      %v523 = vunpack.c.l.b16 %v274
      %v524 = vunpack.c.l.b16 %v275
      %v525 = vunpack.c.l.b16 %v276
      %v526 = vunpack.c.l.b16 %v277
      %v527 = vunpack.c.l.b16 %v278
      %v528 = vpack.c.b16 %v513, %v512
      %v529 = vpack.c.b16 %v515, %v514
      %v530 = vpack.c.b16 %v517, %v516
      %v531 = vpack.c.b16 %v519, %v518
      %v532 = vpack.c.b16 %v521, %v520
      %v533 = vpack.c.b16 %v523, %v522
      %v534 = vpack.c.b16 %v525, %v524
      %v535 = vpack.c.b16 %v527, %v526
      %544 = vmatpush.bf16.msra.mxu0 %v535
      %545 = vmatpush.bf16.msra.mxu0 %v534
      %546 = vmatpush.bf16.msra.mxu0 %v533
      %547 = vmatpush.bf16.msra.mxu0 %v532
      %548 = vmatpush.bf16.msra.mxu0 %v531
      %549 = vmatpush.bf16.msra.mxu0 %v530
      %550 = vmatpush.bf16.msra.mxu0 %v529
      %551 = vmatpush.bf16.msra.mxu0 %v528
      %552 = vmatmul.bf16.gmra.mxu0 %v245
      %v553 = vpop.f32.mrf.mxu0
      %v554 = vadd.f32 %v407, %v553
      %v555 = vpop.f32.mrf.mxu0
      %v556 = vadd.f32 %v409, %v555
      %557 = vmatmul.bf16.gmra.mxu0 %v246
      %v558 = vpop.f32.mrf.mxu0
      %v559 = vadd.f32 %v412, %v558
      %v560 = vpop.f32.mrf.mxu0
      %v561 = vadd.f32 %v414, %v560
      %562 = vmatmul.bf16.gmra.mxu0 %v247
      %v563 = vpop.f32.mrf.mxu0
      %v564 = vadd.f32 %v417, %v563
      %v565 = vpop.f32.mrf.mxu0
      %v566 = vadd.f32 %v419, %v565
      %567 = vmatmul.bf16.gmra.mxu0 %v248
      %v568 = vpop.f32.mrf.mxu0
      %v569 = vadd.f32 %v422, %v568
      %v570 = vpop.f32.mrf.mxu0
      %v571 = vadd.f32 %v424, %v570
      %572 = vmatmul.bf16.gmra.mxu0 %v249
      %v573 = vpop.f32.mrf.mxu0
      %v574 = vadd.f32 %v427, %v573
      %v575 = vpop.f32.mrf.mxu0
      %v576 = vadd.f32 %v429, %v575
      %577 = vmatmul.bf16.gmra.mxu0 %v250
      %v578 = vpop.f32.mrf.mxu0
      %v579 = vadd.f32 %v432, %v578
      %v580 = vpop.f32.mrf.mxu0
      %v581 = vadd.f32 %v434, %v580
      %582 = vmatmul.bf16.gmra.mxu0 %v251
      %v583 = vpop.f32.mrf.mxu0
      %v584 = vadd.f32 %v437, %v583
      %v585 = vpop.f32.mrf.mxu0
      %v586 = vadd.f32 %v439, %v585
      %587 = vmatmul.bf16.gmra.mxu0 %v252
      %v588 = vpop.f32.mrf.mxu0
      %v589 = vadd.f32 %v442, %v588
      %v590 = vpop.f32.mrf.mxu0
      %v591 = vadd.f32 %v444, %v590
      %592 = vmatmul.bf16.gmra.mxu0 %v253
      %v593 = vpop.f32.mrf.mxu0
      %v594 = vadd.f32 %v447, %v593
      %v595 = vpop.f32.mrf.mxu0
      %v596 = vadd.f32 %v449, %v595
      %597 = vmatmul.bf16.gmra.mxu0 %v254
      %v598 = vpop.f32.mrf.mxu0
      %v599 = vadd.f32 %v452, %v598
      %v600 = vpop.f32.mrf.mxu0
      %v601 = vadd.f32 %v454, %v600
      %602 = vmatmul.bf16.gmra.mxu0 %v255
      %v603 = vpop.f32.mrf.mxu0
      %v604 = vadd.f32 %v457, %v603
      %v605 = vpop.f32.mrf.mxu0
      %v606 = vadd.f32 %v459, %v605
      %607 = vmatmul.bf16.gmra.mxu0 %v256
      %v608 = vpop.f32.mrf.mxu0
      %v609 = vadd.f32 %v462, %v608
      %v610 = vpop.f32.mrf.mxu0
      %v611 = vadd.f32 %v464, %v610
      %612 = vmatmul.bf16.gmra.mxu0 %v257
      %v613 = vpop.f32.mrf.mxu0
      %v614 = vadd.f32 %v467, %v613
      %v615 = vpop.f32.mrf.mxu0
      %v616 = vadd.f32 %v469, %v615
      %617 = vmatmul.bf16.gmra.mxu0 %v258
      %v618 = vpop.f32.mrf.mxu0
      %v619 = vadd.f32 %v472, %v618
      %v620 = vpop.f32.mrf.mxu0
      %v621 = vadd.f32 %v474, %v620
      %622 = vmatmul.bf16.gmra.mxu0 %v259
      %v623 = vpop.f32.mrf.mxu0
      %v624 = vadd.f32 %v477, %v623
      %v625 = vpop.f32.mrf.mxu0
      %v626 = vadd.f32 %v479, %v625
      %627 = vmatmul.bf16.gmra.mxu0 %v260
      %v628 = vpop.f32.mrf.mxu0
      %v629 = vadd.f32 %v482, %v628
      %v630 = vpop.f32.mrf.mxu0
      %v631 = vadd.f32 %v484, %v630
      %632 = vmatmul.bf16.gmra.mxu0 %v261
      %v633 = vpop.f32.mrf.mxu0
      %v634 = vadd.f32 %v487, %v633
      %v635 = vpop.f32.mrf.mxu0
      %v636 = vadd.f32 %v489, %v635
      %637 = vmatmul.bf16.gmra.mxu0 %v262
      %v638 = vpop.f32.mrf.mxu0
      %v639 = vadd.f32 %v492, %v638
      %v640 = vpop.f32.mrf.mxu0
      %v641 = vadd.f32 %v494, %v640
      %642 = vdwg.mxu0
      %v643 = vld [vmem:[%s199 + $0x2] sm:$0xff]
      %v644 = vld [vmem:[%s199 + $0xa] sm:$0xff]
      %v645 = vld [vmem:[%s199 + $0x12] sm:$0xff]
      %v646 = vld [vmem:[%s199 + $0x1a] sm:$0xff]
      %v647 = vld [vmem:[%s199 + $0x22] sm:$0xff]
      %v648 = vld [vmem:[%s199 + $0x2a] sm:$0xff]
      %v649 = vld [vmem:[%s199 + $0x32] sm:$0xff]
      %v650 = vld [vmem:[%s199 + $0x3a] sm:$0xff]
      %v651 = vld [vmem:[%s199 + $0x42] sm:$0xff]
      %v652 = vld [vmem:[%s199 + $0x4a] sm:$0xff]
      %v653 = vld [vmem:[%s199 + $0x52] sm:$0xff]
      %v654 = vld [vmem:[%s199 + $0x5a] sm:$0xff]
      %v655 = vld [vmem:[%s199 + $0x62] sm:$0xff]
      %v656 = vld [vmem:[%s199 + $0x6a] sm:$0xff]
      %v657 = vld [vmem:[%s199 + $0x72] sm:$0xff]
      %v658 = vld [vmem:[%s199 + $0x7a] sm:$0xff]
      %v659 = vld [vmem:[%s199 + $0x82] sm:$0xff]
      %v660 = vld [vmem:[%s199 + $0x8a] sm:$0xff]
      %v661 = vld [vmem:[%s199 + $0x92] sm:$0xff]
      %v662 = vld [vmem:[%s199 + $0x9a] sm:$0xff]
      %v663 = vld [vmem:[%s199 + $0xa2] sm:$0xff]
      %v664 = vld [vmem:[%s199 + $0xaa] sm:$0xff]
      %v665 = vld [vmem:[%s199 + $0xb2] sm:$0xff]
      %v666 = vld [vmem:[%s199 + $0xba] sm:$0xff]
      %v667 = vld [vmem:[%s199 + $0xc2] sm:$0xff]
      %v668 = vld [vmem:[%s199 + $0xca] sm:$0xff]
      %v669 = vld [vmem:[%s199 + $0xd2] sm:$0xff]
      %v670 = vld [vmem:[%s199 + $0xda] sm:$0xff]
      %v671 = vld [vmem:[%s199 + $0xe2] sm:$0xff]
      %v672 = vld [vmem:[%s199 + $0xea] sm:$0xff]
      %v673 = vld [vmem:[%s199 + $0xf2] sm:$0xff]
      %v674 = vld [vmem:[%s199 + $0xfa] sm:$0xff]
      %v675 = vld [vmem:[%s199 + $0x102] sm:$0xff]
      %v676 = vld [vmem:[%s199 + $0x10a] sm:$0xff]
      %v677 = vld [vmem:[%s199 + $0x112] sm:$0xff]
      %v678 = vld [vmem:[%s199 + $0x11a] sm:$0xff]
      %v679 = vpack.c.bf16 %v644, %v643
      %v680 = vpack.c.bf16 %v646, %v645
      %v681 = vpack.c.bf16 %v648, %v647
      %v682 = vpack.c.bf16 %v650, %v649
      %v683 = vpack.c.bf16 %v652, %v651
      %v684 = vpack.c.bf16 %v654, %v653
      %v685 = vpack.c.bf16 %v656, %v655
      %v686 = vpack.c.bf16 %v658, %v657
      %v687 = vpack.c.bf16 %v660, %v659
      %v688 = vpack.c.bf16 %v662, %v661
      %v689 = vpack.c.bf16 %v664, %v663
      %v690 = vpack.c.bf16 %v666, %v665
      %v691 = vpack.c.bf16 %v668, %v667
      %v692 = vpack.c.bf16 %v670, %v669
      %v693 = vpack.c.bf16 %v672, %v671
      %v694 = vpack.c.bf16 %v674, %v673
      %v695 = vpack.c.bf16 %v676, %v675
      %v696 = vpack.c.bf16 %v678, %v677
      %v697 = vld [vmem:[%s1 + $0x80] sm:$0xf]
      %v698 = vld [vmem:[%s1 + $0x84] sm:$0xf]
      %v699 = vld [vmem:[%s1 + $0x88] sm:$0xf]
      %v700 = vld [vmem:[%s1 + $0x8c] sm:$0xf]
      %v701 = vld [vmem:[%s1 + $0x90] sm:$0xf]
      %v702 = vld [vmem:[%s1 + $0x94] sm:$0xf]
      %v703 = vld [vmem:[%s1 + $0x98] sm:$0xf]
      %v704 = vld [vmem:[%s1 + $0x9c] sm:$0xf]
      %v705 = vld [vmem:[%s1 + $0xa0] sm:$0xf]
      %v706 = vld [vmem:[%s1 + $0xa4] sm:$0xf]
      %v707 = vld [vmem:[%s1 + $0xa8] sm:$0xf]
      %v708 = vld [vmem:[%s1 + $0xac] sm:$0xf]
      %v709 = vld [vmem:[%s1 + $0xb0] sm:$0xf]
      %v710 = vld [vmem:[%s1 + $0xb4] sm:$0xf]
      %v711 = vld [vmem:[%s1 + $0xb8] sm:$0xf]
      %v712 = vld [vmem:[%s1 + $0xbc] sm:$0xf]
      %v729 = vunpack.c.l.b16 %v697
      %v730 = vunpack.c.l.b16 %v698
      %v731 = vunpack.c.l.b16 %v699
      %v732 = vunpack.c.l.b16 %v700
      %v733 = vunpack.c.l.b16 %v701
      %v734 = vunpack.c.l.b16 %v702
      %v735 = vunpack.c.l.b16 %v703
      %v736 = vunpack.c.l.b16 %v704
      %v737 = vunpack.c.l.b16 %v705
      %v738 = vunpack.c.l.b16 %v706
      %v739 = vunpack.c.l.b16 %v707
      %v740 = vunpack.c.l.b16 %v708
      %v741 = vunpack.c.l.b16 %v709
      %v742 = vunpack.c.l.b16 %v710
      %v743 = vunpack.c.l.b16 %v711
      %v744 = vunpack.c.l.b16 %v712
      %v745 = vpack.c.b16 %v730, %v729
      %v746 = vpack.c.b16 %v732, %v731
      %v747 = vpack.c.b16 %v734, %v733
      %v748 = vpack.c.b16 %v736, %v735
      %v749 = vpack.c.b16 %v738, %v737
      %v750 = vpack.c.b16 %v740, %v739
      %v751 = vpack.c.b16 %v742, %v741
      %v752 = vpack.c.b16 %v744, %v743
      %761 = vmatpush.bf16.msra.mxu0 %v752
      %762 = vmatpush.bf16.msra.mxu0 %v751
      %763 = vmatpush.bf16.msra.mxu0 %v750
      %764 = vmatpush.bf16.msra.mxu0 %v749
      %765 = vmatpush.bf16.msra.mxu0 %v748
      %766 = vmatpush.bf16.msra.mxu0 %v747
      %767 = vmatpush.bf16.msra.mxu0 %v746
      %768 = vmatpush.bf16.msra.mxu0 %v745
      %769 = vmatmul.bf16.gmra.mxu0 %v679
      %v770 = vpop.f32.mrf.mxu0
      %v771 = vadd.f32 0.0, %v770
      %v772 = vpop.f32.mrf.mxu0
      %v773 = vadd.f32 0.0, %v772
      %774 = vmatmul.bf16.gmra.mxu0 %v680
      %v775 = vpop.f32.mrf.mxu0
      %v776 = vadd.f32 0.0, %v775
      %v777 = vpop.f32.mrf.mxu0
      %v778 = vadd.f32 0.0, %v777
      %779 = vmatmul.bf16.gmra.mxu0 %v681
      %v780 = vpop.f32.mrf.mxu0
      %v781 = vadd.f32 0.0, %v780
      %v782 = vpop.f32.mrf.mxu0
      %v783 = vadd.f32 0.0, %v782
      %784 = vmatmul.bf16.gmra.mxu0 %v682
      %v785 = vpop.f32.mrf.mxu0
      %v786 = vadd.f32 0.0, %v785
      %v787 = vpop.f32.mrf.mxu0
      %v788 = vadd.f32 0.0, %v787
      %789 = vmatmul.bf16.gmra.mxu0 %v683
      %v790 = vpop.f32.mrf.mxu0
      %v791 = vadd.f32 0.0, %v790
      %v792 = vpop.f32.mrf.mxu0
      %v793 = vadd.f32 0.0, %v792
      %794 = vmatmul.bf16.gmra.mxu0 %v684
      %v795 = vpop.f32.mrf.mxu0
      %v796 = vadd.f32 0.0, %v795
      %v797 = vpop.f32.mrf.mxu0
      %v798 = vadd.f32 0.0, %v797
      %799 = vmatmul.bf16.gmra.mxu0 %v685
      %v800 = vpop.f32.mrf.mxu0
      %v801 = vadd.f32 0.0, %v800
      %v802 = vpop.f32.mrf.mxu0
      %v803 = vadd.f32 0.0, %v802
      %804 = vmatmul.bf16.gmra.mxu0 %v686
      %v805 = vpop.f32.mrf.mxu0
      %v806 = vadd.f32 0.0, %v805
      %v807 = vpop.f32.mrf.mxu0
      %v808 = vadd.f32 0.0, %v807
      %809 = vmatmul.bf16.gmra.mxu0 %v687
      %v810 = vpop.f32.mrf.mxu0
      %v811 = vadd.f32 0.0, %v810
      %v812 = vpop.f32.mrf.mxu0
      %v813 = vadd.f32 0.0, %v812
      %814 = vmatmul.bf16.gmra.mxu0 %v688
      %v815 = vpop.f32.mrf.mxu0
      %v816 = vadd.f32 0.0, %v815
      %v817 = vpop.f32.mrf.mxu0
      %v818 = vadd.f32 0.0, %v817
      %819 = vmatmul.bf16.gmra.mxu0 %v689
      %v820 = vpop.f32.mrf.mxu0
      %v821 = vadd.f32 0.0, %v820
      %v822 = vpop.f32.mrf.mxu0
      %v823 = vadd.f32 0.0, %v822
      %824 = vmatmul.bf16.gmra.mxu0 %v690
      %v825 = vpop.f32.mrf.mxu0
      %v826 = vadd.f32 0.0, %v825
      %v827 = vpop.f32.mrf.mxu0
      %v828 = vadd.f32 0.0, %v827
      %829 = vmatmul.bf16.gmra.mxu0 %v691
      %v830 = vpop.f32.mrf.mxu0
      %v831 = vadd.f32 0.0, %v830
      %v832 = vpop.f32.mrf.mxu0
      %v833 = vadd.f32 0.0, %v832
      %834 = vmatmul.bf16.gmra.mxu0 %v692
      %v835 = vpop.f32.mrf.mxu0
      %v836 = vadd.f32 0.0, %v835
      %v837 = vpop.f32.mrf.mxu0
      %v838 = vadd.f32 0.0, %v837
      %839 = vmatmul.bf16.gmra.mxu0 %v693
      %v840 = vpop.f32.mrf.mxu0
      %v841 = vadd.f32 0.0, %v840
      %v842 = vpop.f32.mrf.mxu0
      %v843 = vadd.f32 0.0, %v842
      %844 = vmatmul.bf16.gmra.mxu0 %v694
      %v845 = vpop.f32.mrf.mxu0
      %v846 = vadd.f32 0.0, %v845
      %v847 = vpop.f32.mrf.mxu0
      %v848 = vadd.f32 0.0, %v847
      %849 = vmatmul.bf16.gmra.mxu0 %v695
      %v850 = vpop.f32.mrf.mxu0
      %v851 = vadd.f32 0.0, %v850
      %v852 = vpop.f32.mrf.mxu0
      %v853 = vadd.f32 0.0, %v852
      %854 = vmatmul.bf16.gmra.mxu0 %v696
      %v855 = vpop.f32.mrf.mxu0
      %v856 = vadd.f32 0.0, %v855
      %v857 = vpop.f32.mrf.mxu0
      %v858 = vadd.f32 0.0, %v857
      %859 = vdwg.mxu0
      %v860 = vadd.f32 %v554, %v771
      %v861 = vadd.f32 %v556, %v773
      %v862 = vadd.f32 %v559, %v776
      %v863 = vadd.f32 %v561, %v778
      %v864 = vadd.f32 %v564, %v781
      %v865 = vadd.f32 %v566, %v783
      %v866 = vadd.f32 %v569, %v786
      %v867 = vadd.f32 %v571, %v788
      %v868 = vadd.f32 %v574, %v791
      %v869 = vadd.f32 %v576, %v793
      %v870 = vadd.f32 %v579, %v796
      %v871 = vadd.f32 %v581, %v798
      %v872 = vadd.f32 %v584, %v801
      %v873 = vadd.f32 %v586, %v803
      %v874 = vadd.f32 %v589, %v806
      %v875 = vadd.f32 %v591, %v808
      %v876 = vadd.f32 %v594, %v811
      %v877 = vadd.f32 %v596, %v813
      %v878 = vadd.f32 %v599, %v816
      %v879 = vadd.f32 %v601, %v818
      %v880 = vadd.f32 %v604, %v821
      %v881 = vadd.f32 %v606, %v823
      %v882 = vadd.f32 %v609, %v826
      %v883 = vadd.f32 %v611, %v828
      %v884 = vadd.f32 %v614, %v831
      %v885 = vadd.f32 %v616, %v833
      %v886 = vadd.f32 %v619, %v836
      %v887 = vadd.f32 %v621, %v838
      %v888 = vadd.f32 %v624, %v841
      %v889 = vadd.f32 %v626, %v843
      %v890 = vadd.f32 %v629, %v846
      %v891 = vadd.f32 %v631, %v848
      %v892 = vadd.f32 %v634, %v851
      %v893 = vadd.f32 %v636, %v853
      %v894 = vadd.f32 %v639, %v856
      %v895 = vadd.f32 %v641, %v858
      %v896 = vld [vmem:[%s199 + $0x12] sm:$0xff]
      %v897 = vld [vmem:[%s199 + $0x1a] sm:$0xff]
      %v898 = vld [vmem:[%s199 + $0x22] sm:$0xff]
      %v899 = vld [vmem:[%s199 + $0x2a] sm:$0xff]
      %v900 = vld [vmem:[%s199 + $0x32] sm:$0xff]
      %v901 = vld [vmem:[%s199 + $0x3a] sm:$0xff]
      %v902 = vld [vmem:[%s199 + $0x42] sm:$0xff]
      %v903 = vld [vmem:[%s199 + $0x4a] sm:$0xff]
      %v904 = vld [vmem:[%s199 + $0x52] sm:$0xff]
      %v905 = vld [vmem:[%s199 + $0x5a] sm:$0xff]
      %v906 = vld [vmem:[%s199 + $0x62] sm:$0xff]
      %v907 = vld [vmem:[%s199 + $0x6a] sm:$0xff]
      %v908 = vld [vmem:[%s199 + $0x72] sm:$0xff]
      %v909 = vld [vmem:[%s199 + $0x7a] sm:$0xff]
      %v910 = vld [vmem:[%s199 + $0x82] sm:$0xff]
      %v911 = vld [vmem:[%s199 + $0x8a] sm:$0xff]
      %v912 = vld [vmem:[%s199 + $0x92] sm:$0xff]
      %v913 = vld [vmem:[%s199 + $0x9a] sm:$0xff]
      %v914 = vld [vmem:[%s199 + $0xa2] sm:$0xff]
      %v915 = vld [vmem:[%s199 + $0xaa] sm:$0xff]
      %v916 = vld [vmem:[%s199 + $0xb2] sm:$0xff]
      %v917 = vld [vmem:[%s199 + $0xba] sm:$0xff]
      %v918 = vld [vmem:[%s199 + $0xc2] sm:$0xff]
      %v919 = vld [vmem:[%s199 + $0xca] sm:$0xff]
      %v920 = vld [vmem:[%s199 + $0xd2] sm:$0xff]
      %v921 = vld [vmem:[%s199 + $0xda] sm:$0xff]
      %v922 = vld [vmem:[%s199 + $0xe2] sm:$0xff]
      %v923 = vld [vmem:[%s199 + $0xea] sm:$0xff]
      %v924 = vld [vmem:[%s199 + $0xf2] sm:$0xff]
      %v925 = vld [vmem:[%s199 + $0xfa] sm:$0xff]
      %v926 = vld [vmem:[%s199 + $0x102] sm:$0xff]
      %v927 = vld [vmem:[%s199 + $0x10a] sm:$0xff]
      %v928 = vld [vmem:[%s199 + $0x112] sm:$0xff]
      %v929 = vld [vmem:[%s199 + $0x11a] sm:$0xff]
      %v930 = vld [vmem:[%s199 + $0x122] sm:$0xff]
      %v931 = vld [vmem:[%s199 + $0x12a] sm:$0xff]
      %v932 = vpack.c.bf16 %v897, %v896
      %v933 = vpack.c.bf16 %v899, %v898
      %v934 = vpack.c.bf16 %v901, %v900
      %v935 = vpack.c.bf16 %v903, %v902
      %v936 = vpack.c.bf16 %v905, %v904
      %v937 = vpack.c.bf16 %v907, %v906
      %v938 = vpack.c.bf16 %v909, %v908
      %v939 = vpack.c.bf16 %v911, %v910
      %v940 = vpack.c.bf16 %v913, %v912
      %v941 = vpack.c.bf16 %v915, %v914
      %v942 = vpack.c.bf16 %v917, %v916
      %v943 = vpack.c.bf16 %v919, %v918
      %v944 = vpack.c.bf16 %v921, %v920
      %v945 = vpack.c.bf16 %v923, %v922
      %v946 = vpack.c.bf16 %v925, %v924
      %v947 = vpack.c.bf16 %v927, %v926
      %v948 = vpack.c.bf16 %v929, %v928
      %v949 = vpack.c.bf16 %v931, %v930
      %v950 = vld [vmem:[%s1 + $0xc0] sm:$0xf]
      %v951 = vld [vmem:[%s1 + $0xc4] sm:$0xf]
      %v952 = vld [vmem:[%s1 + $0xc8] sm:$0xf]
      %v953 = vld [vmem:[%s1 + $0xcc] sm:$0xf]
      %v954 = vld [vmem:[%s1 + $0xd0] sm:$0xf]
      %v955 = vld [vmem:[%s1 + $0xd4] sm:$0xf]
      %v956 = vld [vmem:[%s1 + $0xd8] sm:$0xf]
      %v957 = vld [vmem:[%s1 + $0xdc] sm:$0xf]
      %v958 = vld [vmem:[%s1 + $0xe0] sm:$0xf]
      %v959 = vld [vmem:[%s1 + $0xe4] sm:$0xf]
      %v960 = vld [vmem:[%s1 + $0xe8] sm:$0xf]
      %v961 = vld [vmem:[%s1 + $0xec] sm:$0xf]
      %v962 = vld [vmem:[%s1 + $0xf0] sm:$0xf]
      %v963 = vld [vmem:[%s1 + $0xf4] sm:$0xf]
      %v964 = vld [vmem:[%s1 + $0xf8] sm:$0xf]
      %v965 = vld [vmem:[%s1 + $0xfc] sm:$0xf]
      %v982 = vunpack.c.l.b16 %v950
      %v983 = vunpack.c.l.b16 %v951
      %v984 = vunpack.c.l.b16 %v952
      %v985 = vunpack.c.l.b16 %v953
      %v986 = vunpack.c.l.b16 %v954
      %v987 = vunpack.c.l.b16 %v955
      %v988 = vunpack.c.l.b16 %v956
      %v989 = vunpack.c.l.b16 %v957
      %v990 = vunpack.c.l.b16 %v958
      %v991 = vunpack.c.l.b16 %v959
      %v992 = vunpack.c.l.b16 %v960
      %v993 = vunpack.c.l.b16 %v961
      %v994 = vunpack.c.l.b16 %v962
      %v995 = vunpack.c.l.b16 %v963
      %v996 = vunpack.c.l.b16 %v964
      %v997 = vunpack.c.l.b16 %v965
      %v998 = vpack.c.b16 %v983, %v982
      %v999 = vpack.c.b16 %v985, %v984
      %v1000 = vpack.c.b16 %v987, %v986
      %v1001 = vpack.c.b16 %v989, %v988
      %v1002 = vpack.c.b16 %v991, %v990
      %v1003 = vpack.c.b16 %v993, %v992
      %v1004 = vpack.c.b16 %v995, %v994
      %v1005 = vpack.c.b16 %v997, %v996
      %1014 = vmatpush.bf16.msra.mxu0 %v1005
      %1015 = vmatpush.bf16.msra.mxu0 %v1004
      %1016 = vmatpush.bf16.msra.mxu0 %v1003
      %1017 = vmatpush.bf16.msra.mxu0 %v1002
      %1018 = vmatpush.bf16.msra.mxu0 %v1001
      %1019 = vmatpush.bf16.msra.mxu0 %v1000
      %1020 = vmatpush.bf16.msra.mxu0 %v999
      %1021 = vmatpush.bf16.msra.mxu0 %v998
      %1022 = vmatmul.bf16.gmra.mxu0 %v932
      %v1023 = vpop.f32.mrf.mxu0
      %v1024 = vadd.f32 0.0, %v1023
      %v1025 = vpop.f32.mrf.mxu0
      %v1026 = vadd.f32 0.0, %v1025
      %1027 = vmatmul.bf16.gmra.mxu0 %v933
      %v1028 = vpop.f32.mrf.mxu0
      %v1029 = vadd.f32 0.0, %v1028
      %v1030 = vpop.f32.mrf.mxu0
      %v1031 = vadd.f32 0.0, %v1030
      %1032 = vmatmul.bf16.gmra.mxu0 %v934
      %v1033 = vpop.f32.mrf.mxu0
      %v1034 = vadd.f32 0.0, %v1033
      %v1035 = vpop.f32.mrf.mxu0
      %v1036 = vadd.f32 0.0, %v1035
      %1037 = vmatmul.bf16.gmra.mxu0 %v935
      %v1038 = vpop.f32.mrf.mxu0
      %v1039 = vadd.f32 0.0, %v1038
      %v1040 = vpop.f32.mrf.mxu0
      %v1041 = vadd.f32 0.0, %v1040
      %1042 = vmatmul.bf16.gmra.mxu0 %v936
      %v1043 = vpop.f32.mrf.mxu0
      %v1044 = vadd.f32 0.0, %v1043
      %v1045 = vpop.f32.mrf.mxu0
      %v1046 = vadd.f32 0.0, %v1045
      %1047 = vmatmul.bf16.gmra.mxu0 %v937
      %v1048 = vpop.f32.mrf.mxu0
      %v1049 = vadd.f32 0.0, %v1048
      %v1050 = vpop.f32.mrf.mxu0
      %v1051 = vadd.f32 0.0, %v1050
      %1052 = vmatmul.bf16.gmra.mxu0 %v938
      %v1053 = vpop.f32.mrf.mxu0
      %v1054 = vadd.f32 0.0, %v1053
      %v1055 = vpop.f32.mrf.mxu0
      %v1056 = vadd.f32 0.0, %v1055
      %1057 = vmatmul.bf16.gmra.mxu0 %v939
      %v1058 = vpop.f32.mrf.mxu0
      %v1059 = vadd.f32 0.0, %v1058
      %v1060 = vpop.f32.mrf.mxu0
      %v1061 = vadd.f32 0.0, %v1060
      %1062 = vmatmul.bf16.gmra.mxu0 %v940
      %v1063 = vpop.f32.mrf.mxu0
      %v1064 = vadd.f32 0.0, %v1063
      %v1065 = vpop.f32.mrf.mxu0
      %v1066 = vadd.f32 0.0, %v1065
      %1067 = vmatmul.bf16.gmra.mxu0 %v941
      %v1068 = vpop.f32.mrf.mxu0
      %v1069 = vadd.f32 0.0, %v1068
      %v1070 = vpop.f32.mrf.mxu0
      %v1071 = vadd.f32 0.0, %v1070
      %1072 = vmatmul.bf16.gmra.mxu0 %v942
      %v1073 = vpop.f32.mrf.mxu0
      %v1074 = vadd.f32 0.0, %v1073
      %v1075 = vpop.f32.mrf.mxu0
      %v1076 = vadd.f32 0.0, %v1075
      %1077 = vmatmul.bf16.gmra.mxu0 %v943
      %v1078 = vpop.f32.mrf.mxu0
      %v1079 = vadd.f32 0.0, %v1078
      %v1080 = vpop.f32.mrf.mxu0
      %v1081 = vadd.f32 0.0, %v1080
      %1082 = vmatmul.bf16.gmra.mxu0 %v944
      %v1083 = vpop.f32.mrf.mxu0
      %v1084 = vadd.f32 0.0, %v1083
      %v1085 = vpop.f32.mrf.mxu0
      %v1086 = vadd.f32 0.0, %v1085
      %1087 = vmatmul.bf16.gmra.mxu0 %v945
      %v1088 = vpop.f32.mrf.mxu0
      %v1089 = vadd.f32 0.0, %v1088
      %v1090 = vpop.f32.mrf.mxu0
      %v1091 = vadd.f32 0.0, %v1090
      %1092 = vmatmul.bf16.gmra.mxu0 %v946
      %v1093 = vpop.f32.mrf.mxu0
      %v1094 = vadd.f32 0.0, %v1093
      %v1095 = vpop.f32.mrf.mxu0
      %v1096 = vadd.f32 0.0, %v1095
      %1097 = vmatmul.bf16.gmra.mxu0 %v947
      %v1098 = vpop.f32.mrf.mxu0
      %v1099 = vadd.f32 0.0, %v1098
      %v1100 = vpop.f32.mrf.mxu0
      %v1101 = vadd.f32 0.0, %v1100
      %1102 = vmatmul.bf16.gmra.mxu0 %v948
      %v1103 = vpop.f32.mrf.mxu0
      %v1104 = vadd.f32 0.0, %v1103
      %v1105 = vpop.f32.mrf.mxu0
      %v1106 = vadd.f32 0.0, %v1105
      %1107 = vmatmul.bf16.gmra.mxu0 %v949
      %v1108 = vpop.f32.mrf.mxu0
      %v1109 = vadd.f32 0.0, %v1108
      %v1110 = vpop.f32.mrf.mxu0
      %v1111 = vadd.f32 0.0, %v1110
      %1112 = vdwg.mxu0
      %v1113 = vadd.f32 %v860, %v1024
      %v1114 = vadd.f32 %v861, %v1026
      %v1115 = vadd.f32 %v862, %v1029
      %v1116 = vadd.f32 %v863, %v1031
      %v1117 = vadd.f32 %v864, %v1034
      %v1118 = vadd.f32 %v865, %v1036
      %v1119 = vadd.f32 %v866, %v1039
      %v1120 = vadd.f32 %v867, %v1041
      %v1121 = vadd.f32 %v868, %v1044
      %v1122 = vadd.f32 %v869, %v1046
      %v1123 = vadd.f32 %v870, %v1049
      %v1124 = vadd.f32 %v871, %v1051
      %v1125 = vadd.f32 %v872, %v1054
      %v1126 = vadd.f32 %v873, %v1056
      %v1127 = vadd.f32 %v874, %v1059
      %v1128 = vadd.f32 %v875, %v1061
      %v1129 = vadd.f32 %v876, %v1064
      %v1130 = vadd.f32 %v877, %v1066
      %v1131 = vadd.f32 %v878, %v1069
      %v1132 = vadd.f32 %v879, %v1071
      %v1133 = vadd.f32 %v880, %v1074
      %v1134 = vadd.f32 %v881, %v1076
      %v1135 = vadd.f32 %v882, %v1079
      %v1136 = vadd.f32 %v883, %v1081
      %v1137 = vadd.f32 %v884, %v1084
      %v1138 = vadd.f32 %v885, %v1086
      %v1139 = vadd.f32 %v886, %v1089
      %v1140 = vadd.f32 %v887, %v1091
      %v1141 = vadd.f32 %v888, %v1094
      %v1142 = vadd.f32 %v889, %v1096
      %v1143 = vadd.f32 %v890, %v1099
      %v1144 = vadd.f32 %v891, %v1101
      %v1145 = vadd.f32 %v892, %v1104
      %v1146 = vadd.f32 %v893, %v1106
      %v1147 = vadd.f32 %v894, %v1109
      %v1148 = vadd.f32 %v895, %v1111
      %v1149 = vld [vmem:[%s199 + $0x13] sm:$0xff]
      %v1150 = vld [vmem:[%s199 + $0x1b] sm:$0xff]
      %v1151 = vld [vmem:[%s199 + $0x23] sm:$0xff]
      %v1152 = vld [vmem:[%s199 + $0x2b] sm:$0xff]
      %v1153 = vld [vmem:[%s199 + $0x33] sm:$0xff]
      %v1154 = vld [vmem:[%s199 + $0x3b] sm:$0xff]
      %v1155 = vld [vmem:[%s199 + $0x43] sm:$0xff]
      %v1156 = vld [vmem:[%s199 + $0x4b] sm:$0xff]
      %v1157 = vld [vmem:[%s199 + $0x53] sm:$0xff]
      %v1158 = vld [vmem:[%s199 + $0x5b] sm:$0xff]
      %v1159 = vld [vmem:[%s199 + $0x63] sm:$0xff]
      %v1160 = vld [vmem:[%s199 + $0x6b] sm:$0xff]
      %v1161 = vld [vmem:[%s199 + $0x73] sm:$0xff]
      %v1162 = vld [vmem:[%s199 + $0x7b] sm:$0xff]
      %v1163 = vld [vmem:[%s199 + $0x83] sm:$0xff]
      %v1164 = vld [vmem:[%s199 + $0x8b] sm:$0xff]
      %v1165 = vld [vmem:[%s199 + $0x93] sm:$0xff]
      %v1166 = vld [vmem:[%s199 + $0x9b] sm:$0xff]
      %v1167 = vld [vmem:[%s199 + $0xa3] sm:$0xff]
      %v1168 = vld [vmem:[%s199 + $0xab] sm:$0xff]
      %v1169 = vld [vmem:[%s199 + $0xb3] sm:$0xff]
      %v1170 = vld [vmem:[%s199 + $0xbb] sm:$0xff]
      %v1171 = vld [vmem:[%s199 + $0xc3] sm:$0xff]
      %v1172 = vld [vmem:[%s199 + $0xcb] sm:$0xff]
      %v1173 = vld [vmem:[%s199 + $0xd3] sm:$0xff]
      %v1174 = vld [vmem:[%s199 + $0xdb] sm:$0xff]
      %v1175 = vld [vmem:[%s199 + $0xe3] sm:$0xff]
      %v1176 = vld [vmem:[%s199 + $0xeb] sm:$0xff]
      %v1177 = vld [vmem:[%s199 + $0xf3] sm:$0xff]
      %v1178 = vld [vmem:[%s199 + $0xfb] sm:$0xff]
      %v1179 = vld [vmem:[%s199 + $0x103] sm:$0xff]
      %v1180 = vld [vmem:[%s199 + $0x10b] sm:$0xff]
      %v1181 = vld [vmem:[%s199 + $0x113] sm:$0xff]
      %v1182 = vld [vmem:[%s199 + $0x11b] sm:$0xff]
      %v1183 = vld [vmem:[%s199 + $0x123] sm:$0xff]
      %v1184 = vld [vmem:[%s199 + $0x12b] sm:$0xff]
      %v1185 = vpack.c.bf16 %v1150, %v1149
      %v1186 = vpack.c.bf16 %v1152, %v1151
      %v1187 = vpack.c.bf16 %v1154, %v1153
      %v1188 = vpack.c.bf16 %v1156, %v1155
      %v1189 = vpack.c.bf16 %v1158, %v1157
      %v1190 = vpack.c.bf16 %v1160, %v1159
      %v1191 = vpack.c.bf16 %v1162, %v1161
      %v1192 = vpack.c.bf16 %v1164, %v1163
      %v1193 = vpack.c.bf16 %v1166, %v1165
      %v1194 = vpack.c.bf16 %v1168, %v1167
      %v1195 = vpack.c.bf16 %v1170, %v1169
      %v1196 = vpack.c.bf16 %v1172, %v1171
      %v1197 = vpack.c.bf16 %v1174, %v1173
      %v1198 = vpack.c.bf16 %v1176, %v1175
      %v1199 = vpack.c.bf16 %v1178, %v1177
      %v1200 = vpack.c.bf16 %v1180, %v1179
      %v1201 = vpack.c.bf16 %v1182, %v1181
      %v1202 = vpack.c.bf16 %v1184, %v1183
      %v1203 = vld [vmem:[%s1 + $0x100] sm:$0xf]
      %v1204 = vld [vmem:[%s1 + $0x104] sm:$0xf]
      %v1205 = vld [vmem:[%s1 + $0x108] sm:$0xf]
      %v1206 = vld [vmem:[%s1 + $0x10c] sm:$0xf]
      %v1207 = vld [vmem:[%s1 + $0x110] sm:$0xf]
      %v1208 = vld [vmem:[%s1 + $0x114] sm:$0xf]
      %v1209 = vld [vmem:[%s1 + $0x118] sm:$0xf]
      %v1210 = vld [vmem:[%s1 + $0x11c] sm:$0xf]
      %v1211 = vld [vmem:[%s1 + $0x120] sm:$0xf]
      %v1212 = vld [vmem:[%s1 + $0x124] sm:$0xf]
      %v1213 = vld [vmem:[%s1 + $0x128] sm:$0xf]
      %v1214 = vld [vmem:[%s1 + $0x12c] sm:$0xf]
      %v1215 = vld [vmem:[%s1 + $0x130] sm:$0xf]
      %v1216 = vld [vmem:[%s1 + $0x134] sm:$0xf]
      %v1217 = vld [vmem:[%s1 + $0x138] sm:$0xf]
      %v1218 = vld [vmem:[%s1 + $0x13c] sm:$0xf]
      %v1235 = vunpack.c.l.b16 %v1203
      %v1236 = vunpack.c.l.b16 %v1204
      %v1237 = vunpack.c.l.b16 %v1205
      %v1238 = vunpack.c.l.b16 %v1206
      %v1239 = vunpack.c.l.b16 %v1207
      %v1240 = vunpack.c.l.b16 %v1208
      %v1241 = vunpack.c.l.b16 %v1209
      %v1242 = vunpack.c.l.b16 %v1210
      %v1243 = vunpack.c.l.b16 %v1211
      %v1244 = vunpack.c.l.b16 %v1212
      %v1245 = vunpack.c.l.b16 %v1213
      %v1246 = vunpack.c.l.b16 %v1214
      %v1247 = vunpack.c.l.b16 %v1215
      %v1248 = vunpack.c.l.b16 %v1216
      %v1249 = vunpack.c.l.b16 %v1217
      %v1250 = vunpack.c.l.b16 %v1218
      %v1251 = vpack.c.b16 %v1236, %v1235
      %v1252 = vpack.c.b16 %v1238, %v1237
      %v1253 = vpack.c.b16 %v1240, %v1239
      %v1254 = vpack.c.b16 %v1242, %v1241
      %v1255 = vpack.c.b16 %v1244, %v1243
      %v1256 = vpack.c.b16 %v1246, %v1245
      %v1257 = vpack.c.b16 %v1248, %v1247
      %v1258 = vpack.c.b16 %v1250, %v1249
      %1267 = vmatpush.bf16.msra.mxu0 %v1258
      %1268 = vmatpush.bf16.msra.mxu0 %v1257
      %1269 = vmatpush.bf16.msra.mxu0 %v1256
      %1270 = vmatpush.bf16.msra.mxu0 %v1255
      %1271 = vmatpush.bf16.msra.mxu0 %v1254
      %1272 = vmatpush.bf16.msra.mxu0 %v1253
      %1273 = vmatpush.bf16.msra.mxu0 %v1252
      %1274 = vmatpush.bf16.msra.mxu0 %v1251
      %1275 = vmatmul.bf16.gmra.mxu0 %v1185
      %v1276 = vpop.f32.mrf.mxu0
      %v1277 = vadd.f32 0.0, %v1276
      %v1278 = vpop.f32.mrf.mxu0
      %v1279 = vadd.f32 0.0, %v1278
      %1280 = vmatmul.bf16.gmra.mxu0 %v1186
      %v1281 = vpop.f32.mrf.mxu0
      %v1282 = vadd.f32 0.0, %v1281
      %v1283 = vpop.f32.mrf.mxu0
      %v1284 = vadd.f32 0.0, %v1283
      %1285 = vmatmul.bf16.gmra.mxu0 %v1187
      %v1286 = vpop.f32.mrf.mxu0
      %v1287 = vadd.f32 0.0, %v1286
      %v1288 = vpop.f32.mrf.mxu0
      %v1289 = vadd.f32 0.0, %v1288
      %1290 = vmatmul.bf16.gmra.mxu0 %v1188
      %v1291 = vpop.f32.mrf.mxu0
      %v1292 = vadd.f32 0.0, %v1291
      %v1293 = vpop.f32.mrf.mxu0
      %v1294 = vadd.f32 0.0, %v1293
      %1295 = vmatmul.bf16.gmra.mxu0 %v1189
      %v1296 = vpop.f32.mrf.mxu0
      %v1297 = vadd.f32 0.0, %v1296
      %v1298 = vpop.f32.mrf.mxu0
      %v1299 = vadd.f32 0.0, %v1298
      %1300 = vmatmul.bf16.gmra.mxu0 %v1190
      %v1301 = vpop.f32.mrf.mxu0
      %v1302 = vadd.f32 0.0, %v1301
      %v1303 = vpop.f32.mrf.mxu0
      %v1304 = vadd.f32 0.0, %v1303
      %1305 = vmatmul.bf16.gmra.mxu0 %v1191
      %v1306 = vpop.f32.mrf.mxu0
      %v1307 = vadd.f32 0.0, %v1306
      %v1308 = vpop.f32.mrf.mxu0
      %v1309 = vadd.f32 0.0, %v1308
      %1310 = vmatmul.bf16.gmra.mxu0 %v1192
      %v1311 = vpop.f32.mrf.mxu0
      %v1312 = vadd.f32 0.0, %v1311
      %v1313 = vpop.f32.mrf.mxu0
      %v1314 = vadd.f32 0.0, %v1313
      %1315 = vmatmul.bf16.gmra.mxu0 %v1193
      %v1316 = vpop.f32.mrf.mxu0
      %v1317 = vadd.f32 0.0, %v1316
      %v1318 = vpop.f32.mrf.mxu0
      %v1319 = vadd.f32 0.0, %v1318
      %1320 = vmatmul.bf16.gmra.mxu0 %v1194
      %v1321 = vpop.f32.mrf.mxu0
      %v1322 = vadd.f32 0.0, %v1321
      %v1323 = vpop.f32.mrf.mxu0
      %v1324 = vadd.f32 0.0, %v1323
      %1325 = vmatmul.bf16.gmra.mxu0 %v1195
      %v1326 = vpop.f32.mrf.mxu0
      %v1327 = vadd.f32 0.0, %v1326
      %v1328 = vpop.f32.mrf.mxu0
      %v1329 = vadd.f32 0.0, %v1328
      %1330 = vmatmul.bf16.gmra.mxu0 %v1196
      %v1331 = vpop.f32.mrf.mxu0
      %v1332 = vadd.f32 0.0, %v1331
      %v1333 = vpop.f32.mrf.mxu0
      %v1334 = vadd.f32 0.0, %v1333
      %1335 = vmatmul.bf16.gmra.mxu0 %v1197
      %v1336 = vpop.f32.mrf.mxu0
      %v1337 = vadd.f32 0.0, %v1336
      %v1338 = vpop.f32.mrf.mxu0
      %v1339 = vadd.f32 0.0, %v1338
      %1340 = vmatmul.bf16.gmra.mxu0 %v1198
      %v1341 = vpop.f32.mrf.mxu0
      %v1342 = vadd.f32 0.0, %v1341
      %v1343 = vpop.f32.mrf.mxu0
      %v1344 = vadd.f32 0.0, %v1343
      %1345 = vmatmul.bf16.gmra.mxu0 %v1199
      %v1346 = vpop.f32.mrf.mxu0
      %v1347 = vadd.f32 0.0, %v1346
      %v1348 = vpop.f32.mrf.mxu0
      %v1349 = vadd.f32 0.0, %v1348
      %1350 = vmatmul.bf16.gmra.mxu0 %v1200
      %v1351 = vpop.f32.mrf.mxu0
      %v1352 = vadd.f32 0.0, %v1351
      %v1353 = vpop.f32.mrf.mxu0
      %v1354 = vadd.f32 0.0, %v1353
      %1355 = vmatmul.bf16.gmra.mxu0 %v1201
      %v1356 = vpop.f32.mrf.mxu0
      %v1357 = vadd.f32 0.0, %v1356
      %v1358 = vpop.f32.mrf.mxu0
      %v1359 = vadd.f32 0.0, %v1358
      %1360 = vmatmul.bf16.gmra.mxu0 %v1202
      %v1361 = vpop.f32.mrf.mxu0
      %v1362 = vadd.f32 0.0, %v1361
      %v1363 = vpop.f32.mrf.mxu0
      %v1364 = vadd.f32 0.0, %v1363
      %1365 = vdwg.mxu0
      %v1366 = vadd.f32 %v1113, %v1277
      %v1367 = vadd.f32 %v1114, %v1279
      %v1368 = vadd.f32 %v1115, %v1282
      %v1369 = vadd.f32 %v1116, %v1284
      %v1370 = vadd.f32 %v1117, %v1287
      %v1371 = vadd.f32 %v1118, %v1289
      %v1372 = vadd.f32 %v1119, %v1292
      %v1373 = vadd.f32 %v1120, %v1294
      %v1374 = vadd.f32 %v1121, %v1297
      %v1375 = vadd.f32 %v1122, %v1299
      %v1376 = vadd.f32 %v1123, %v1302
      %v1377 = vadd.f32 %v1124, %v1304
      %v1378 = vadd.f32 %v1125, %v1307
      %v1379 = vadd.f32 %v1126, %v1309
      %v1380 = vadd.f32 %v1127, %v1312
      %v1381 = vadd.f32 %v1128, %v1314
      %v1382 = vadd.f32 %v1129, %v1317
      %v1383 = vadd.f32 %v1130, %v1319
      %v1384 = vadd.f32 %v1131, %v1322
      %v1385 = vadd.f32 %v1132, %v1324
      %v1386 = vadd.f32 %v1133, %v1327
      %v1387 = vadd.f32 %v1134, %v1329
      %v1388 = vadd.f32 %v1135, %v1332
      %v1389 = vadd.f32 %v1136, %v1334
      %v1390 = vadd.f32 %v1137, %v1337
      %v1391 = vadd.f32 %v1138, %v1339
      %v1392 = vadd.f32 %v1139, %v1342
      %v1393 = vadd.f32 %v1140, %v1344
      %v1394 = vadd.f32 %v1141, %v1347
      %v1395 = vadd.f32 %v1142, %v1349
      %v1396 = vadd.f32 %v1143, %v1352
      %v1397 = vadd.f32 %v1144, %v1354
      %v1398 = vadd.f32 %v1145, %v1357
      %v1399 = vadd.f32 %v1146, %v1359
      %v1400 = vadd.f32 %v1147, %v1362
      %v1401 = vadd.f32 %v1148, %v1364
      %v1402 = vld [vmem:[%s199 + $0x14] sm:$0xff]
      %v1403 = vld [vmem:[%s199 + $0x1c] sm:$0xff]
      %v1404 = vld [vmem:[%s199 + $0x24] sm:$0xff]
      %v1405 = vld [vmem:[%s199 + $0x2c] sm:$0xff]
      %v1406 = vld [vmem:[%s199 + $0x34] sm:$0xff]
      %v1407 = vld [vmem:[%s199 + $0x3c] sm:$0xff]
      %v1408 = vld [vmem:[%s199 + $0x44] sm:$0xff]
      %v1409 = vld [vmem:[%s199 + $0x4c] sm:$0xff]
      %v1410 = vld [vmem:[%s199 + $0x54] sm:$0xff]
      %v1411 = vld [vmem:[%s199 + $0x5c] sm:$0xff]
      %v1412 = vld [vmem:[%s199 + $0x64] sm:$0xff]
      %v1413 = vld [vmem:[%s199 + $0x6c] sm:$0xff]
      %v1414 = vld [vmem:[%s199 + $0x74] sm:$0xff]
      %v1415 = vld [vmem:[%s199 + $0x7c] sm:$0xff]
      %v1416 = vld [vmem:[%s199 + $0x84] sm:$0xff]
      %v1417 = vld [vmem:[%s199 + $0x8c] sm:$0xff]
      %v1418 = vld [vmem:[%s199 + $0x94] sm:$0xff]
      %v1419 = vld [vmem:[%s199 + $0x9c] sm:$0xff]
      %v1420 = vld [vmem:[%s199 + $0xa4] sm:$0xff]
      %v1421 = vld [vmem:[%s199 + $0xac] sm:$0xff]
      %v1422 = vld [vmem:[%s199 + $0xb4] sm:$0xff]
      %v1423 = vld [vmem:[%s199 + $0xbc] sm:$0xff]
      %v1424 = vld [vmem:[%s199 + $0xc4] sm:$0xff]
      %v1425 = vld [vmem:[%s199 + $0xcc] sm:$0xff]
      %v1426 = vld [vmem:[%s199 + $0xd4] sm:$0xff]
      %v1427 = vld [vmem:[%s199 + $0xdc] sm:$0xff]
      %v1428 = vld [vmem:[%s199 + $0xe4] sm:$0xff]
      %v1429 = vld [vmem:[%s199 + $0xec] sm:$0xff]
      %v1430 = vld [vmem:[%s199 + $0xf4] sm:$0xff]
      %v1431 = vld [vmem:[%s199 + $0xfc] sm:$0xff]
      %v1432 = vld [vmem:[%s199 + $0x104] sm:$0xff]
      %v1433 = vld [vmem:[%s199 + $0x10c] sm:$0xff]
      %v1434 = vld [vmem:[%s199 + $0x114] sm:$0xff]
      %v1435 = vld [vmem:[%s199 + $0x11c] sm:$0xff]
      %v1436 = vld [vmem:[%s199 + $0x124] sm:$0xff]
      %v1437 = vld [vmem:[%s199 + $0x12c] sm:$0xff]
      %v1438 = vpack.c.bf16 %v1403, %v1402
      %v1439 = vpack.c.bf16 %v1405, %v1404
      %v1440 = vpack.c.bf16 %v1407, %v1406
      %v1441 = vpack.c.bf16 %v1409, %v1408
      %v1442 = vpack.c.bf16 %v1411, %v1410
      %v1443 = vpack.c.bf16 %v1413, %v1412
      %v1444 = vpack.c.bf16 %v1415, %v1414
      %v1445 = vpack.c.bf16 %v1417, %v1416
      %v1446 = vpack.c.bf16 %v1419, %v1418
      %v1447 = vpack.c.bf16 %v1421, %v1420
      %v1448 = vpack.c.bf16 %v1423, %v1422
      %v1449 = vpack.c.bf16 %v1425, %v1424
      %v1450 = vpack.c.bf16 %v1427, %v1426
      %v1451 = vpack.c.bf16 %v1429, %v1428
      %v1452 = vpack.c.bf16 %v1431, %v1430
      %v1453 = vpack.c.bf16 %v1433, %v1432
      %v1454 = vpack.c.bf16 %v1435, %v1434
      %v1455 = vpack.c.bf16 %v1437, %v1436
      %v1456 = vld [vmem:[%s1 + $0x140] sm:$0xf]
      %v1457 = vld [vmem:[%s1 + $0x144] sm:$0xf]
      %v1458 = vld [vmem:[%s1 + $0x148] sm:$0xf]
      %v1459 = vld [vmem:[%s1 + $0x14c] sm:$0xf]
      %v1460 = vld [vmem:[%s1 + $0x150] sm:$0xf]
      %v1461 = vld [vmem:[%s1 + $0x154] sm:$0xf]
      %v1462 = vld [vmem:[%s1 + $0x158] sm:$0xf]
      %v1463 = vld [vmem:[%s1 + $0x15c] sm:$0xf]
      %v1464 = vld [vmem:[%s1 + $0x160] sm:$0xf]
      %v1465 = vld [vmem:[%s1 + $0x164] sm:$0xf]
      %v1466 = vld [vmem:[%s1 + $0x168] sm:$0xf]
      %v1467 = vld [vmem:[%s1 + $0x16c] sm:$0xf]
      %v1468 = vld [vmem:[%s1 + $0x170] sm:$0xf]
      %v1469 = vld [vmem:[%s1 + $0x174] sm:$0xf]
      %v1470 = vld [vmem:[%s1 + $0x178] sm:$0xf]
      %v1471 = vld [vmem:[%s1 + $0x17c] sm:$0xf]
      %v1488 = vunpack.c.l.b16 %v1456
      %v1489 = vunpack.c.l.b16 %v1457
      %v1490 = vunpack.c.l.b16 %v1458
      %v1491 = vunpack.c.l.b16 %v1459
      %v1492 = vunpack.c.l.b16 %v1460
      %v1493 = vunpack.c.l.b16 %v1461
      %v1494 = vunpack.c.l.b16 %v1462
      %v1495 = vunpack.c.l.b16 %v1463
      %v1496 = vunpack.c.l.b16 %v1464
      %v1497 = vunpack.c.l.b16 %v1465
      %v1498 = vunpack.c.l.b16 %v1466
      %v1499 = vunpack.c.l.b16 %v1467
      %v1500 = vunpack.c.l.b16 %v1468
      %v1501 = vunpack.c.l.b16 %v1469
      %v1502 = vunpack.c.l.b16 %v1470
      %v1503 = vunpack.c.l.b16 %v1471
      %v1504 = vpack.c.b16 %v1489, %v1488
      %v1505 = vpack.c.b16 %v1491, %v1490
      %v1506 = vpack.c.b16 %v1493, %v1492
      %v1507 = vpack.c.b16 %v1495, %v1494
      %v1508 = vpack.c.b16 %v1497, %v1496
      %v1509 = vpack.c.b16 %v1499, %v1498
      %v1510 = vpack.c.b16 %v1501, %v1500
      %v1511 = vpack.c.b16 %v1503, %v1502
      %1520 = vmatpush.bf16.msra.mxu0 %v1511
      %1521 = vmatpush.bf16.msra.mxu0 %v1510
      %1522 = vmatpush.bf16.msra.mxu0 %v1509
      %1523 = vmatpush.bf16.msra.mxu0 %v1508
      %1524 = vmatpush.bf16.msra.mxu0 %v1507
      %1525 = vmatpush.bf16.msra.mxu0 %v1506
      %1526 = vmatpush.bf16.msra.mxu0 %v1505
      %1527 = vmatpush.bf16.msra.mxu0 %v1504
      %1528 = vmatmul.bf16.gmra.mxu0 %v1438
      %v1529 = vpop.f32.mrf.mxu0
      %v1530 = vadd.f32 0.0, %v1529
      %v1531 = vpop.f32.mrf.mxu0
      %v1532 = vadd.f32 0.0, %v1531
      %1533 = vmatmul.bf16.gmra.mxu0 %v1439
      %v1534 = vpop.f32.mrf.mxu0
      %v1535 = vadd.f32 0.0, %v1534
      %v1536 = vpop.f32.mrf.mxu0
      %v1537 = vadd.f32 0.0, %v1536
      %1538 = vmatmul.bf16.gmra.mxu0 %v1440
      %v1539 = vpop.f32.mrf.mxu0
      %v1540 = vadd.f32 0.0, %v1539
      %v1541 = vpop.f32.mrf.mxu0
      %v1542 = vadd.f32 0.0, %v1541
      %1543 = vmatmul.bf16.gmra.mxu0 %v1441
      %v1544 = vpop.f32.mrf.mxu0
      %v1545 = vadd.f32 0.0, %v1544
      %v1546 = vpop.f32.mrf.mxu0
      %v1547 = vadd.f32 0.0, %v1546
      %1548 = vmatmul.bf16.gmra.mxu0 %v1442
      %v1549 = vpop.f32.mrf.mxu0
      %v1550 = vadd.f32 0.0, %v1549
      %v1551 = vpop.f32.mrf.mxu0
      %v1552 = vadd.f32 0.0, %v1551
      %1553 = vmatmul.bf16.gmra.mxu0 %v1443
      %v1554 = vpop.f32.mrf.mxu0
      %v1555 = vadd.f32 0.0, %v1554
      %v1556 = vpop.f32.mrf.mxu0
      %v1557 = vadd.f32 0.0, %v1556
      %1558 = vmatmul.bf16.gmra.mxu0 %v1444
      %v1559 = vpop.f32.mrf.mxu0
      %v1560 = vadd.f32 0.0, %v1559
      %v1561 = vpop.f32.mrf.mxu0
      %v1562 = vadd.f32 0.0, %v1561
      %1563 = vmatmul.bf16.gmra.mxu0 %v1445
      %v1564 = vpop.f32.mrf.mxu0
      %v1565 = vadd.f32 0.0, %v1564
      %v1566 = vpop.f32.mrf.mxu0
      %v1567 = vadd.f32 0.0, %v1566
      %1568 = vmatmul.bf16.gmra.mxu0 %v1446
      %v1569 = vpop.f32.mrf.mxu0
      %v1570 = vadd.f32 0.0, %v1569
      %v1571 = vpop.f32.mrf.mxu0
      %v1572 = vadd.f32 0.0, %v1571
      %1573 = vmatmul.bf16.gmra.mxu0 %v1447
      %v1574 = vpop.f32.mrf.mxu0
      %v1575 = vadd.f32 0.0, %v1574
      %v1576 = vpop.f32.mrf.mxu0
      %v1577 = vadd.f32 0.0, %v1576
      %1578 = vmatmul.bf16.gmra.mxu0 %v1448
      %v1579 = vpop.f32.mrf.mxu0
      %v1580 = vadd.f32 0.0, %v1579
      %v1581 = vpop.f32.mrf.mxu0
      %v1582 = vadd.f32 0.0, %v1581
      %1583 = vmatmul.bf16.gmra.mxu0 %v1449
      %v1584 = vpop.f32.mrf.mxu0
      %v1585 = vadd.f32 0.0, %v1584
      %v1586 = vpop.f32.mrf.mxu0
      %v1587 = vadd.f32 0.0, %v1586
      %1588 = vmatmul.bf16.gmra.mxu0 %v1450
      %v1589 = vpop.f32.mrf.mxu0
      %v1590 = vadd.f32 0.0, %v1589
      %v1591 = vpop.f32.mrf.mxu0
      %v1592 = vadd.f32 0.0, %v1591
      %1593 = vmatmul.bf16.gmra.mxu0 %v1451
      %v1594 = vpop.f32.mrf.mxu0
      %v1595 = vadd.f32 0.0, %v1594
      %v1596 = vpop.f32.mrf.mxu0
      %v1597 = vadd.f32 0.0, %v1596
      %1598 = vmatmul.bf16.gmra.mxu0 %v1452
      %v1599 = vpop.f32.mrf.mxu0
      %v1600 = vadd.f32 0.0, %v1599
      %v1601 = vpop.f32.mrf.mxu0
      %v1602 = vadd.f32 0.0, %v1601
      %1603 = vmatmul.bf16.gmra.mxu0 %v1453
      %v1604 = vpop.f32.mrf.mxu0
      %v1605 = vadd.f32 0.0, %v1604
      %v1606 = vpop.f32.mrf.mxu0
      %v1607 = vadd.f32 0.0, %v1606
      %1608 = vmatmul.bf16.gmra.mxu0 %v1454
      %v1609 = vpop.f32.mrf.mxu0
      %v1610 = vadd.f32 0.0, %v1609
      %v1611 = vpop.f32.mrf.mxu0
      %v1612 = vadd.f32 0.0, %v1611
      %1613 = vmatmul.bf16.gmra.mxu0 %v1455
      %v1614 = vpop.f32.mrf.mxu0
      %v1615 = vadd.f32 0.0, %v1614
      %v1616 = vpop.f32.mrf.mxu0
      %v1617 = vadd.f32 0.0, %v1616
      %1618 = vdwg.mxu0
      %v1619 = vadd.f32 %v1366, %v1530
      %v1620 = vadd.f32 %v1367, %v1532
      %v1621 = vadd.f32 %v1368, %v1535
      %v1622 = vadd.f32 %v1369, %v1537
      %v1623 = vadd.f32 %v1370, %v1540
      %v1624 = vadd.f32 %v1371, %v1542
      %v1625 = vadd.f32 %v1372, %v1545
      %v1626 = vadd.f32 %v1373, %v1547
      %v1627 = vadd.f32 %v1374, %v1550
      %v1628 = vadd.f32 %v1375, %v1552
      %v1629 = vadd.f32 %v1376, %v1555
      %v1630 = vadd.f32 %v1377, %v1557
      %v1631 = vadd.f32 %v1378, %v1560
      %v1632 = vadd.f32 %v1379, %v1562
      %v1633 = vadd.f32 %v1380, %v1565
      %v1634 = vadd.f32 %v1381, %v1567
      %v1635 = vadd.f32 %v1382, %v1570
      %v1636 = vadd.f32 %v1383, %v1572
      %v1637 = vadd.f32 %v1384, %v1575
      %v1638 = vadd.f32 %v1385, %v1577
      %v1639 = vadd.f32 %v1386, %v1580
      %v1640 = vadd.f32 %v1387, %v1582
      %v1641 = vadd.f32 %v1388, %v1585
      %v1642 = vadd.f32 %v1389, %v1587
      %v1643 = vadd.f32 %v1390, %v1590
      %v1644 = vadd.f32 %v1391, %v1592
      %v1645 = vadd.f32 %v1392, %v1595
      %v1646 = vadd.f32 %v1393, %v1597
      %v1647 = vadd.f32 %v1394, %v1600
      %v1648 = vadd.f32 %v1395, %v1602
      %v1649 = vadd.f32 %v1396, %v1605
      %v1650 = vadd.f32 %v1397, %v1607
      %v1651 = vadd.f32 %v1398, %v1610
      %v1652 = vadd.f32 %v1399, %v1612
      %v1653 = vadd.f32 %v1400, %v1615
      %v1654 = vadd.f32 %v1401, %v1617
      %v1655 = vld [vmem:[%s199 + $0x24] sm:$0xff]
      %v1656 = vld [vmem:[%s199 + $0x2c] sm:$0xff]
      %v1657 = vld [vmem:[%s199 + $0x34] sm:$0xff]
      %v1658 = vld [vmem:[%s199 + $0x3c] sm:$0xff]
      %v1659 = vld [vmem:[%s199 + $0x44] sm:$0xff]
      %v1660 = vld [vmem:[%s199 + $0x4c] sm:$0xff]
      %v1661 = vld [vmem:[%s199 + $0x54] sm:$0xff]
      %v1662 = vld [vmem:[%s199 + $0x5c] sm:$0xff]
      %v1663 = vld [vmem:[%s199 + $0x64] sm:$0xff]
      %v1664 = vld [vmem:[%s199 + $0x6c] sm:$0xff]
      %v1665 = vld [vmem:[%s199 + $0x74] sm:$0xff]
      %v1666 = vld [vmem:[%s199 + $0x7c] sm:$0xff]
      %v1667 = vld [vmem:[%s199 + $0x84] sm:$0xff]
      %v1668 = vld [vmem:[%s199 + $0x8c] sm:$0xff]
      %v1669 = vld [vmem:[%s199 + $0x94] sm:$0xff]
      %v1670 = vld [vmem:[%s199 + $0x9c] sm:$0xff]
      %v1671 = vld [vmem:[%s199 + $0xa4] sm:$0xff]
      %v1672 = vld [vmem:[%s199 + $0xac] sm:$0xff]
      %v1673 = vld [vmem:[%s199 + $0xb4] sm:$0xff]
      %v1674 = vld [vmem:[%s199 + $0xbc] sm:$0xff]
      %v1675 = vld [vmem:[%s199 + $0xc4] sm:$0xff]
      %v1676 = vld [vmem:[%s199 + $0xcc] sm:$0xff]
      %v1677 = vld [vmem:[%s199 + $0xd4] sm:$0xff]
      %v1678 = vld [vmem:[%s199 + $0xdc] sm:$0xff]
      %v1679 = vld [vmem:[%s199 + $0xe4] sm:$0xff]
      %v1680 = vld [vmem:[%s199 + $0xec] sm:$0xff]
      %v1681 = vld [vmem:[%s199 + $0xf4] sm:$0xff]
      %v1682 = vld [vmem:[%s199 + $0xfc] sm:$0xff]
      %v1683 = vld [vmem:[%s199 + $0x104] sm:$0xff]
      %v1684 = vld [vmem:[%s199 + $0x10c] sm:$0xff]
      %v1685 = vld [vmem:[%s199 + $0x114] sm:$0xff]
      %v1686 = vld [vmem:[%s199 + $0x11c] sm:$0xff]
      %v1687 = vld [vmem:[%s199 + $0x124] sm:$0xff]
      %v1688 = vld [vmem:[%s199 + $0x12c] sm:$0xff]
      %v1689 = vld [vmem:[%s199 + $0x134] sm:$0xff]
      %v1690 = vld [vmem:[%s199 + $0x13c] sm:$0xff]
      %v1691 = vpack.c.bf16 %v1656, %v1655
      %v1692 = vpack.c.bf16 %v1658, %v1657
      %v1693 = vpack.c.bf16 %v1660, %v1659
      %v1694 = vpack.c.bf16 %v1662, %v1661
      %v1695 = vpack.c.bf16 %v1664, %v1663
      %v1696 = vpack.c.bf16 %v1666, %v1665
      %v1697 = vpack.c.bf16 %v1668, %v1667
      %v1698 = vpack.c.bf16 %v1670, %v1669
      %v1699 = vpack.c.bf16 %v1672, %v1671
      %v1700 = vpack.c.bf16 %v1674, %v1673
      %v1701 = vpack.c.bf16 %v1676, %v1675
      %v1702 = vpack.c.bf16 %v1678, %v1677
      %v1703 = vpack.c.bf16 %v1680, %v1679
      %v1704 = vpack.c.bf16 %v1682, %v1681
      %v1705 = vpack.c.bf16 %v1684, %v1683
      %v1706 = vpack.c.bf16 %v1686, %v1685
      %v1707 = vpack.c.bf16 %v1688, %v1687
      %v1708 = vpack.c.bf16 %v1690, %v1689
      %v1709 = vld [vmem:[%s1 + $0x180] sm:$0xf]
      %v1710 = vld [vmem:[%s1 + $0x184] sm:$0xf]
      %v1711 = vld [vmem:[%s1 + $0x188] sm:$0xf]
      %v1712 = vld [vmem:[%s1 + $0x18c] sm:$0xf]
      %v1713 = vld [vmem:[%s1 + $0x190] sm:$0xf]
      %v1714 = vld [vmem:[%s1 + $0x194] sm:$0xf]
      %v1715 = vld [vmem:[%s1 + $0x198] sm:$0xf]
      %v1716 = vld [vmem:[%s1 + $0x19c] sm:$0xf]
      %v1717 = vld [vmem:[%s1 + $0x1a0] sm:$0xf]
      %v1718 = vld [vmem:[%s1 + $0x1a4] sm:$0xf]
      %v1719 = vld [vmem:[%s1 + $0x1a8] sm:$0xf]
      %v1720 = vld [vmem:[%s1 + $0x1ac] sm:$0xf]
      %v1721 = vld [vmem:[%s1 + $0x1b0] sm:$0xf]
      %v1722 = vld [vmem:[%s1 + $0x1b4] sm:$0xf]
      %v1723 = vld [vmem:[%s1 + $0x1b8] sm:$0xf]
      %v1724 = vld [vmem:[%s1 + $0x1bc] sm:$0xf]
      %v1741 = vunpack.c.l.b16 %v1709
      %v1742 = vunpack.c.l.b16 %v1710
      %v1743 = vunpack.c.l.b16 %v1711
      %v1744 = vunpack.c.l.b16 %v1712
      %v1745 = vunpack.c.l.b16 %v1713
      %v1746 = vunpack.c.l.b16 %v1714
      %v1747 = vunpack.c.l.b16 %v1715
      %v1748 = vunpack.c.l.b16 %v1716
      %v1749 = vunpack.c.l.b16 %v1717
      %v1750 = vunpack.c.l.b16 %v1718
      %v1751 = vunpack.c.l.b16 %v1719
      %v1752 = vunpack.c.l.b16 %v1720
      %v1753 = vunpack.c.l.b16 %v1721
      %v1754 = vunpack.c.l.b16 %v1722
      %v1755 = vunpack.c.l.b16 %v1723
      %v1756 = vunpack.c.l.b16 %v1724
      %v1757 = vpack.c.b16 %v1742, %v1741
      %v1758 = vpack.c.b16 %v1744, %v1743
      %v1759 = vpack.c.b16 %v1746, %v1745
      %v1760 = vpack.c.b16 %v1748, %v1747
      %v1761 = vpack.c.b16 %v1750, %v1749
      %v1762 = vpack.c.b16 %v1752, %v1751
      %v1763 = vpack.c.b16 %v1754, %v1753
      %v1764 = vpack.c.b16 %v1756, %v1755
      %1773 = vmatpush.bf16.msra.mxu0 %v1764
      %1774 = vmatpush.bf16.msra.mxu0 %v1763
      %1775 = vmatpush.bf16.msra.mxu0 %v1762
      %1776 = vmatpush.bf16.msra.mxu0 %v1761
      %1777 = vmatpush.bf16.msra.mxu0 %v1760
      %1778 = vmatpush.bf16.msra.mxu0 %v1759
      %1779 = vmatpush.bf16.msra.mxu0 %v1758
      %1780 = vmatpush.bf16.msra.mxu0 %v1757
      %1781 = vmatmul.bf16.gmra.mxu0 %v1691
      %v1782 = vpop.f32.mrf.mxu0
      %v1783 = vadd.f32 0.0, %v1782
      %v1784 = vpop.f32.mrf.mxu0
      %v1785 = vadd.f32 0.0, %v1784
      %1786 = vmatmul.bf16.gmra.mxu0 %v1692
      %v1787 = vpop.f32.mrf.mxu0
      %v1788 = vadd.f32 0.0, %v1787
      %v1789 = vpop.f32.mrf.mxu0
      %v1790 = vadd.f32 0.0, %v1789
      %1791 = vmatmul.bf16.gmra.mxu0 %v1693
      %v1792 = vpop.f32.mrf.mxu0
      %v1793 = vadd.f32 0.0, %v1792
      %v1794 = vpop.f32.mrf.mxu0
      %v1795 = vadd.f32 0.0, %v1794
      %1796 = vmatmul.bf16.gmra.mxu0 %v1694
      %v1797 = vpop.f32.mrf.mxu0
      %v1798 = vadd.f32 0.0, %v1797
      %v1799 = vpop.f32.mrf.mxu0
      %v1800 = vadd.f32 0.0, %v1799
      %1801 = vmatmul.bf16.gmra.mxu0 %v1695
      %v1802 = vpop.f32.mrf.mxu0
      %v1803 = vadd.f32 0.0, %v1802
      %v1804 = vpop.f32.mrf.mxu0
      %v1805 = vadd.f32 0.0, %v1804
      %1806 = vmatmul.bf16.gmra.mxu0 %v1696
      %v1807 = vpop.f32.mrf.mxu0
      %v1808 = vadd.f32 0.0, %v1807
      %v1809 = vpop.f32.mrf.mxu0
      %v1810 = vadd.f32 0.0, %v1809
      %1811 = vmatmul.bf16.gmra.mxu0 %v1697
      %v1812 = vpop.f32.mrf.mxu0
      %v1813 = vadd.f32 0.0, %v1812
      %v1814 = vpop.f32.mrf.mxu0
      %v1815 = vadd.f32 0.0, %v1814
      %1816 = vmatmul.bf16.gmra.mxu0 %v1698
      %v1817 = vpop.f32.mrf.mxu0
      %v1818 = vadd.f32 0.0, %v1817
      %v1819 = vpop.f32.mrf.mxu0
      %v1820 = vadd.f32 0.0, %v1819
      %1821 = vmatmul.bf16.gmra.mxu0 %v1699
      %v1822 = vpop.f32.mrf.mxu0
      %v1823 = vadd.f32 0.0, %v1822
      %v1824 = vpop.f32.mrf.mxu0
      %v1825 = vadd.f32 0.0, %v1824
      %1826 = vmatmul.bf16.gmra.mxu0 %v1700
      %v1827 = vpop.f32.mrf.mxu0
      %v1828 = vadd.f32 0.0, %v1827
      %v1829 = vpop.f32.mrf.mxu0
      %v1830 = vadd.f32 0.0, %v1829
      %1831 = vmatmul.bf16.gmra.mxu0 %v1701
      %v1832 = vpop.f32.mrf.mxu0
      %v1833 = vadd.f32 0.0, %v1832
      %v1834 = vpop.f32.mrf.mxu0
      %v1835 = vadd.f32 0.0, %v1834
      %1836 = vmatmul.bf16.gmra.mxu0 %v1702
      %v1837 = vpop.f32.mrf.mxu0
      %v1838 = vadd.f32 0.0, %v1837
      %v1839 = vpop.f32.mrf.mxu0
      %v1840 = vadd.f32 0.0, %v1839
      %1841 = vmatmul.bf16.gmra.mxu0 %v1703
      %v1842 = vpop.f32.mrf.mxu0
      %v1843 = vadd.f32 0.0, %v1842
      %v1844 = vpop.f32.mrf.mxu0
      %v1845 = vadd.f32 0.0, %v1844
      %1846 = vmatmul.bf16.gmra.mxu0 %v1704
      %v1847 = vpop.f32.mrf.mxu0
      %v1848 = vadd.f32 0.0, %v1847
      %v1849 = vpop.f32.mrf.mxu0
      %v1850 = vadd.f32 0.0, %v1849
      %1851 = vmatmul.bf16.gmra.mxu0 %v1705
      %v1852 = vpop.f32.mrf.mxu0
      %v1853 = vadd.f32 0.0, %v1852
      %v1854 = vpop.f32.mrf.mxu0
      %v1855 = vadd.f32 0.0, %v1854
      %1856 = vmatmul.bf16.gmra.mxu0 %v1706
      %v1857 = vpop.f32.mrf.mxu0
      %v1858 = vadd.f32 0.0, %v1857
      %v1859 = vpop.f32.mrf.mxu0
      %v1860 = vadd.f32 0.0, %v1859
      %1861 = vmatmul.bf16.gmra.mxu0 %v1707
      %v1862 = vpop.f32.mrf.mxu0
      %v1863 = vadd.f32 0.0, %v1862
      %v1864 = vpop.f32.mrf.mxu0
      %v1865 = vadd.f32 0.0, %v1864
      %1866 = vmatmul.bf16.gmra.mxu0 %v1708
      %v1867 = vpop.f32.mrf.mxu0
      %v1868 = vadd.f32 0.0, %v1867
      %v1869 = vpop.f32.mrf.mxu0
      %v1870 = vadd.f32 0.0, %v1869
      %1871 = vdwg.mxu0
      %v1872 = vadd.f32 %v1619, %v1783
      %v1873 = vadd.f32 %v1620, %v1785
      %v1874 = vadd.f32 %v1621, %v1788
      %v1875 = vadd.f32 %v1622, %v1790
      %v1876 = vadd.f32 %v1623, %v1793
      %v1877 = vadd.f32 %v1624, %v1795
      %v1878 = vadd.f32 %v1625, %v1798
      %v1879 = vadd.f32 %v1626, %v1800
      %v1880 = vadd.f32 %v1627, %v1803
      %v1881 = vadd.f32 %v1628, %v1805
      %v1882 = vadd.f32 %v1629, %v1808
      %v1883 = vadd.f32 %v1630, %v1810
      %v1884 = vadd.f32 %v1631, %v1813
      %v1885 = vadd.f32 %v1632, %v1815
      %v1886 = vadd.f32 %v1633, %v1818
      %v1887 = vadd.f32 %v1634, %v1820
      %v1888 = vadd.f32 %v1635, %v1823
      %v1889 = vadd.f32 %v1636, %v1825
      %v1890 = vadd.f32 %v1637, %v1828
      %v1891 = vadd.f32 %v1638, %v1830
      %v1892 = vadd.f32 %v1639, %v1833
      %v1893 = vadd.f32 %v1640, %v1835
      %v1894 = vadd.f32 %v1641, %v1838
      %v1895 = vadd.f32 %v1642, %v1840
      %v1896 = vadd.f32 %v1643, %v1843
      %v1897 = vadd.f32 %v1644, %v1845
      %v1898 = vadd.f32 %v1645, %v1848
      %v1899 = vadd.f32 %v1646, %v1850
      %v1900 = vadd.f32 %v1647, %v1853
      %v1901 = vadd.f32 %v1648, %v1855
      %v1902 = vadd.f32 %v1649, %v1858
      %v1903 = vadd.f32 %v1650, %v1860
      %v1904 = vadd.f32 %v1651, %v1863
      %v1905 = vadd.f32 %v1652, %v1865
      %v1906 = vadd.f32 %v1653, %v1868
      %v1907 = vadd.f32 %v1654, %v1870
      %v1908 = vld [vmem:[%s199 + $0x25] sm:$0xff]
      %v1909 = vld [vmem:[%s199 + $0x2d] sm:$0xff]
      %v1910 = vld [vmem:[%s199 + $0x35] sm:$0xff]
      %v1911 = vld [vmem:[%s199 + $0x3d] sm:$0xff]
      %v1912 = vld [vmem:[%s199 + $0x45] sm:$0xff]
      %v1913 = vld [vmem:[%s199 + $0x4d] sm:$0xff]
      %v1914 = vld [vmem:[%s199 + $0x55] sm:$0xff]
      %v1915 = vld [vmem:[%s199 + $0x5d] sm:$0xff]
      %v1916 = vld [vmem:[%s199 + $0x65] sm:$0xff]
      %v1917 = vld [vmem:[%s199 + $0x6d] sm:$0xff]
      %v1918 = vld [vmem:[%s199 + $0x75] sm:$0xff]
      %v1919 = vld [vmem:[%s199 + $0x7d] sm:$0xff]
      %v1920 = vld [vmem:[%s199 + $0x85] sm:$0xff]
      %v1921 = vld [vmem:[%s199 + $0x8d] sm:$0xff]
      %v1922 = vld [vmem:[%s199 + $0x95] sm:$0xff]
      %v1923 = vld [vmem:[%s199 + $0x9d] sm:$0xff]
      %v1924 = vld [vmem:[%s199 + $0xa5] sm:$0xff]
      %v1925 = vld [vmem:[%s199 + $0xad] sm:$0xff]
      %v1926 = vld [vmem:[%s199 + $0xb5] sm:$0xff]
      %v1927 = vld [vmem:[%s199 + $0xbd] sm:$0xff]
      %v1928 = vld [vmem:[%s199 + $0xc5] sm:$0xff]
      %v1929 = vld [vmem:[%s199 + $0xcd] sm:$0xff]
      %v1930 = vld [vmem:[%s199 + $0xd5] sm:$0xff]
      %v1931 = vld [vmem:[%s199 + $0xdd] sm:$0xff]
      %v1932 = vld [vmem:[%s199 + $0xe5] sm:$0xff]
      %v1933 = vld [vmem:[%s199 + $0xed] sm:$0xff]
      %v1934 = vld [vmem:[%s199 + $0xf5] sm:$0xff]
      %v1935 = vld [vmem:[%s199 + $0xfd] sm:$0xff]
      %v1936 = vld [vmem:[%s199 + $0x105] sm:$0xff]
      %v1937 = vld [vmem:[%s199 + $0x10d] sm:$0xff]
      %v1938 = vld [vmem:[%s199 + $0x115] sm:$0xff]
      %v1939 = vld [vmem:[%s199 + $0x11d] sm:$0xff]
      %v1940 = vld [vmem:[%s199 + $0x125] sm:$0xff]
      %v1941 = vld [vmem:[%s199 + $0x12d] sm:$0xff]
      %v1942 = vld [vmem:[%s199 + $0x135] sm:$0xff]
      %v1943 = vld [vmem:[%s199 + $0x13d] sm:$0xff]
      %v1944 = vpack.c.bf16 %v1909, %v1908
      %v1945 = vpack.c.bf16 %v1911, %v1910
      %v1946 = vpack.c.bf16 %v1913, %v1912
      %v1947 = vpack.c.bf16 %v1915, %v1914
      %v1948 = vpack.c.bf16 %v1917, %v1916
      %v1949 = vpack.c.bf16 %v1919, %v1918
      %v1950 = vpack.c.bf16 %v1921, %v1920
      %v1951 = vpack.c.bf16 %v1923, %v1922
      %v1952 = vpack.c.bf16 %v1925, %v1924
      %v1953 = vpack.c.bf16 %v1927, %v1926
      %v1954 = vpack.c.bf16 %v1929, %v1928
      %v1955 = vpack.c.bf16 %v1931, %v1930
      %v1956 = vpack.c.bf16 %v1933, %v1932
      %v1957 = vpack.c.bf16 %v1935, %v1934
      %v1958 = vpack.c.bf16 %v1937, %v1936
      %v1959 = vpack.c.bf16 %v1939, %v1938
      %v1960 = vpack.c.bf16 %v1941, %v1940
      %v1961 = vpack.c.bf16 %v1943, %v1942
      %v1962 = vld [vmem:[%s1 + $0x1c0] sm:$0xf]
      %v1963 = vld [vmem:[%s1 + $0x1c4] sm:$0xf]
      %v1964 = vld [vmem:[%s1 + $0x1c8] sm:$0xf]
      %v1965 = vld [vmem:[%s1 + $0x1cc] sm:$0xf]
      %v1966 = vld [vmem:[%s1 + $0x1d0] sm:$0xf]
      %v1967 = vld [vmem:[%s1 + $0x1d4] sm:$0xf]
      %v1968 = vld [vmem:[%s1 + $0x1d8] sm:$0xf]
      %v1969 = vld [vmem:[%s1 + $0x1dc] sm:$0xf]
      %v1970 = vld [vmem:[%s1 + $0x1e0] sm:$0xf]
      %v1971 = vld [vmem:[%s1 + $0x1e4] sm:$0xf]
      %v1972 = vld [vmem:[%s1 + $0x1e8] sm:$0xf]
      %v1973 = vld [vmem:[%s1 + $0x1ec] sm:$0xf]
      %v1974 = vld [vmem:[%s1 + $0x1f0] sm:$0xf]
      %v1975 = vld [vmem:[%s1 + $0x1f4] sm:$0xf]
      %v1976 = vld [vmem:[%s1 + $0x1f8] sm:$0xf]
      %v1977 = vld [vmem:[%s1 + $0x1fc] sm:$0xf]
      %v1994 = vunpack.c.l.b16 %v1962
      %v1995 = vunpack.c.l.b16 %v1963
      %v1996 = vunpack.c.l.b16 %v1964
      %v1997 = vunpack.c.l.b16 %v1965
      %v1998 = vunpack.c.l.b16 %v1966
      %v1999 = vunpack.c.l.b16 %v1967
      %v2000 = vunpack.c.l.b16 %v1968
      %v2001 = vunpack.c.l.b16 %v1969
      %v2002 = vunpack.c.l.b16 %v1970
      %v2003 = vunpack.c.l.b16 %v1971
      %v2004 = vunpack.c.l.b16 %v1972
      %v2005 = vunpack.c.l.b16 %v1973
      %v2006 = vunpack.c.l.b16 %v1974
      %v2007 = vunpack.c.l.b16 %v1975
      %v2008 = vunpack.c.l.b16 %v1976
      %v2009 = vunpack.c.l.b16 %v1977
      %v2010 = vpack.c.b16 %v1995, %v1994
      %v2011 = vpack.c.b16 %v1997, %v1996
      %v2012 = vpack.c.b16 %v1999, %v1998
      %v2013 = vpack.c.b16 %v2001, %v2000
      %v2014 = vpack.c.b16 %v2003, %v2002
      %v2015 = vpack.c.b16 %v2005, %v2004
      %v2016 = vpack.c.b16 %v2007, %v2006
      %v2017 = vpack.c.b16 %v2009, %v2008
      %2026 = vmatpush.bf16.msra.mxu0 %v2017
      %2027 = vmatpush.bf16.msra.mxu0 %v2016
      %2028 = vmatpush.bf16.msra.mxu0 %v2015
      %2029 = vmatpush.bf16.msra.mxu0 %v2014
      %2030 = vmatpush.bf16.msra.mxu0 %v2013
      %2031 = vmatpush.bf16.msra.mxu0 %v2012
      %2032 = vmatpush.bf16.msra.mxu0 %v2011
      %2033 = vmatpush.bf16.msra.mxu0 %v2010
      %2034 = vmatmul.bf16.gmra.mxu0 %v1944
      %v2035 = vpop.f32.mrf.mxu0
      %v2036 = vadd.f32 0.0, %v2035
      %v2037 = vpop.f32.mrf.mxu0
      %v2038 = vadd.f32 0.0, %v2037
      %2039 = vmatmul.bf16.gmra.mxu0 %v1945
      %v2040 = vpop.f32.mrf.mxu0
      %v2041 = vadd.f32 0.0, %v2040
      %v2042 = vpop.f32.mrf.mxu0
      %v2043 = vadd.f32 0.0, %v2042
      %2044 = vmatmul.bf16.gmra.mxu0 %v1946
      %v2045 = vpop.f32.mrf.mxu0
      %v2046 = vadd.f32 0.0, %v2045
      %v2047 = vpop.f32.mrf.mxu0
      %v2048 = vadd.f32 0.0, %v2047
      %2049 = vmatmul.bf16.gmra.mxu0 %v1947
      %v2050 = vpop.f32.mrf.mxu0
      %v2051 = vadd.f32 0.0, %v2050
      %v2052 = vpop.f32.mrf.mxu0
      %v2053 = vadd.f32 0.0, %v2052
      %2054 = vmatmul.bf16.gmra.mxu0 %v1948
      %v2055 = vpop.f32.mrf.mxu0
      %v2056 = vadd.f32 0.0, %v2055
      %v2057 = vpop.f32.mrf.mxu0
      %v2058 = vadd.f32 0.0, %v2057
      %2059 = vmatmul.bf16.gmra.mxu0 %v1949
      %v2060 = vpop.f32.mrf.mxu0
      %v2061 = vadd.f32 0.0, %v2060
      %v2062 = vpop.f32.mrf.mxu0
      %v2063 = vadd.f32 0.0, %v2062
      %2064 = vmatmul.bf16.gmra.mxu0 %v1950
      %v2065 = vpop.f32.mrf.mxu0
      %v2066 = vadd.f32 0.0, %v2065
      %v2067 = vpop.f32.mrf.mxu0
      %v2068 = vadd.f32 0.0, %v2067
      %2069 = vmatmul.bf16.gmra.mxu0 %v1951
      %v2070 = vpop.f32.mrf.mxu0
      %v2071 = vadd.f32 0.0, %v2070
      %v2072 = vpop.f32.mrf.mxu0
      %v2073 = vadd.f32 0.0, %v2072
      %2074 = vmatmul.bf16.gmra.mxu0 %v1952
      %v2075 = vpop.f32.mrf.mxu0
      %v2076 = vadd.f32 0.0, %v2075
      %v2077 = vpop.f32.mrf.mxu0
      %v2078 = vadd.f32 0.0, %v2077
      %2079 = vmatmul.bf16.gmra.mxu0 %v1953
      %v2080 = vpop.f32.mrf.mxu0
      %v2081 = vadd.f32 0.0, %v2080
      %v2082 = vpop.f32.mrf.mxu0
      %v2083 = vadd.f32 0.0, %v2082
      %2084 = vmatmul.bf16.gmra.mxu0 %v1954
      %v2085 = vpop.f32.mrf.mxu0
      %v2086 = vadd.f32 0.0, %v2085
      %v2087 = vpop.f32.mrf.mxu0
      %v2088 = vadd.f32 0.0, %v2087
      %2089 = vmatmul.bf16.gmra.mxu0 %v1955
      %v2090 = vpop.f32.mrf.mxu0
      %v2091 = vadd.f32 0.0, %v2090
      %v2092 = vpop.f32.mrf.mxu0
      %v2093 = vadd.f32 0.0, %v2092
      %2094 = vmatmul.bf16.gmra.mxu0 %v1956
      %v2095 = vpop.f32.mrf.mxu0
      %v2096 = vadd.f32 0.0, %v2095
      %v2097 = vpop.f32.mrf.mxu0
      %v2098 = vadd.f32 0.0, %v2097
      %2099 = vmatmul.bf16.gmra.mxu0 %v1957
      %v2100 = vpop.f32.mrf.mxu0
      %v2101 = vadd.f32 0.0, %v2100
      %v2102 = vpop.f32.mrf.mxu0
      %v2103 = vadd.f32 0.0, %v2102
      %2104 = vmatmul.bf16.gmra.mxu0 %v1958
      %v2105 = vpop.f32.mrf.mxu0
      %v2106 = vadd.f32 0.0, %v2105
      %v2107 = vpop.f32.mrf.mxu0
      %v2108 = vadd.f32 0.0, %v2107
      %2109 = vmatmul.bf16.gmra.mxu0 %v1959
      %v2110 = vpop.f32.mrf.mxu0
      %v2111 = vadd.f32 0.0, %v2110
      %v2112 = vpop.f32.mrf.mxu0
      %v2113 = vadd.f32 0.0, %v2112
      %2114 = vmatmul.bf16.gmra.mxu0 %v1960
      %v2115 = vpop.f32.mrf.mxu0
      %v2116 = vadd.f32 0.0, %v2115
      %v2117 = vpop.f32.mrf.mxu0
      %v2118 = vadd.f32 0.0, %v2117
      %2119 = vmatmul.bf16.gmra.mxu0 %v1961
      %v2120 = vpop.f32.mrf.mxu0
      %v2121 = vadd.f32 0.0, %v2120
      %v2122 = vpop.f32.mrf.mxu0
      %v2123 = vadd.f32 0.0, %v2122
      %2124 = vdwg.mxu0
      %v2125 = vadd.f32 %v1872, %v2036
      %v2126 = vadd.f32 %v1873, %v2038
      %v2127 = vadd.f32 %v1874, %v2041
      %v2128 = vadd.f32 %v1875, %v2043
      %v2129 = vadd.f32 %v1876, %v2046
      %v2130 = vadd.f32 %v1877, %v2048
      %v2131 = vadd.f32 %v1878, %v2051
      %v2132 = vadd.f32 %v1879, %v2053
      %v2133 = vadd.f32 %v1880, %v2056
      %v2134 = vadd.f32 %v1881, %v2058
      %v2135 = vadd.f32 %v1882, %v2061
      %v2136 = vadd.f32 %v1883, %v2063
      %v2137 = vadd.f32 %v1884, %v2066
      %v2138 = vadd.f32 %v1885, %v2068
      %v2139 = vadd.f32 %v1886, %v2071
      %v2140 = vadd.f32 %v1887, %v2073
      %v2141 = vadd.f32 %v1888, %v2076
      %v2142 = vadd.f32 %v1889, %v2078
      %v2143 = vadd.f32 %v1890, %v2081
      %v2144 = vadd.f32 %v1891, %v2083
      %v2145 = vadd.f32 %v1892, %v2086
      %v2146 = vadd.f32 %v1893, %v2088
      %v2147 = vadd.f32 %v1894, %v2091
      %v2148 = vadd.f32 %v1895, %v2093
      %v2149 = vadd.f32 %v1896, %v2096
      %v2150 = vadd.f32 %v1897, %v2098
      %v2151 = vadd.f32 %v1898, %v2101
      %v2152 = vadd.f32 %v1899, %v2103
      %v2153 = vadd.f32 %v1900, %v2106
      %v2154 = vadd.f32 %v1901, %v2108
      %v2155 = vadd.f32 %v1902, %v2111
      %v2156 = vadd.f32 %v1903, %v2113
      %v2157 = vadd.f32 %v1904, %v2116
      %v2158 = vadd.f32 %v1905, %v2118
      %v2159 = vadd.f32 %v1906, %v2121
      %v2160 = vadd.f32 %v1907, %v2123
      %v2161 = vld [vmem:[%s199 + $0x26] sm:$0xff]
      %v2162 = vld [vmem:[%s199 + $0x2e] sm:$0xff]
      %v2163 = vld [vmem:[%s199 + $0x36] sm:$0xff]
      %v2164 = vld [vmem:[%s199 + $0x3e] sm:$0xff]
      %v2165 = vld [vmem:[%s199 + $0x46] sm:$0xff]
      %v2166 = vld [vmem:[%s199 + $0x4e] sm:$0xff]
      %v2167 = vld [vmem:[%s199 + $0x56] sm:$0xff]
      %v2168 = vld [vmem:[%s199 + $0x5e] sm:$0xff]
      %v2169 = vld [vmem:[%s199 + $0x66] sm:$0xff]
      %v2170 = vld [vmem:[%s199 + $0x6e] sm:$0xff]
      %v2171 = vld [vmem:[%s199 + $0x76] sm:$0xff]
      %v2172 = vld [vmem:[%s199 + $0x7e] sm:$0xff]
      %v2173 = vld [vmem:[%s199 + $0x86] sm:$0xff]
      %v2174 = vld [vmem:[%s199 + $0x8e] sm:$0xff]
      %v2175 = vld [vmem:[%s199 + $0x96] sm:$0xff]
      %v2176 = vld [vmem:[%s199 + $0x9e] sm:$0xff]
      %v2177 = vld [vmem:[%s199 + $0xa6] sm:$0xff]
      %v2178 = vld [vmem:[%s199 + $0xae] sm:$0xff]
      %v2179 = vld [vmem:[%s199 + $0xb6] sm:$0xff]
      %v2180 = vld [vmem:[%s199 + $0xbe] sm:$0xff]
      %v2181 = vld [vmem:[%s199 + $0xc6] sm:$0xff]
      %v2182 = vld [vmem:[%s199 + $0xce] sm:$0xff]
      %v2183 = vld [vmem:[%s199 + $0xd6] sm:$0xff]
      %v2184 = vld [vmem:[%s199 + $0xde] sm:$0xff]
      %v2185 = vld [vmem:[%s199 + $0xe6] sm:$0xff]
      %v2186 = vld [vmem:[%s199 + $0xee] sm:$0xff]
      %v2187 = vld [vmem:[%s199 + $0xf6] sm:$0xff]
      %v2188 = vld [vmem:[%s199 + $0xfe] sm:$0xff]
      %v2189 = vld [vmem:[%s199 + $0x106] sm:$0xff]
      %v2190 = vld [vmem:[%s199 + $0x10e] sm:$0xff]
      %v2191 = vld [vmem:[%s199 + $0x116] sm:$0xff]
      %v2192 = vld [vmem:[%s199 + $0x11e] sm:$0xff]
      %v2193 = vld [vmem:[%s199 + $0x126] sm:$0xff]
      %v2194 = vld [vmem:[%s199 + $0x12e] sm:$0xff]
      %v2195 = vld [vmem:[%s199 + $0x136] sm:$0xff]
      %v2196 = vld [vmem:[%s199 + $0x13e] sm:$0xff]
      %v2197 = vpack.c.bf16 %v2162, %v2161
      %v2198 = vpack.c.bf16 %v2164, %v2163
      %v2199 = vpack.c.bf16 %v2166, %v2165
      %v2200 = vpack.c.bf16 %v2168, %v2167
      %v2201 = vpack.c.bf16 %v2170, %v2169
      %v2202 = vpack.c.bf16 %v2172, %v2171
      %v2203 = vpack.c.bf16 %v2174, %v2173
      %v2204 = vpack.c.bf16 %v2176, %v2175
      %v2205 = vpack.c.bf16 %v2178, %v2177
      %v2206 = vpack.c.bf16 %v2180, %v2179
      %v2207 = vpack.c.bf16 %v2182, %v2181
      %v2208 = vpack.c.bf16 %v2184, %v2183
      %v2209 = vpack.c.bf16 %v2186, %v2185
      %v2210 = vpack.c.bf16 %v2188, %v2187
      %v2211 = vpack.c.bf16 %v2190, %v2189
      %v2212 = vpack.c.bf16 %v2192, %v2191
      %v2213 = vpack.c.bf16 %v2194, %v2193
      %v2214 = vpack.c.bf16 %v2196, %v2195
      %v2215 = vld [vmem:[%s1 + $0x200] sm:$0xf]
      %v2216 = vld [vmem:[%s1 + $0x204] sm:$0xf]
      %v2217 = vld [vmem:[%s1 + $0x208] sm:$0xf]
      %v2218 = vld [vmem:[%s1 + $0x20c] sm:$0xf]
      %v2219 = vld [vmem:[%s1 + $0x210] sm:$0xf]
      %v2220 = vld [vmem:[%s1 + $0x214] sm:$0xf]
      %v2221 = vld [vmem:[%s1 + $0x218] sm:$0xf]
      %v2222 = vld [vmem:[%s1 + $0x21c] sm:$0xf]
      %v2223 = vld [vmem:[%s1 + $0x220] sm:$0xf]
      %v2224 = vld [vmem:[%s1 + $0x224] sm:$0xf]
      %v2225 = vld [vmem:[%s1 + $0x228] sm:$0xf]
      %v2226 = vld [vmem:[%s1 + $0x22c] sm:$0xf]
      %v2227 = vld [vmem:[%s1 + $0x230] sm:$0xf]
      %v2228 = vld [vmem:[%s1 + $0x234] sm:$0xf]
      %v2229 = vld [vmem:[%s1 + $0x238] sm:$0xf]
      %v2230 = vld [vmem:[%s1 + $0x23c] sm:$0xf]
      %v2247 = vunpack.c.l.b16 %v2215
      %v2248 = vunpack.c.l.b16 %v2216
      %v2249 = vunpack.c.l.b16 %v2217
      %v2250 = vunpack.c.l.b16 %v2218
      %v2251 = vunpack.c.l.b16 %v2219
      %v2252 = vunpack.c.l.b16 %v2220
      %v2253 = vunpack.c.l.b16 %v2221
      %v2254 = vunpack.c.l.b16 %v2222
      %v2255 = vunpack.c.l.b16 %v2223
      %v2256 = vunpack.c.l.b16 %v2224
      %v2257 = vunpack.c.l.b16 %v2225
      %v2258 = vunpack.c.l.b16 %v2226
      %v2259 = vunpack.c.l.b16 %v2227
      %v2260 = vunpack.c.l.b16 %v2228
      %v2261 = vunpack.c.l.b16 %v2229
      %v2262 = vunpack.c.l.b16 %v2230
      %v2263 = vpack.c.b16 %v2248, %v2247
      %v2264 = vpack.c.b16 %v2250, %v2249
      %v2265 = vpack.c.b16 %v2252, %v2251
      %v2266 = vpack.c.b16 %v2254, %v2253
      %v2267 = vpack.c.b16 %v2256, %v2255
      %v2268 = vpack.c.b16 %v2258, %v2257
      %v2269 = vpack.c.b16 %v2260, %v2259
      %v2270 = vpack.c.b16 %v2262, %v2261
      %2279 = vmatpush.bf16.msra.mxu0 %v2270
      %2280 = vmatpush.bf16.msra.mxu0 %v2269
      %2281 = vmatpush.bf16.msra.mxu0 %v2268
      %2282 = vmatpush.bf16.msra.mxu0 %v2267
      %2283 = vmatpush.bf16.msra.mxu0 %v2266
      %2284 = vmatpush.bf16.msra.mxu0 %v2265
      %2285 = vmatpush.bf16.msra.mxu0 %v2264
      %2286 = vmatpush.bf16.msra.mxu0 %v2263
      %2287 = vmatmul.bf16.gmra.mxu0 %v2197
      %v2288 = vpop.f32.mrf.mxu0
      %v2289 = vadd.f32 0.0, %v2288
      %v2290 = vpop.f32.mrf.mxu0
      %v2291 = vadd.f32 0.0, %v2290
      %2292 = vmatmul.bf16.gmra.mxu0 %v2198
      %v2293 = vpop.f32.mrf.mxu0
      %v2294 = vadd.f32 0.0, %v2293
      %v2295 = vpop.f32.mrf.mxu0
      %v2296 = vadd.f32 0.0, %v2295
      %2297 = vmatmul.bf16.gmra.mxu0 %v2199
      %v2298 = vpop.f32.mrf.mxu0
      %v2299 = vadd.f32 0.0, %v2298
      %v2300 = vpop.f32.mrf.mxu0
      %v2301 = vadd.f32 0.0, %v2300
      %2302 = vmatmul.bf16.gmra.mxu0 %v2200
      %v2303 = vpop.f32.mrf.mxu0
      %v2304 = vadd.f32 0.0, %v2303
      %v2305 = vpop.f32.mrf.mxu0
      %v2306 = vadd.f32 0.0, %v2305
      %2307 = vmatmul.bf16.gmra.mxu0 %v2201
      %v2308 = vpop.f32.mrf.mxu0
      %v2309 = vadd.f32 0.0, %v2308
      %v2310 = vpop.f32.mrf.mxu0
      %v2311 = vadd.f32 0.0, %v2310
      %2312 = vmatmul.bf16.gmra.mxu0 %v2202
      %v2313 = vpop.f32.mrf.mxu0
      %v2314 = vadd.f32 0.0, %v2313
      %v2315 = vpop.f32.mrf.mxu0
      %v2316 = vadd.f32 0.0, %v2315
      %2317 = vmatmul.bf16.gmra.mxu0 %v2203
      %v2318 = vpop.f32.mrf.mxu0
      %v2319 = vadd.f32 0.0, %v2318
      %v2320 = vpop.f32.mrf.mxu0
      %v2321 = vadd.f32 0.0, %v2320
      %2322 = vmatmul.bf16.gmra.mxu0 %v2204
      %v2323 = vpop.f32.mrf.mxu0
      %v2324 = vadd.f32 0.0, %v2323
      %v2325 = vpop.f32.mrf.mxu0
      %v2326 = vadd.f32 0.0, %v2325
      %2327 = vmatmul.bf16.gmra.mxu0 %v2205
      %v2328 = vpop.f32.mrf.mxu0
      %v2329 = vadd.f32 0.0, %v2328
      %v2330 = vpop.f32.mrf.mxu0
      %v2331 = vadd.f32 0.0, %v2330
      %2332 = vmatmul.bf16.gmra.mxu0 %v2206
      %v2333 = vpop.f32.mrf.mxu0
      %v2334 = vadd.f32 0.0, %v2333
      %v2335 = vpop.f32.mrf.mxu0
      %v2336 = vadd.f32 0.0, %v2335
      %2337 = vmatmul.bf16.gmra.mxu0 %v2207
      %v2338 = vpop.f32.mrf.mxu0
      %v2339 = vadd.f32 0.0, %v2338
      %v2340 = vpop.f32.mrf.mxu0
      %v2341 = vadd.f32 0.0, %v2340
      %2342 = vmatmul.bf16.gmra.mxu0 %v2208
      %v2343 = vpop.f32.mrf.mxu0
      %v2344 = vadd.f32 0.0, %v2343
      %v2345 = vpop.f32.mrf.mxu0
      %v2346 = vadd.f32 0.0, %v2345
      %2347 = vmatmul.bf16.gmra.mxu0 %v2209
      %v2348 = vpop.f32.mrf.mxu0
      %v2349 = vadd.f32 0.0, %v2348
      %v2350 = vpop.f32.mrf.mxu0
      %v2351 = vadd.f32 0.0, %v2350
      %2352 = vmatmul.bf16.gmra.mxu0 %v2210
      %v2353 = vpop.f32.mrf.mxu0
      %v2354 = vadd.f32 0.0, %v2353
      %v2355 = vpop.f32.mrf.mxu0
      %v2356 = vadd.f32 0.0, %v2355
      %2357 = vmatmul.bf16.gmra.mxu0 %v2211
      %v2358 = vpop.f32.mrf.mxu0
      %v2359 = vadd.f32 0.0, %v2358
      %v2360 = vpop.f32.mrf.mxu0
      %v2361 = vadd.f32 0.0, %v2360
      %2362 = vmatmul.bf16.gmra.mxu0 %v2212
      %v2363 = vpop.f32.mrf.mxu0
      %v2364 = vadd.f32 0.0, %v2363
      %v2365 = vpop.f32.mrf.mxu0
      %v2366 = vadd.f32 0.0, %v2365
      %2367 = vmatmul.bf16.gmra.mxu0 %v2213
      %v2368 = vpop.f32.mrf.mxu0
      %v2369 = vadd.f32 0.0, %v2368
      %v2370 = vpop.f32.mrf.mxu0
      %v2371 = vadd.f32 0.0, %v2370
      %2372 = vmatmul.bf16.gmra.mxu0 %v2214
      %v2373 = vpop.f32.mrf.mxu0
      %v2374 = vadd.f32 0.0, %v2373
      %v2375 = vpop.f32.mrf.mxu0
      %v2376 = vadd.f32 0.0, %v2375
      %2377 = vdwg.mxu0
      %v2378 = vadd.f32 %v2125, %v2289
      %v2379 = vadd.f32 %v2126, %v2291
      %v2380 = vadd.f32 %v2127, %v2294
      %v2381 = vadd.f32 %v2128, %v2296
      %v2382 = vadd.f32 %v2129, %v2299
      %v2383 = vadd.f32 %v2130, %v2301
      %v2384 = vadd.f32 %v2131, %v2304
      %v2385 = vadd.f32 %v2132, %v2306
      %v2386 = vadd.f32 %v2133, %v2309
      %v2387 = vadd.f32 %v2134, %v2311
      %v2388 = vadd.f32 %v2135, %v2314
      %v2389 = vadd.f32 %v2136, %v2316
      %v2390 = vadd.f32 %v2137, %v2319
      %v2391 = vadd.f32 %v2138, %v2321
      %v2392 = vadd.f32 %v2139, %v2324
      %v2393 = vadd.f32 %v2140, %v2326
      %v2394 = vadd.f32 %v2141, %v2329
      %v2395 = vadd.f32 %v2142, %v2331
      %v2396 = vadd.f32 %v2143, %v2334
      %v2397 = vadd.f32 %v2144, %v2336
      %v2398 = vadd.f32 %v2145, %v2339
      %v2399 = vadd.f32 %v2146, %v2341
      %v2400 = vadd.f32 %v2147, %v2344
      %v2401 = vadd.f32 %v2148, %v2346
      %v2402 = vadd.f32 %v2149, %v2349
      %v2403 = vadd.f32 %v2150, %v2351
      %v2404 = vadd.f32 %v2151, %v2354
      %v2405 = vadd.f32 %v2152, %v2356
      %v2406 = vadd.f32 %v2153, %v2359
      %v2407 = vadd.f32 %v2154, %v2361
      %v2408 = vadd.f32 %v2155, %v2364
      %v2409 = vadd.f32 %v2156, %v2366
      %v2410 = vadd.f32 %v2157, %v2369
      %v2411 = vadd.f32 %v2158, %v2371
      %v2412 = vadd.f32 %v2159, %v2374
      %v2413 = vadd.f32 %v2160, %v2376
      %v2414 = vpack.c.bf16 %v2378, %v2378
      %v2415 = vpack.c.bf16 %v2379, %v2379
      %v2416 = vpack.c.bf16 %v2380, %v2380
      %v2417 = vpack.c.bf16 %v2381, %v2381
      %v2418 = vpack.c.bf16 %v2382, %v2382
      %v2419 = vpack.c.bf16 %v2383, %v2383
      %v2420 = vpack.c.bf16 %v2384, %v2384
      %v2421 = vpack.c.bf16 %v2385, %v2385
      %v2422 = vpack.c.bf16 %v2386, %v2386
      %v2423 = vpack.c.bf16 %v2387, %v2387
      %v2424 = vpack.c.bf16 %v2388, %v2388
      %v2425 = vpack.c.bf16 %v2389, %v2389
      %v2426 = vpack.c.bf16 %v2390, %v2390
      %v2427 = vpack.c.bf16 %v2391, %v2391
      %v2428 = vpack.c.bf16 %v2392, %v2392
      %v2429 = vpack.c.bf16 %v2393, %v2393
      %v2430 = vpack.c.bf16 %v2394, %v2394
      %v2431 = vpack.c.bf16 %v2395, %v2395
      %v2432 = vpack.c.bf16 %v2396, %v2396
      %v2433 = vpack.c.bf16 %v2397, %v2397
      %v2434 = vpack.c.bf16 %v2398, %v2398
      %v2435 = vpack.c.bf16 %v2399, %v2399
      %v2436 = vpack.c.bf16 %v2400, %v2400
      %v2437 = vpack.c.bf16 %v2401, %v2401
      %v2438 = vpack.c.bf16 %v2402, %v2402
      %v2439 = vpack.c.bf16 %v2403, %v2403
      %v2440 = vpack.c.bf16 %v2404, %v2404
      %v2441 = vpack.c.bf16 %v2405, %v2405
      %v2442 = vpack.c.bf16 %v2406, %v2406
      %v2443 = vpack.c.bf16 %v2407, %v2407
      %v2444 = vpack.c.bf16 %v2408, %v2408
      %v2445 = vpack.c.bf16 %v2409, %v2409
      %v2446 = vpack.c.bf16 %v2410, %v2410
      %v2447 = vpack.c.bf16 %v2411, %v2411
      %v2448 = vpack.c.bf16 %v2412, %v2412
      %v2449 = vpack.c.bf16 %v2413, %v2413
      %2450 = vst [vmem:[%s204] sm:$0xf] %v2414
      %2451 = vst [vmem:[%s204 + $0x4] sm:$0xf] %v2415
      %2452 = vst [vmem:[%s204 + $0x8] sm:$0xf] %v2416
      %2453 = vst [vmem:[%s204 + $0xc] sm:$0xf] %v2417
      %2454 = vst [vmem:[%s204 + $0x10] sm:$0xf] %v2418
      %2455 = vst [vmem:[%s204 + $0x14] sm:$0xf] %v2419
      %2456 = vst [vmem:[%s204 + $0x18] sm:$0xf] %v2420
      %2457 = vst [vmem:[%s204 + $0x1c] sm:$0xf] %v2421
      %2458 = vst [vmem:[%s204 + $0x20] sm:$0xf] %v2422
      %2459 = vst [vmem:[%s204 + $0x24] sm:$0xf] %v2423
      %2460 = vst [vmem:[%s204 + $0x28] sm:$0xf] %v2424
      %2461 = vst [vmem:[%s204 + $0x2c] sm:$0xf] %v2425
      %2462 = vst [vmem:[%s204 + $0x30] sm:$0xf] %v2426
      %2463 = vst [vmem:[%s204 + $0x34] sm:$0xf] %v2427
      %2464 = vst [vmem:[%s204 + $0x38] sm:$0xf] %v2428
      %2465 = vst [vmem:[%s204 + $0x3c] sm:$0xf] %v2429
      %2466 = vst [vmem:[%s204 + $0x40] sm:$0xf] %v2430
      %2467 = vst [vmem:[%s204 + $0x44] sm:$0xf] %v2431
      %2468 = vst [vmem:[%s204 + $0x48] sm:$0xf] %v2432
      %2469 = vst [vmem:[%s204 + $0x4c] sm:$0xf] %v2433
      %2470 = vst [vmem:[%s204 + $0x50] sm:$0xf] %v2434
      %2471 = vst [vmem:[%s204 + $0x54] sm:$0xf] %v2435
      %2472 = vst [vmem:[%s204 + $0x58] sm:$0xf] %v2436
      %2473 = vst [vmem:[%s204 + $0x5c] sm:$0xf] %v2437
      %2474 = vst [vmem:[%s204 + $0x60] sm:$0xf] %v2438
      %2475 = vst [vmem:[%s204 + $0x64] sm:$0xf] %v2439
      %2476 = vst [vmem:[%s204 + $0x68] sm:$0xf] %v2440
      %2477 = vst [vmem:[%s204 + $0x6c] sm:$0xf] %v2441
      %2478 = vst [vmem:[%s204 + $0x70] sm:$0xf] %v2442
      %2479 = vst [vmem:[%s204 + $0x74] sm:$0xf] %v2443
      %2480 = vst [vmem:[%s204 + $0x78] sm:$0xf] %v2444
      %2481 = vst [vmem:[%s204 + $0x7c] sm:$0xf] %v2445
      %2482 = vst [vmem:[%s204 + $0x80] sm:$0xf] %v2446
      %2483 = vst [vmem:[%s204 + $0x84] sm:$0xf] %v2447
      %2484 = vst [vmem:[%s204 + $0x88] sm:$0xf] %v2448
      %2485 = vst [vmem:[%s204 + $0x8c] sm:$0xf] %v2449
      %v2486 = vld [vmem:[%s2] sm:$0xff]
      %v2487 = vld [vmem:[%s2 + $0x8] sm:$0xff]
      %v2488 = vld [vmem:[%s2 + $0x10] sm:$0xff]
      %v2489 = vld [vmem:[%s2 + $0x18] sm:$0xff]
      %v2490 = vld [vmem:[%s2 + $0x20] sm:$0xff]
      %v2491 = vld [vmem:[%s2 + $0x28] sm:$0xff]
      %v2492 = vld [vmem:[%s2 + $0x30] sm:$0xff]
      %v2493 = vld [vmem:[%s2 + $0x38] sm:$0xff]
      %v2494 = vld [vmem:[%s2 + $0x40] sm:$0xff]
      %v2495 = vld [vmem:[%s2 + $0x48] sm:$0xff]
      %v2496 = vld [vmem:[%s2 + $0x50] sm:$0xff]
      %v2497 = vld [vmem:[%s2 + $0x58] sm:$0xff]
      %v2498 = vld [vmem:[%s2 + $0x60] sm:$0xff]
      %v2499 = vld [vmem:[%s2 + $0x68] sm:$0xff]
      %v2500 = vld [vmem:[%s2 + $0x70] sm:$0xff]
      %v2501 = vld [vmem:[%s2 + $0x78] sm:$0xff]
      %v2502 = vld [vmem:[%s2 + $0x80] sm:$0xff]
      %v2503 = vld [vmem:[%s2 + $0x88] sm:$0xff]
      %v2504 = vld [vmem:[%s2 + $0x90] sm:$0xff]
      %v2505 = vld [vmem:[%s2 + $0x98] sm:$0xff]
      %v2506 = vld [vmem:[%s2 + $0xa0] sm:$0xff]
      %v2507 = vld [vmem:[%s2 + $0xa8] sm:$0xff]
      %v2508 = vld [vmem:[%s2 + $0xb0] sm:$0xff]
      %v2509 = vld [vmem:[%s2 + $0xb8] sm:$0xff]
      %v2510 = vld [vmem:[%s2 + $0xc0] sm:$0xff]
      %v2511 = vld [vmem:[%s2 + $0xc8] sm:$0xff]
      %v2512 = vld [vmem:[%s2 + $0xd0] sm:$0xff]
      %v2513 = vld [vmem:[%s2 + $0xd8] sm:$0xff]
      %v2514 = vld [vmem:[%s2 + $0xe0] sm:$0xff]
      %v2515 = vld [vmem:[%s2 + $0xe8] sm:$0xff]
      %v2516 = vld [vmem:[%s2 + $0xf0] sm:$0xff]
      %v2517 = vld [vmem:[%s2 + $0xf8] sm:$0xff]
      %v2518 = vld [vmem:[%s2 + $0x100] sm:$0xff]
      %v2519 = vld [vmem:[%s2 + $0x108] sm:$0xff]
      %v2520 = vld [vmem:[%s2 + $0x110] sm:$0xff]
      %v2521 = vld [vmem:[%s2 + $0x118] sm:$0xff]
      %2523 = vset.pattern.permute.xlu0 0
      %2524 = vperm.xlu0 %2523, %v2486
      %v2525 = vpop.permute.xlu0 %2524
      %2528 = vset.pattern.permute.xlu0 0
      %2529 = vperm.xlu0 %2528, %v2487
      %v2530 = vpop.permute.xlu0 %2529
      %2533 = vset.pattern.permute.xlu0 0
      %2534 = vperm.xlu0 %2533, %v2488
      %v2535 = vpop.permute.xlu0 %2534
      %2538 = vset.pattern.permute.xlu0 0
      %2539 = vperm.xlu0 %2538, %v2489
      %v2540 = vpop.permute.xlu0 %2539
      %2543 = vset.pattern.permute.xlu0 0
      %2544 = vperm.xlu0 %2543, %v2490
      %v2545 = vpop.permute.xlu0 %2544
      %2548 = vset.pattern.permute.xlu0 0
      %2549 = vperm.xlu0 %2548, %v2491
      %v2550 = vpop.permute.xlu0 %2549
      %2553 = vset.pattern.permute.xlu0 0
      %2554 = vperm.xlu0 %2553, %v2492
      %v2555 = vpop.permute.xlu0 %2554
      %2558 = vset.pattern.permute.xlu0 0
      %2559 = vperm.xlu0 %2558, %v2493
      %v2560 = vpop.permute.xlu0 %2559
      %2563 = vset.pattern.permute.xlu0 0
      %2564 = vperm.xlu0 %2563, %v2494
      %v2565 = vpop.permute.xlu0 %2564
      %2568 = vset.pattern.permute.xlu0 0
      %2569 = vperm.xlu0 %2568, %v2495
      %v2570 = vpop.permute.xlu0 %2569
      %2573 = vset.pattern.permute.xlu0 0
      %2574 = vperm.xlu0 %2573, %v2496
      %v2575 = vpop.permute.xlu0 %2574
      %2578 = vset.pattern.permute.xlu0 0
      %2579 = vperm.xlu0 %2578, %v2497
      %v2580 = vpop.permute.xlu0 %2579
      %2583 = vset.pattern.permute.xlu0 0
      %2584 = vperm.xlu0 %2583, %v2498
      %v2585 = vpop.permute.xlu0 %2584
      %2588 = vset.pattern.permute.xlu0 0
      %2589 = vperm.xlu0 %2588, %v2499
      %v2590 = vpop.permute.xlu0 %2589
      %2593 = vset.pattern.permute.xlu0 0
      %2594 = vperm.xlu0 %2593, %v2500
      %v2595 = vpop.permute.xlu0 %2594
      %2598 = vset.pattern.permute.xlu0 0
      %2599 = vperm.xlu0 %2598, %v2501
      %v2600 = vpop.permute.xlu0 %2599
      %2603 = vset.pattern.permute.xlu0 0
      %2604 = vperm.xlu0 %2603, %v2502
      %v2605 = vpop.permute.xlu0 %2604
      %2608 = vset.pattern.permute.xlu0 0
      %2609 = vperm.xlu0 %2608, %v2503
      %v2610 = vpop.permute.xlu0 %2609
      %2613 = vset.pattern.permute.xlu0 0
      %2614 = vperm.xlu0 %2613, %v2504
      %v2615 = vpop.permute.xlu0 %2614
      %2618 = vset.pattern.permute.xlu0 0
      %2619 = vperm.xlu0 %2618, %v2505
      %v2620 = vpop.permute.xlu0 %2619
      %2623 = vset.pattern.permute.xlu0 0
      %2624 = vperm.xlu0 %2623, %v2506
      %v2625 = vpop.permute.xlu0 %2624
      %2628 = vset.pattern.permute.xlu0 0
      %2629 = vperm.xlu0 %2628, %v2507
      %v2630 = vpop.permute.xlu0 %2629
      %2633 = vset.pattern.permute.xlu0 0
      %2634 = vperm.xlu0 %2633, %v2508
      %v2635 = vpop.permute.xlu0 %2634
      %2638 = vset.pattern.permute.xlu0 0
      %2639 = vperm.xlu0 %2638, %v2509
      %v2640 = vpop.permute.xlu0 %2639
      %2643 = vset.pattern.permute.xlu0 0
      %2644 = vperm.xlu0 %2643, %v2510
      %v2645 = vpop.permute.xlu0 %2644
      %2648 = vset.pattern.permute.xlu0 0
      %2649 = vperm.xlu0 %2648, %v2511
      %v2650 = vpop.permute.xlu0 %2649
      %2653 = vset.pattern.permute.xlu0 0
      %2654 = vperm.xlu0 %2653, %v2512
      %v2655 = vpop.permute.xlu0 %2654
      %2658 = vset.pattern.permute.xlu0 0
      %2659 = vperm.xlu0 %2658, %v2513
      %v2660 = vpop.permute.xlu0 %2659
      %2663 = vset.pattern.permute.xlu0 0
      %2664 = vperm.xlu0 %2663, %v2514
      %v2665 = vpop.permute.xlu0 %2664
      %2668 = vset.pattern.permute.xlu0 0
      %2669 = vperm.xlu0 %2668, %v2515
      %v2670 = vpop.permute.xlu0 %2669
      %2673 = vset.pattern.permute.xlu0 0
      %2674 = vperm.xlu0 %2673, %v2516
      %v2675 = vpop.permute.xlu0 %2674
      %2678 = vset.pattern.permute.xlu0 0
      %2679 = vperm.xlu0 %2678, %v2517
      %v2680 = vpop.permute.xlu0 %2679
      %2683 = vset.pattern.permute.xlu0 0
      %2684 = vperm.xlu0 %2683, %v2518
      %v2685 = vpop.permute.xlu0 %2684
      %2688 = vset.pattern.permute.xlu0 0
      %2689 = vperm.xlu0 %2688, %v2519
      %v2690 = vpop.permute.xlu0 %2689
      %2693 = vset.pattern.permute.xlu0 0
      %2694 = vperm.xlu0 %2693, %v2520
      %v2695 = vpop.permute.xlu0 %2694
      %2698 = vset.pattern.permute.xlu0 0
      %2699 = vperm.xlu0 %2698, %v2521
      %v2700 = vpop.permute.xlu0 %2699
      %v2702 = vmul.f32 %v2378, %v2525
      %v2703 = vmul.f32 %v2379, %v2530
      %v2704 = vmul.f32 %v2380, %v2535
      %v2705 = vmul.f32 %v2381, %v2540
      %v2706 = vmul.f32 %v2382, %v2545
      %v2707 = vmul.f32 %v2383, %v2550
      %v2708 = vmul.f32 %v2384, %v2555
      %v2709 = vmul.f32 %v2385, %v2560
      %v2710 = vmul.f32 %v2386, %v2565
      %v2711 = vmul.f32 %v2387, %v2570
      %v2712 = vmul.f32 %v2388, %v2575
      %v2713 = vmul.f32 %v2389, %v2580
      %v2714 = vmul.f32 %v2390, %v2585
      %v2715 = vmul.f32 %v2391, %v2590
      %v2716 = vmul.f32 %v2392, %v2595
      %v2717 = vmul.f32 %v2393, %v2600
      %v2718 = vmul.f32 %v2394, %v2605
      %v2719 = vmul.f32 %v2395, %v2610
      %v2720 = vmul.f32 %v2396, %v2615
      %v2721 = vmul.f32 %v2397, %v2620
      %v2722 = vmul.f32 %v2398, %v2625
      %v2723 = vmul.f32 %v2399, %v2630
      %v2724 = vmul.f32 %v2400, %v2635
      %v2725 = vmul.f32 %v2401, %v2640
      %v2726 = vmul.f32 %v2402, %v2645
      %v2727 = vmul.f32 %v2403, %v2650
      %v2728 = vmul.f32 %v2404, %v2655
      %v2729 = vmul.f32 %v2405, %v2660
      %v2730 = vmul.f32 %v2406, %v2665
      %v2731 = vmul.f32 %v2407, %v2670
      %v2732 = vmul.f32 %v2408, %v2675
      %v2733 = vmul.f32 %v2409, %v2680
      %v2734 = vmul.f32 %v2410, %v2685
      %v2735 = vmul.f32 %v2411, %v2690
      %v2736 = vmul.f32 %v2412, %v2695
      %v2737 = vmul.f32 %v2413, %v2700
      %v2738 = vadd.f32 %v2702, %v2703
      %v2739 = vadd.f32 %v2738, %v2704
      %v2740 = vadd.f32 %v2739, %v2705
      %v2741 = vadd.f32 %v2740, %v2706
      %v2742 = vadd.f32 %v2741, %v2707
      %v2743 = vadd.f32 %v2742, %v2708
      %v2744 = vadd.f32 %v2743, %v2709
      %v2745 = vadd.f32 %v2744, %v2710
      %v2746 = vadd.f32 %v2745, %v2711
      %v2747 = vadd.f32 %v2746, %v2712
      %v2748 = vadd.f32 %v2747, %v2713
      %v2749 = vadd.f32 %v2748, %v2714
      %v2750 = vadd.f32 %v2749, %v2715
      %v2751 = vadd.f32 %v2750, %v2716
      %v2752 = vadd.f32 %v2751, %v2717
      %v2753 = vadd.f32 %v2752, %v2718
      %v2754 = vadd.f32 %v2753, %v2719
      %v2755 = vadd.f32 %v2754, %v2720
      %v2756 = vadd.f32 %v2755, %v2721
      %v2757 = vadd.f32 %v2756, %v2722
      %v2758 = vadd.f32 %v2757, %v2723
      %v2759 = vadd.f32 %v2758, %v2724
      %v2760 = vadd.f32 %v2759, %v2725
      %v2761 = vadd.f32 %v2760, %v2726
      %v2762 = vadd.f32 %v2761, %v2727
      %v2763 = vadd.f32 %v2762, %v2728
      %v2764 = vadd.f32 %v2763, %v2729
      %v2765 = vadd.f32 %v2764, %v2730
      %v2766 = vadd.f32 %v2765, %v2731
      %v2767 = vadd.f32 %v2766, %v2732
      %v2768 = vadd.f32 %v2767, %v2733
      %v2769 = vadd.f32 %v2768, %v2734
      %v2770 = vadd.f32 %v2769, %v2735
      %v2771 = vadd.f32 %v2770, %v2736
      %v2772 = vadd.f32 %v2771, %v2737
      %v2773 = vrot.slane %v2772, 4
      %v2774 = vadd.f32 %v2772, %v2773
      %v2775 = vrot.slane %v2774, 2
      %v2776 = vadd.f32 %v2774, %v2775
      %v2777 = vrot.slane %v2776, 1
      %v2778 = vadd.f32 %v2776, %v2777
      %2779 = vst [vmem:[%s208] sm:$0x1] %v2778
      %v2780 = vmul.f32 %v2702, %v2378
      %v2781 = vmul.f32 %v2703, %v2379
      %v2782 = vmul.f32 %v2704, %v2380
      %v2783 = vmul.f32 %v2705, %v2381
      %v2784 = vmul.f32 %v2706, %v2382
      %v2785 = vmul.f32 %v2707, %v2383
      %v2786 = vmul.f32 %v2708, %v2384
      %v2787 = vmul.f32 %v2709, %v2385
      %v2788 = vmul.f32 %v2710, %v2386
      %v2789 = vmul.f32 %v2711, %v2387
      %v2790 = vmul.f32 %v2712, %v2388
      %v2791 = vmul.f32 %v2713, %v2389
      %v2792 = vmul.f32 %v2714, %v2390
      %v2793 = vmul.f32 %v2715, %v2391
      %v2794 = vmul.f32 %v2716, %v2392
      %v2795 = vmul.f32 %v2717, %v2393
      %v2796 = vmul.f32 %v2718, %v2394
      %v2797 = vmul.f32 %v2719, %v2395
      %v2798 = vmul.f32 %v2720, %v2396
      %v2799 = vmul.f32 %v2721, %v2397
      %v2800 = vmul.f32 %v2722, %v2398
      %v2801 = vmul.f32 %v2723, %v2399
      %v2802 = vmul.f32 %v2724, %v2400
      %v2803 = vmul.f32 %v2725, %v2401
      %v2804 = vmul.f32 %v2726, %v2402
      %v2805 = vmul.f32 %v2727, %v2403
      %v2806 = vmul.f32 %v2728, %v2404
      %v2807 = vmul.f32 %v2729, %v2405
      %v2808 = vmul.f32 %v2730, %v2406
      %v2809 = vmul.f32 %v2731, %v2407
      %v2810 = vmul.f32 %v2732, %v2408
      %v2811 = vmul.f32 %v2733, %v2409
      %v2812 = vmul.f32 %v2734, %v2410
      %v2813 = vmul.f32 %v2735, %v2411
      %v2814 = vmul.f32 %v2736, %v2412
      %v2815 = vmul.f32 %v2737, %v2413
      %v2816 = vadd.f32 %v2780, %v2781
      %v2817 = vadd.f32 %v2816, %v2782
      %v2818 = vadd.f32 %v2817, %v2783
      %v2819 = vadd.f32 %v2818, %v2784
      %v2820 = vadd.f32 %v2819, %v2785
      %v2821 = vadd.f32 %v2820, %v2786
      %v2822 = vadd.f32 %v2821, %v2787
      %v2823 = vadd.f32 %v2822, %v2788
      %v2824 = vadd.f32 %v2823, %v2789
      %v2825 = vadd.f32 %v2824, %v2790
      %v2826 = vadd.f32 %v2825, %v2791
      %v2827 = vadd.f32 %v2826, %v2792
      %v2828 = vadd.f32 %v2827, %v2793
      %v2829 = vadd.f32 %v2828, %v2794
      %v2830 = vadd.f32 %v2829, %v2795
      %v2831 = vadd.f32 %v2830, %v2796
      %v2832 = vadd.f32 %v2831, %v2797
      %v2833 = vadd.f32 %v2832, %v2798
      %v2834 = vadd.f32 %v2833, %v2799
      %v2835 = vadd.f32 %v2834, %v2800
      %v2836 = vadd.f32 %v2835, %v2801
      %v2837 = vadd.f32 %v2836, %v2802
      %v2838 = vadd.f32 %v2837, %v2803
      %v2839 = vadd.f32 %v2838, %v2804
      %v2840 = vadd.f32 %v2839, %v2805
      %v2841 = vadd.f32 %v2840, %v2806
      %v2842 = vadd.f32 %v2841, %v2807
      %v2843 = vadd.f32 %v2842, %v2808
      %v2844 = vadd.f32 %v2843, %v2809
      %v2845 = vadd.f32 %v2844, %v2810
      %v2846 = vadd.f32 %v2845, %v2811
      %v2847 = vadd.f32 %v2846, %v2812
      %v2848 = vadd.f32 %v2847, %v2813
      %v2849 = vadd.f32 %v2848, %v2814
      %v2850 = vadd.f32 %v2849, %v2815
      %v2851 = vrot.slane %v2850, 4
      %v2852 = vadd.f32 %v2850, %v2851
      %v2853 = vrot.slane %v2852, 2
      %v2854 = vadd.f32 %v2852, %v2853
      %v2855 = vrot.slane %v2854, 1
      %v2856 = vadd.f32 %v2854, %v2855
      %2857 = vst [vmem:[%s208 + $0x1] sm:$0x1] %v2856
      %p2858 = scmp.lt.s32.totalorder %s16, 1
      %s2859 = scalar_select %p2858, %s16, 1
      %s2860 = smul.addr %s2859, 36
      %s2861 = smul.addr %s2860, 4
      %s2862 = scalar_lea.vmem %s3, %s2861
      %p2863 = scmp.lt.s32.totalorder %s16, 1
      %s2864 = scalar_select %p2863, %s16, 1
      %s2865 = smul.addr %s2864, 2
      %s2866 = scalar_lea.vmem %s4, %s2865
      // Predicated region
      $region33: #{convbase_forward.2} parent=31 // pred_check
        %p2867 = pneg %p102
      $region34: #{convbase_forward.2} parent=31 // pred_check_branch
        %2869 = sbr.rel (%p2867) target = $region36
      $region35: #{convbase_forward.2} parent=31 // pred_region
        _
      $region36: #{convbase_forward.2} parent=31 // pred_fallthru
        _
      // Predicated region
      $region37: #{convbase_forward.2} parent=31 // pred_check
        %p2870 = pneg %p128
      $region38: #{convbase_forward.2} parent=31 // pred_check_branch
        %2872 = sbr.rel (%p2870) target = $region40
      $region39: #{convbase_forward.2} parent=31 // pred_region
        _
      $region40: #{convbase_forward.2} parent=31 // pred_fallthru
        _
    $region32: #{convbase_forward.2} parent=5 // pred_fallthru
      _
    %p2873 = scmp.le.s32.totalorder 2, %s11
    // Predicated region
    $region41: #{convbase_forward.2} parent=5 // pred_check
      %p2874 = pneg %p2873
    $region42: #{convbase_forward.2} parent=5 // pred_check_branch
      %2876 = sbr.rel (%p2874) target = $region44
    $region43: #{convbase_forward.2} parent=5 // pred_region
      %s2877 = ssub.s32 %s11, 2
      // Predicated region
      $region45: #{convbase_forward.2} parent=43 // pred_check
        %p2878 = pneg %p108
      $region46: #{convbase_forward.2} parent=43 // pred_check_branch
        %2880 = sbr.rel (%p2878) target = $region48
      $region47: #{convbase_forward.2} parent=43 // pred_region
        %p2881 = scmp.lt.s32.totalorder %s17, 1
        %s2882 = scalar_select %p2881, %s17, 1
        %s2883 = smul.addr %s2882, 36
        %s2884 = smul.addr %s2883, 4
        %s2885 = scalar_lea.vmem %s3, %s2884
      $region48: #{convbase_forward.2} parent=43 // pred_fallthru
        _
      // Predicated region
      $region49: #{convbase_forward.2} parent=43 // pred_check
        %p2886 = pneg %p134
      $region50: #{convbase_forward.2} parent=43 // pred_check_branch
        %2888 = sbr.rel (%p2886) target = $region52
      $region51: #{convbase_forward.2} parent=43 // pred_region
        %p2889 = scmp.lt.s32.totalorder %s17, 1
        %s2890 = scalar_select %p2889, %s17, 1
        %s2891 = smul.addr %s2890, 2
        %s2892 = scalar_lea.vmem %s4, %s2891
      $region52: #{convbase_forward.2} parent=43 // pred_fallthru
        _
    $region44: #{convbase_forward.2} parent=5 // pred_fallthru
      _
  $region6: #{convbase_forward.2} parent=0 // loop_footer
    %s15 = sadd.s32 1, %s11
  $region7: #{convbase_forward.2} parent=0 // loop_footer_branch
    %10 = sbr.rel target = $region3
  $region8: #{convbase_forward.2} parent=0 // loop_exit
    _

</llo_original>
